<compile_context>
chip_gen: v6e
topology: v6e:2x2x1
jax: 0.10.0
libtpu: 0.0.40
codegen_flags: <defaults>
</compile_context>

<pallas_src>
import functools
import math

import jax
import jax.numpy as jnp
from jax.experimental import pallas as pl
from jax.experimental.pallas import tpu as pltpu


# ----------------------------------------------------------------------------
# helpers
# ----------------------------------------------------------------------------

def _round_up(n, m):
    return ((n + m - 1) // m) * m


def _pick_tile(n, target, base):
    """Pick a tile size (multiple of `base`, <= target) and the padded extent."""
    t = min(target, _round_up(n, base))
    return t, _round_up(n, t)


def _pad_axis(x, axis, size):
    if x.shape[axis] == size:
        return x
    pads = [(0, 0)] * x.ndim
    pads[axis] = (0, size - x.shape[axis])
    return jnp.pad(x, pads)


_GEN_CACHE = [None]


def _tpu_generation():
    if _GEN_CACHE[0] is None:
        try:
            kind = jax.devices()[0].device_kind.lower()
        except Exception:
            kind = ""
        gen = "other"
        for g in ("v7", "v6", "v5"):
            if g in kind:
                gen = g
                break
        _GEN_CACHE[0] = gen
    return _GEN_CACHE[0]


def _linear_tiles():
    """Generation-dependent (tm, tn, tk, vmem_limit_bytes) for the big GEMMs."""
    g = _tpu_generation()
    mib = 1024 * 1024
    if g == "v6":      # 128 MiB VMEM, highest FLOP/byte crossover -> largest tiles
        return 1024, 1024, 1024, 96 * mib
    if g == "v5":      # crossover ~240 FLOP/byte; moderate tiles, cheap epilogue
        return 512, 1024, 512, 96 * mib
    if g == "v7":      # 64 MiB VMEM per TC; cap tiles, leave megacore headroom
        return 512, 1024, 1024, 48 * mib
    return 512, 512, 512, 64 * mib


# ----------------------------------------------------------------------------
# Tiled matmul + bias (+ gelu-tanh) (+ fused gated residual)
# ----------------------------------------------------------------------------

def _linear_kernel(*refs, activation, fuse_res):
    if fuse_res:
        x_ref, w_ref, b_ref, res_ref, gate_ref, o_ref, acc_ref = refs
    else:
        x_ref, w_ref, b_ref, o_ref, acc_ref = refs

    k = pl.program_id(3)

    @pl.when(k == 0)
    def _():
        acc_ref[...] = jnp.zeros_like(acc_ref)

    acc_ref[...] += jnp.dot(x_ref[0], w_ref[...],
                            preferred_element_type=jnp.float32)

    @pl.when(k == pl.num_programs(3) - 1)
    def _():
        acc = acc_ref[...] + b_ref[...].astype(jnp.float32)
        if activation == "gelu_tanh":
            c = math.sqrt(2.0 / math.pi)
            acc = 0.5 * acc * (1.0 + jnp.tanh(c * (acc + 0.044715 * acc * acc * acc)))
        if fuse_res:
            acc = res_ref[0].astype(jnp.float32) + gate_ref[0].astype(jnp.float32) * acc
        o_ref[0] = acc.astype(o_ref.dtype)


def linear(x, w, b, activation=None, res=None, gate=None):
    """x:(B,L,K) @ w:(K,N) + b, optional fused GELU(tanh) and fused gated
    residual:  out = res + gate * act(x @ w + b)."""
    B, L, K = x.shape
    N = w.shape[1]
    tm_t, tn_t, tk_t, vmem_limit = _linear_tiles()

    tm, Lp = _pick_tile(L, tm_t, 16)          # bf16 sublane packing
    tn, Np = _pick_tile(N, tn_t, 128)
    tk, Kp = _pick_tile(K, tk_t, 128)

    xp = _pad_axis(_pad_axis(x, 1, Lp), 2, Kp)
    wp = _pad_axis(_pad_axis(w, 0, Kp), 1, Np)
    bp = _pad_axis(b.reshape(1, N), 1, Np)

    fuse = res is not None
    inputs = [xp, wp, bp]
    in_specs = [
        pl.BlockSpec((1, tm, tk), lambda bb, i, j, k: (bb, i, k)),
        pl.BlockSpec((tk, tn), lambda bb, i, j, k: (k, j)),
        pl.BlockSpec((1, tn), lambda bb, i, j, k: (0, j)),
    ]
    if fuse:
        # TODO(synk): res/gate are only consumed on the last k step; pipeline_mode=pl.Buffered(1)
        # would shave their double-buffer VMEM on v7x if it ever becomes the binding constraint.
        resp = _pad_axis(_pad_axis(res, 1, Lp), 2, Np)
        gatep = _pad_axis(gate, 2, Np)
        inputs += [resp, gatep]
        in_specs += [
            pl.BlockSpec((1, tm, tn), lambda bb, i, j, k: (bb, i, j)),
            pl.BlockSpec((1, 1, tn), lambda bb, i, j, k: (bb, 0, j)),
        ]

    out = pl.pallas_call(
        functools.partial(_linear_kernel, activation=activation, fuse_res=fuse),
        out_shape=jax.ShapeDtypeStruct((B, Lp, Np), x.dtype),
        grid=(B, Lp // tm, Np // tn, Kp // tk),
        in_specs=in_specs,
        out_specs=pl.BlockSpec((1, tm, tn), lambda bb, i, j, k: (bb, i, j)),
        scratch_shapes=[pltpu.VMEM((tm, tn), jnp.float32)],
        compiler_params=pltpu.CompilerParams(
            dimension_semantics=("parallel", "parallel", "parallel", "arbitrary"),
            vmem_limit_bytes=vmem_limit),
    )(*inputs)

    if Lp != L or Np != N:
        out = out[:, :L, :N]
    return out


# ----------------------------------------------------------------------------
# Linear with LayerNorm(eps=1e-6, no affine) + (1+scale)*x + shift fused in the
# prologue (K = hidden fits in one block; LN result cached in VMEM across the N axis)
# ----------------------------------------------------------------------------

def _linear_ln_kernel(x_ref, scale_ref, shift_ref, w_ref, b_ref, o_ref, xln_ref, *,
                      activation, true_k):
    j = pl.program_id(2)

    @pl.when(j == 0)
    def _():
        x = x_ref[0].astype(jnp.float32)                       # (tm, Kp)
        kp = x.shape[-1]
        if kp != true_k:
            colmask = jax.lax.broadcasted_iota(jnp.int32, x.shape, 1) < true_k
            mean = jnp.sum(x, axis=-1, keepdims=True) / true_k
            xc = jnp.where(colmask, x - mean, 0.0)
        else:
            mean = jnp.mean(x, axis=-1, keepdims=True)
            xc = x - mean
        var = jnp.sum(xc * xc, axis=-1, keepdims=True) / true_k
        normed = xc * jax.lax.rsqrt(var + 1e-6)
        scale = scale_ref[0].astype(jnp.float32)               # (1, Kp)
        shift = shift_ref[0].astype(jnp.float32)
        xln_ref[...] = ((1.0 + scale) * normed + shift).astype(xln_ref.dtype)

    acc = jnp.dot(xln_ref[...], w_ref[...], preferred_element_type=jnp.float32)
    acc = acc + b_ref[...].astype(jnp.float32)
    if activation == "gelu_tanh":
        c = math.sqrt(2.0 / math.pi)
        acc = 0.5 * acc * (1.0 + jnp.tanh(c * (acc + 0.044715 * acc * acc * acc)))
    o_ref[0] = acc.astype(o_ref.dtype)


def linear_ln(x, scale, shift, w, b, activation=None):
    """out = act( modulate(LN(x), scale, shift) @ w + b ),  x:(B,L,K), scale/shift:(B,1,K)."""
    B, L, K = x.shape
    N = w.shape[1]
    tm_t, tn_t, _, vmem_limit = _linear_tiles()

    tm, Lp = _pick_tile(L, tm_t, 16)
    tn, Np = _pick_tile(N, tn_t, 128)
    Kp = _round_up(K, 128)                                    # whole K in one block

    xp = _pad_axis(_pad_axis(x, 1, Lp), 2, Kp)
    wp = _pad_axis(_pad_axis(w, 0, Kp), 1, Np)
    bp = _pad_axis(b.reshape(1, N), 1, Np)
    scp = _pad_axis(scale, 2, Kp)
    shp = _pad_axis(shift, 2, Kp)

    out = pl.pallas_call(
        functools.partial(_linear_ln_kernel, activation=activation, true_k=K),
        out_shape=jax.ShapeDtypeStruct((B, Lp, Np), x.dtype),
        grid=(B, Lp // tm, Np // tn),
        in_specs=[
            pl.BlockSpec((1, tm, Kp), lambda bb, i, j: (bb, i, 0)),
            pl.BlockSpec((1, 1, Kp), lambda bb, i, j: (bb, 0, 0)),
            pl.BlockSpec((1, 1, Kp), lambda bb, i, j: (bb, 0, 0)),
            pl.BlockSpec((Kp, tn), lambda bb, i, j: (0, j)),
            pl.BlockSpec((1, tn), lambda bb, i, j: (0, j)),
        ],
        out_specs=pl.BlockSpec((1, tm, tn), lambda bb, i, j: (bb, i, j)),
        scratch_shapes=[pltpu.VMEM((tm, Kp), jnp.bfloat16)],
        compiler_params=pltpu.CompilerParams(
            dimension_semantics=("parallel", "parallel", "arbitrary"),
            vmem_limit_bytes=vmem_limit),
    )(xp, scp, shp, wp, bp)

    if Lp != L or Np != N:
        out = out[:, :L, :N]
    return out


# ----------------------------------------------------------------------------
# KV-resident flash attention with fused QK-RMSNorm + RoPE
# ----------------------------------------------------------------------------

def _attn_kernel(q_ref, k_ref, v_ref, raq_ref, rbq_ref, rak_ref, rbk_ref,
                 qst_ref, qsi_ref, kst_ref, ksi_ref, pswap_ref,
                 o_ref, kproc_ref, *,
                 packed, sm_scale, txt_len, true_len, tq, tkv, nkv):
    i = pl.program_id(2)
    P = pswap_ref[...].astype(jnp.float32)                     # (D, D) pair-swap
    mask_kv = kproc_ref.shape[0] != true_len

    def process(x, scale_rows, rope_a, rope_b):
        # QK-RMSNorm (eps=1e-6, per-D scale) followed by RoPE in "A*x + B*swap(x)" form.
        rr = jax.lax.rsqrt(jnp.mean(x * x, axis=-1, keepdims=True) + 1e-6)
        x = x * rr * scale_rows
        xs = jnp.dot(x, P, preferred_element_type=jnp.float32)  # swap adjacent pairs
        return rope_a * x + rope_b * xs

    # --- process the whole K of this (batch, head) once, reuse across q tiles ---
    @pl.when(i == 0)
    def _():
        k = (k_ref[0] if packed else k_ref[0, 0]).astype(jnp.float32)   # (Lkp, D)
        rows = jax.lax.broadcasted_iota(jnp.int32, k.shape, 0)
        ks = jnp.where(rows < txt_len, kst_ref[...], ksi_ref[...])
        kproc_ref[...] = process(k, ks, rak_ref[0], rbk_ref[0]).astype(kproc_ref.dtype)

    # --- q tile prologue ---
    q = (q_ref[0] if packed else q_ref[0, 0]).astype(jnp.float32)       # (tq, D)
    rows = i * tq + jax.lax.broadcasted_iota(jnp.int32, q.shape, 0)
    qs = jnp.where(rows < txt_len, qst_ref[...], qsi_ref[...])
    q = process(q, qs, raq_ref[0], rbq_ref[0])
    q_bf = (q * sm_scale).astype(jnp.bfloat16)                 # fold sm_scale into q

    def body(c, carry):
        m, l, acc = carry
        start = pl.multiple_of(c * tkv, tkv)
        kc = kproc_ref[pl.ds(start, tkv), :]                   # (tkv, D) bf16
        vc = (v_ref[0, pl.ds(start, tkv), :] if packed
              else v_ref[0, 0, pl.ds(start, tkv), :])          # (tkv, D) bf16
        s = jax.lax.dot_general(q_bf, kc, (((1,), (1,)), ((), ())),
                                preferred_element_type=jnp.float32)     # (tq, tkv)
        if mask_kv:
            col = start + jax.lax.broadcasted_iota(jnp.int32, s.shape, 1)
            s = jnp.where(col < true_len, s, -1e30)
        m_new = jnp.maximum(m, jnp.max(s, axis=-1, keepdims=True))
        alpha = jnp.exp(m - m_new)
        p = jnp.exp(s - m_new)
        l_new = alpha * l + jnp.sum(p, axis=-1, keepdims=True)
        acc_new = alpha * acc + jnp.dot(p.astype(jnp.bfloat16), vc,
                                        preferred_element_type=jnp.float32)
        return m_new, l_new, acc_new

    m0 = jnp.full((q.shape[0], 1), -1e30, dtype=jnp.float32)
    l0 = jnp.zeros((q.shape[0], 1), dtype=jnp.float32)
    acc0 = jnp.zeros(q.shape, dtype=jnp.float32)
    m, l, acc = jax.lax.fori_loop(0, nkv, body, (m0, l0, acc0))

    o = acc * pl.reciprocal(l, approx=True)
    if packed:
        o_ref[0] = o.astype(o_ref.dtype)
    else:
        o_ref[0, 0] = o.astype(o_ref.dtype)


def _split_heads(qkv, num_heads):
    """(B, L, 3H) -> q, k, v each (B, Hn, L, D)   (matches 'B L (K H D) -> K B H L D')."""
    B, L, H3 = qkv.shape
    H = H3 // 3
    D = H // num_heads
    qkv = qkv.reshape(B, L, 3, num_heads, D).transpose(2, 0, 3, 1, 4)
    return qkv[0], qkv[1], qkv[2]


def attention(txt_qkv, img_qkv, pe, q_scale_txt, q_scale_img, k_scale_txt, k_scale_img,
              num_heads, tq_target=512, tkv_target=512):
    """Joint attention over [txt ; img] with fused QK-RMSNorm + RoPE -> (B, Lt+Li, H)."""
    B, Lt, H3 = txt_qkv.shape
    Li = img_qkv.shape[1]
    H = H3 // 3
    Hn = num_heads
    D = H // Hn
    L = Lt + Li
    out_dtype = txt_qkv.dtype
    sm_scale = 1.0 / math.sqrt(D)

    tq = min(tq_target, _round_up(L, 16))
    Lp = _round_up(L, tq)
    tkv = min(tkv_target, Lp)
    nkv = Lp // tkv

    # RoPE coefficient maps (rope(x) = A*x + B*pair_swap(x)), built once from pe.
    pe_b = jnp.broadcast_to(pe, (B, 1, L, D // 2, 2, 2))[:, 0].astype(jnp.float32)
    ropeA = jnp.stack([pe_b[..., 0, 0], pe_b[..., 1, 1]], axis=-1).reshape(B, L, D)
    ropeB = jnp.stack([pe_b[..., 0, 1], pe_b[..., 1, 0]], axis=-1).reshape(B, L, D)
    ropeA = _pad_axis(ropeA, 1, Lp)
    ropeB = _pad_axis(ropeB, 1, Lp)

    # Constant pair-swap permutation (applied on the MXU; tiny vs attention FLOPs).
    idx = jnp.arange(D)
    swap_idx = idx + 1 - 2 * (idx % 2)
    P = jax.nn.one_hot(swap_idx, D, dtype=jnp.float32)

    qs_t = q_scale_txt.reshape(1, D).astype(jnp.float32)
    qs_i = q_scale_img.reshape(1, D).astype(jnp.float32)
    ks_t = k_scale_txt.reshape(1, D).astype(jnp.float32)
    ks_i = k_scale_img.reshape(1, D).astype(jnp.float32)

    packed = (D % 128 == 0)
    if packed:
        # Read q/k/v directly from the concatenated (B, L, 3H) qkv via lane offsets,
        # write a lane-dense (B, L, H) output: no reshape/transpose HBM round-trips.
        qkv = _pad_axis(jnp.concatenate([txt_qkv, img_qkv], axis=1), 1, Lp)
        q_in = k_in = v_in = qkv
        q_spec = pl.BlockSpec((1, tq, D), lambda b, h, i: (b, i, h))
        k_spec = pl.BlockSpec((1, Lp, D), lambda b, h, i: (b, 0, Hn + h))
        v_spec = pl.BlockSpec((1, Lp, D), lambda b, h, i: (b, 0, 2 * Hn + h))
        out_shape = jax.ShapeDtypeStruct((B, Lp, H), out_dtype)
        out_spec = pl.BlockSpec((1, tq, D), lambda b, h, i: (b, i, h))
    else:
        # Fallback for head dims that are not lane-aligned (e.g. the small self-test).
        tq_, tk_, tv_ = _split_heads(txt_qkv, Hn)
        iq_, ik_, iv_ = _split_heads(img_qkv, Hn)
        q_in = _pad_axis(jnp.concatenate([tq_, iq_], axis=2), 2, Lp)
        k_in = _pad_axis(jnp.concatenate([tk_, ik_], axis=2), 2, Lp)
        v_in = _pad_axis(jnp.concatenate([tv_, iv_], axis=2), 2, Lp)
        q_spec = pl.BlockSpec((1, 1, tq, D), lambda b, h, i: (b, h, i, 0))
        k_spec = pl.BlockSpec((1, 1, Lp, D), lambda b, h, i: (b, h, 0, 0))
        v_spec = pl.BlockSpec((1, 1, Lp, D), lambda b, h, i: (b, h, 0, 0))
        out_shape = jax.ShapeDtypeStruct((B, Hn, Lp, D), out_dtype)
        out_spec = pl.BlockSpec((1, 1, tq, D), lambda b, h, i: (b, h, i, 0))

    in_specs = [
        q_spec, k_spec, v_spec,
        pl.BlockSpec((1, tq, D), lambda b, h, i: (b, i, 0)),   # rope A (q tile)
        pl.BlockSpec((1, tq, D), lambda b, h, i: (b, i, 0)),   # rope B (q tile)
        pl.BlockSpec((1, Lp, D), lambda b, h, i: (b, 0, 0)),   # rope A (full, for K)
        pl.BlockSpec((1, Lp, D), lambda b, h, i: (b, 0, 0)),   # rope B (full, for K)
        pl.BlockSpec((1, D), lambda b, h, i: (0, 0)),          # txt q-scale
        pl.BlockSpec((1, D), lambda b, h, i: (0, 0)),          # img q-scale
        pl.BlockSpec((1, D), lambda b, h, i: (0, 0)),          # txt k-scale
        pl.BlockSpec((1, D), lambda b, h, i: (0, 0)),          # img k-scale
        pl.BlockSpec((D, D), lambda b, h, i: (0, 0)),          # pair-swap matrix
    ]

    _, _, _, vmem_limit = _linear_tiles()
    out = pl.pallas_call(
        functools.partial(_attn_kernel, packed=packed, sm_scale=sm_scale,
                          txt_len=Lt, true_len=L, tq=tq, tkv=tkv, nkv=nkv),
        out_shape=out_shape,
        grid=(B, Hn, Lp // tq),
        in_specs=in_specs,
        out_specs=out_spec,
        scratch_shapes=[pltpu.VMEM((Lp, D), jnp.bfloat16)],    # processed K, resident per head
        compiler_params=pltpu.CompilerParams(
            dimension_semantics=("parallel", "parallel", "arbitrary"),
            vmem_limit_bytes=vmem_limit),
    )(q_in, k_in, v_in, ropeA, ropeB, ropeA, ropeB, qs_t, qs_i, ks_t, ks_i, P)

    if packed:
        return out[:, :L, :]
    out = out[:, :, :L, :]
    return out.transpose(0, 2, 1, 3).reshape(B, L, H)


# ----------------------------------------------------------------------------
# JAX glue: pe construction, parameter init, full forward
# ----------------------------------------------------------------------------

def make_pe(B, L, dim, theta=10000.0):
    pos = jnp.arange(L, dtype=jnp.float32)[None, :]
    scale = jnp.arange(0, dim, 2, dtype=jnp.float32) / dim
    omega = 1.0 / (theta ** scale)
    out = jnp.einsum("bn,d->bnd", pos, omega)
    pe = jnp.stack([jnp.cos(out), -jnp.sin(out), jnp.sin(out), jnp.cos(out)], axis=-1)
    pe = pe.reshape(1, L, dim // 2, 2, 2)[:, None]
    return jnp.broadcast_to(pe, (B, 1, L, dim // 2, 2, 2)).astype(jnp.float32)


def init_params(key, hidden, num_heads, mlp_hidden):
    head_dim = hidden // num_heads
    keys = jax.random.split(key, 12)
    wdt = jnp.bfloat16

    def w(k, shape):
        return (0.02 * jax.random.normal(k, shape)).astype(wdt)

    p = {}
    # one concatenated modulation weight: [img(shift1,scale1,gate1,shift2,scale2,gate2), txt(...)]
    p["mod_w"] = w(keys[0], (hidden, 12 * hidden))
    p["mod_b"] = jnp.zeros((12 * hidden,), jnp.float32)
    for i, pref in enumerate(("img", "txt")):
        off = 1 + i * 5
        p[f"{pref}_qkv_w"] = w(keys[off + 0], (hidden, 3 * hidden))
        p[f"{pref}_qkv_b"] = jnp.zeros((3 * hidden,), jnp.float32)
        p[f"{pref}_q_scale"] = jnp.ones((head_dim,), jnp.float32)
        p[f"{pref}_k_scale"] = jnp.ones((head_dim,), jnp.float32)
        p[f"{pref}_proj_w"] = w(keys[off + 1], (hidden, hidden))
        p[f"{pref}_proj_b"] = jnp.zeros((hidden,), jnp.float32)
        p[f"{pref}_mlp_w1"] = w(keys[off + 2], (hidden, mlp_hidden))
        p[f"{pref}_mlp_b1"] = jnp.zeros((mlp_hidden,), jnp.float32)
        p[f"{pref}_mlp_w2"] = w(keys[off + 3], (mlp_hidden, hidden))
        p[f"{pref}_mlp_b2"] = jnp.zeros((hidden,), jnp.float32)
    return p


def double_stream_block(params, img, txt, vec, pe, num_heads):
    in_dtype = img.dtype
    cdt = jnp.bfloat16
    img = img.astype(cdt)
    txt = txt.astype(cdt)

    B, Li, H = img.shape
    Lt = txt.shape[1]

    # Modulation: tiny (B,H)@(H,12H) matmul -> plain XLA (no Pallas grid overhead).
    vec_silu = jax.nn.silu(vec.astype(jnp.float32)).astype(cdt)
    mod = jnp.dot(vec_silu, params["mod_w"],
                  preferred_element_type=jnp.float32) + params["mod_b"]
    mod = mod[:, None, :]                                          # (B, 1, 12H) f32
    (i_shift1, i_scale1, i_gate1, i_shift2, i_scale2, i_gate2,
     t_shift1, t_scale1, t_gate1, t_shift2, t_scale2, t_gate2) = jnp.split(mod, 12, axis=-1)

    # norm1 + modulate fused into the qkv projections
    img_qkv = linear_ln(img, i_scale1, i_shift1, params["img_qkv_w"], params["img_qkv_b"])
    txt_qkv = linear_ln(txt, t_scale1, t_shift1, params["txt_qkv_w"], params["txt_qkv_b"])

    # joint flash attention over [txt ; img] (QK-RMSNorm + RoPE fused in-kernel)
    attn_out = attention(txt_qkv, img_qkv, pe,
                         params["txt_q_scale"], params["img_q_scale"],
                         params["txt_k_scale"], params["img_k_scale"],
                         num_heads)
    txt_attn, img_attn = attn_out[:, :Lt], attn_out[:, Lt:]

    # img residuals (gated residual fused into matmul epilogues; norm2+modulate fused into mlp_w1)
    img = linear(img_attn, params["img_proj_w"], params["img_proj_b"],
                 res=img, gate=i_gate1)
    img_mlp_h = linear_ln(img, i_scale2, i_shift2,
                          params["img_mlp_w1"], params["img_mlp_b1"],
                          activation="gelu_tanh")
    img = linear(img_mlp_h, params["img_mlp_w2"], params["img_mlp_b2"],
                 res=img, gate=i_gate2)

    # txt residuals
    txt = linear(txt_attn, params["txt_proj_w"], params["txt_proj_b"],
                 res=txt, gate=t_gate1)
    txt_mlp_h = linear_ln(txt, t_scale2, t_shift2,
                          params["txt_mlp_w1"], params["txt_mlp_b1"],
                          activation="gelu_tanh")
    txt = linear(txt_mlp_h, params["txt_mlp_w2"], params["txt_mlp_b2"],
                 res=txt, gate=t_gate2)

    return img.astype(in_dtype), txt.astype(in_dtype)


# ----------------------------------------------------------------------------
# pure-JAX reference (for the self-check in __main__)
# ----------------------------------------------------------------------------

def _reference_block(params, img, txt, vec, pe, num_heads):
    f32 = jnp.float32
    img = img.astype(jnp.bfloat16).astype(f32)
    txt = txt.astype(jnp.bfloat16).astype(f32)
    vec = vec.astype(jnp.bfloat16).astype(f32)
    B, Li, H = img.shape
    Lt = txt.shape[1]
    D = H // num_heads

    def lin(x, w, b):
        return jnp.dot(x, w.astype(f32)) + b.astype(f32)

    def ln(x):
        m = x.mean(-1, keepdims=True)
        v = ((x - m) ** 2).mean(-1, keepdims=True)
        return (x - m) * jax.lax.rsqrt(v + 1e-6)

    def rms(x, s):
        return x * jax.lax.rsqrt(jnp.mean(x * x, -1, keepdims=True) + 1e-6) * s.astype(f32)

    def gelu(x):
        c = math.sqrt(2.0 / math.pi)
        return 0.5 * x * (1.0 + jnp.tanh(c * (x + 0.044715 * x ** 3)))

    def qkv_split(x):
        x = x.reshape(B, -1, 3, num_heads, D).transpose(2, 0, 3, 1, 4)
        return x[0], x[1], x[2]

    def rope(x):
        x_ = x.reshape(*x.shape[:-1], -1, 1, 2)
        out = pe[..., 0] * x_[..., 0] + pe[..., 1] * x_[..., 1]
        return out.reshape(x.shape)

    mod = lin(jax.nn.silu(vec), params["mod_w"], params["mod_b"])[:, None, :]
    (is1, ic1, ig1, is2, ic2, ig2, ts1, tc1, tg1, ts2, tc2, tg2) = jnp.split(mod, 12, -1)

    iq, ik, iv = qkv_split(lin((1 + ic1) * ln(img) + is1,
                               params["img_qkv_w"], params["img_qkv_b"]))
    iq, ik = rms(iq, params["img_q_scale"]), rms(ik, params["img_k_scale"])
    tq_, tk_, tv_ = qkv_split(lin((1 + tc1) * ln(txt) + ts1,
                                  params["txt_qkv_w"], params["txt_qkv_b"]))
    tq_, tk_ = rms(tq_, params["txt_q_scale"]), rms(tk_, params["txt_k_scale"])

    q = rope(jnp.concatenate([tq_, iq], 2))
    k = rope(jnp.concatenate([tk_, ik], 2))
    v = jnp.concatenate([tv_, iv], 2)
    s = jnp.einsum("bhqd,bhkd->bhqk", q, k) / math.sqrt(D)
    o = jnp.einsum("bhqk,bhkd->bhqd", jax.nn.softmax(s, axis=-1), v)
    o = o.transpose(0, 2, 1, 3).reshape(B, Lt + Li, H)
    to, io = o[:, :Lt], o[:, Lt:]

    img2 = img + ig1 * lin(io, params["img_proj_w"], params["img_proj_b"])
    img_mlp = lin(gelu(lin((1 + ic2) * ln(img2) + is2,
                           params["img_mlp_w1"], params["img_mlp_b1"])),
                  params["img_mlp_w2"], params["img_mlp_b2"])
    img_out = img2 + ig2 * img_mlp

    txt2 = txt + tg1 * lin(to, params["txt_proj_w"], params["txt_proj_b"])
    txt_mlp = lin(gelu(lin((1 + tc2) * ln(txt2) + ts2,
                           params["txt_mlp_w1"], params["txt_mlp_b1"])),
                  params["txt_mlp_w2"], params["txt_mlp_b2"])
    txt_out = txt2 + tg2 * txt_mlp
    return img_out, txt_out


if __name__ == "__main__":
    B = 2
    L_img = 16
    L_txt = 8
    hidden = 32
    num_heads = 2
    head_dim = hidden // num_heads          # 16 (even, as RoPE requires)
    mlp_hidden = 4 * hidden                 # mlp_ratio = 4

    key = jax.random.PRNGKey(0)
    k_img, k_txt, k_vec, k_par = jax.random.split(key, 4)

    img = jax.random.normal(k_img, (B, L_img, hidden), dtype=jnp.float32)
    txt = jax.random.normal(k_txt, (B, L_txt, hidden), dtype=jnp.float32)
    vec = jax.random.normal(k_vec, (B, hidden), dtype=jnp.float32)
    pe = make_pe(B, L_txt + L_img, head_dim)

    params = init_params(k_par, hidden, num_heads, mlp_hidden)

    fwd = jax.jit(functools.partial(double_stream_block, num_heads=num_heads))
    img_out, txt_out = fwd(params, img, txt, vec, pe)
    jax.block_until_ready((img_out, txt_out))

    assert img_out.shape == (B, L_img, hidden)
    assert txt_out.shape == (B, L_txt, hidden)
    assert bool(jnp.all(jnp.isfinite(img_out))) and bool(jnp.all(jnp.isfinite(txt_out)))

    ref_img, ref_txt = _reference_block(params, img, txt, vec, pe, num_heads)
    err_img = float(jnp.max(jnp.abs(img_out.astype(jnp.float32) - ref_img)))
    err_txt = float(jnp.max(jnp.abs(txt_out.astype(jnp.float32) - ref_txt)))
    assert err_img < 8e-2 and err_txt < 8e-2, (err_img, err_txt)

    print("KERNEL_OK")
</pallas_src>

<mosaic_0001>
module attributes {stable_mosaic.version = 11 : i64} {
  func.func @_linear_ln_kernel(%arg0: i32, %arg1: i32, %arg2: i32, %arg3: memref<1x16x128xbf16, #tpu.memory_space<vmem>>, %arg4: memref<1x1x128xf32, #tpu.memory_space<vmem>>, %arg5: memref<1x1x128xf32, #tpu.memory_space<vmem>>, %arg6: memref<128x128xbf16, #tpu.memory_space<vmem>>, %arg7: memref<1x128xf32, #tpu.memory_space<vmem>>, %arg8: memref<1x16x128xbf16, #tpu.memory_space<vmem>>, %arg9: memref<16x128xbf16, #tpu.memory_space<vmem>>) attributes {dimension_semantics = [#tpu.dimension_semantics<parallel>, #tpu.dimension_semantics<parallel>, #tpu.dimension_semantics<arbitrary>], iteration_bounds = array<i64: 2, 1, 1>, scalar_prefetch = 0 : i64, scratch_operands = 1 : i64, tpu.core_type = #tpu.core_type<tc>, window_params = [{transform_indices = @transform_0, window_bounds = array<i64: 1, 16, 128>}, {transform_indices = @transform_1, window_bounds = array<i64: 1, 1, 128>}, {transform_indices = @transform_2, window_bounds = array<i64: 1, 1, 128>}, {transform_indices = @transform_3, window_bounds = array<i64: 128, 128>}, {transform_indices = @transform_4, window_bounds = array<i64: 1, 128>}, {transform_indices = @transform_5, window_bounds = array<i64: 1, 16, 128>}]} {
    %c0_i32 = arith.constant 0 : i32
    %0 = arith.cmpi eq, %arg2, %c0_i32 : i32
    %1 = arith.extui %0 : i1 to i32
    %c0_i32_0 = arith.constant 0 : i32
    %2 = arith.cmpi ne, %1, %c0_i32_0 : i32
    scf.if %2 {
      %c0_9 = arith.constant 0 : index
      %c0_10 = arith.constant 0 : index
      %c0_11 = arith.constant 0 : index
      %13 = vector.load %arg3[%c0_9, %c0_10, %c0_11] : memref<1x16x128xbf16, #tpu.memory_space<vmem>>, vector<1x16x128xbf16>
      %14 = vector.shape_cast %13 : vector<1x16x128xbf16> to vector<16x128xbf16>
      %15 = arith.extf %14 : vector<16x128xbf16> to vector<16x128xf32>
      %16 = tpu.iota {dimensions = array<i32: 1>} : vector<16x128xi32>
      %c32_i32 = arith.constant 32 : i32
      %17 = vector.broadcast %c32_i32 : i32 to vector<16x128xi32>
      %18 = arith.cmpi slt, %16, %17 : vector<16x128xi32>
      %cst_12 = arith.constant dense<0.000000e+00> : vector<16xf32>
      %19 = vector.multi_reduction <add>, %15, %cst_12 [1] : vector<16x128xf32> to vector<16xf32>
      %20 = vector.shape_cast %19 : vector<16xf32> to vector<16x1xf32>
      %cst_13 = arith.constant 3.200000e+01 : f32
      %21 = vector.broadcast %cst_13 : f32 to vector<16x1xf32>
      %22 = arith.divf %20, %21 : vector<16x1xf32>
      %23 = vector.broadcast %22 : vector<16x1xf32> to vector<16x128xf32>
      %24 = arith.subf %15, %23 : vector<16x128xf32>
      %cst_14 = arith.constant 0.000000e+00 : f32
      %25 = vector.broadcast %cst_14 : f32 to vector<16x128xf32>
      %26 = arith.select %18, %24, %25 : vector<16x128xi1>, vector<16x128xf32>
      %27 = arith.mulf %26, %26 : vector<16x128xf32>
      %cst_15 = arith.constant dense<0.000000e+00> : vector<16xf32>
      %28 = vector.multi_reduction <add>, %27, %cst_15 [1] : vector<16x128xf32> to vector<16xf32>
      %29 = vector.shape_cast %28 : vector<16xf32> to vector<16x1xf32>
      %cst_16 = arith.constant 3.200000e+01 : f32
      %30 = vector.broadcast %cst_16 : f32 to vector<16x1xf32>
      %31 = arith.divf %29, %30 : vector<16x1xf32>
      %cst_17 = arith.constant 9.99999997E-7 : f32
      %32 = vector.broadcast %cst_17 : f32 to vector<16x1xf32>
      %33 = arith.addf %31, %32 : vector<16x1xf32>
      %34 = math.rsqrt %33 : vector<16x1xf32>
      %35 = vector.broadcast %34 : vector<16x1xf32> to vector<16x128xf32>
      %36 = arith.mulf %26, %35 : vector<16x128xf32>
      %c0_18 = arith.constant 0 : index
      %c0_19 = arith.constant 0 : index
      %c0_20 = arith.constant 0 : index
      %37 = vector.load %arg4[%c0_18, %c0_19, %c0_20] : memref<1x1x128xf32, #tpu.memory_space<vmem>>, vector<1x1x128xf32>
      %38 = vector.shape_cast %37 : vector<1x1x128xf32> to vector<1x128xf32>
      %c0_21 = arith.constant 0 : index
      %c0_22 = arith.constant 0 : index
      %c0_23 = arith.constant 0 : index
      %39 = vector.load %arg5[%c0_21, %c0_22, %c0_23] : memref<1x1x128xf32, #tpu.memory_space<vmem>>, vector<1x1x128xf32>
      %40 = vector.shape_cast %39 : vector<1x1x128xf32> to vector<1x128xf32>
      %cst_24 = arith.constant 1.000000e+00 : f32
      %41 = vector.broadcast %cst_24 : f32 to vector<1x128xf32>
      %42 = arith.addf %41, %38 : vector<1x128xf32>
      %43 = vector.broadcast %42 : vector<1x128xf32> to vector<16x128xf32>
      %44 = arith.mulf %43, %36 : vector<16x128xf32>
      %45 = vector.broadcast %40 : vector<1x128xf32> to vector<16x128xf32>
      %46 = arith.addf %44, %45 : vector<16x128xf32>
      %47 = arith.truncf %46 : vector<16x128xf32> to vector<16x128xbf16>
      %c0_25 = arith.constant 0 : index
      %c0_26 = arith.constant 0 : index
      %48 = vector.load %arg9[%c0_25, %c0_26] : memref<16x128xbf16, #tpu.memory_space<vmem>>, vector<16x128xbf16>
      tpu.vector_store %arg9[%c0_25, %c0_26], %47 {strides = array<i32>} : memref<16x128xbf16, #tpu.memory_space<vmem>>, vector<16x128xbf16>,
    } else {
    }
    %c0 = arith.constant 0 : index
    %c0_1 = arith.constant 0 : index
    %3 = vector.load %arg9[%c0, %c0_1] : memref<16x128xbf16, #tpu.memory_space<vmem>>, vector<16x128xbf16>
    %c0_2 = arith.constant 0 : index
    %c0_3 = arith.constant 0 : index
    %4 = vector.load %arg6[%c0_2, %c0_3] : memref<128x128xbf16, #tpu.memory_space<vmem>>, vector<128x128xbf16>
    %cst = arith.constant dense<0.000000e+00> : vector<16x128xf32>
    %5 = tpu.matmul %3, %4, %cst {dimension_numbers = #tpu.dot_dimension_numbers<[1], [0], [0], [1], [0, 0, 1, 1], [], []>} : vector<16x128xbf16>, vector<128x128xbf16>, vector<16x128xf32> -> vector<16x128xf32>
    %c0_4 = arith.constant 0 : index
    %c0_5 = arith.constant 0 : index
    %6 = vector.load %arg7[%c0_4, %c0_5] : memref<1x128xf32, #tpu.memory_space<vmem>>, vector<1x128xf32>
    %7 = vector.broadcast %6 : vector<1x128xf32> to vector<16x128xf32>
    %8 = arith.addf %5, %7 : vector<16x128xf32>
    %9 = arith.truncf %8 : vector<16x128xf32> to vector<16x128xbf16>
    %c0_6 = arith.constant 0 : index
    %c0_7 = arith.constant 0 : index
    %c0_8 = arith.constant 0 : index
    %10 = vector.load %arg8[%c0_6, %c0_7, %c0_8] : memref<1x16x128xbf16, #tpu.memory_space<vmem>>, vector<1x16x128xbf16>
    %11 = vector.shape_cast %10 : vector<1x16x128xbf16> to vector<16x128xbf16>
    %12 = vector.shape_cast %9 : vector<16x128xbf16> to vector<1x16x128xbf16>
    tpu.vector_store %arg8[%c0_6, %c0_7, %c0_8], %12 {strides = array<i32>} : memref<1x16x128xbf16, #tpu.memory_space<vmem>>, vector<1x16x128xbf16>,
    return
  }
  func.func @transform_0(%arg0: i32, %arg1: i32, %arg2: i32) -> (i32, i32, i32) {
    %c0_i32 = arith.constant 0 : i32
    %c0_i32_0 = arith.constant 0 : i32
    return %arg0, %arg1, %c0_i32 : i32, i32, i32
  }
  func.func @transform_1(%arg0: i32, %arg1: i32, %arg2: i32) -> (i32, i32, i32) {
    %c0_i32 = arith.constant 0 : i32
    %c0_i32_0 = arith.constant 0 : i32
    %c0_i32_1 = arith.constant 0 : i32
    return %arg0, %c0_i32, %c0_i32_0 : i32, i32, i32
  }
  func.func @transform_2(%arg0: i32, %arg1: i32, %arg2: i32) -> (i32, i32, i32) {
    %c0_i32 = arith.constant 0 : i32
    %c0_i32_0 = arith.constant 0 : i32
    %c0_i32_1 = arith.constant 0 : i32
    return %arg0, %c0_i32, %c0_i32_0 : i32, i32, i32
  }
  func.func @transform_3(%arg0: i32, %arg1: i32, %arg2: i32) -> (i32, i32) {
    %c0_i32 = arith.constant 0 : i32
    %c0_i32_0 = arith.constant 0 : i32
    return %c0_i32, %arg2 : i32, i32
  }
  func.func @transform_4(%arg0: i32, %arg1: i32, %arg2: i32) -> (i32, i32) {
    %c0_i32 = arith.constant 0 : i32
    %c0_i32_0 = arith.constant 0 : i32
    return %c0_i32, %arg2 : i32, i32
  }
  func.func @transform_5(%arg0: i32, %arg1: i32, %arg2: i32) -> (i32, i32, i32) {
    %c0_i32 = arith.constant 0 : i32
    return %arg0, %arg1, %arg2 : i32, i32, i32
  }
}

module attributes {stable_mosaic.version = 11 : i64} {
  func.func @_attn_kernel(%arg0: i32, %arg1: i32, %arg2: i32, %arg3: memref<1x1x32x16xbf16, #tpu.memory_space<vmem>>, %arg4: memref<1x1x32x16xbf16, #tpu.memory_space<vmem>>, %arg5: memref<1x1x32x16xbf16, #tpu.memory_space<vmem>>, %arg6: memref<1x32x16xf32, #tpu.memory_space<vmem>>, %arg7: memref<1x32x16xf32, #tpu.memory_space<vmem>>, %arg8: memref<1x32x16xf32, #tpu.memory_space<vmem>>, %arg9: memref<1x32x16xf32, #tpu.memory_space<vmem>>, %arg10: memref<1x16xf32, #tpu.memory_space<vmem>>, %arg11: memref<1x16xf32, #tpu.memory_space<vmem>>, %arg12: memref<1x16xf32, #tpu.memory_space<vmem>>, %arg13: memref<1x16xf32, #tpu.memory_space<vmem>>, %arg14: memref<16x16xf32, #tpu.memory_space<vmem>>, %arg15: memref<1x1x32x16xbf16, #tpu.memory_space<vmem>>, %arg16: memref<32x16xbf16, #tpu.memory_space<vmem>>) attributes {dimension_semantics = [#tpu.dimension_semantics<parallel>, #tpu.dimension_semantics<parallel>, #tpu.dimension_semantics<arbitrary>], iteration_bounds = array<i64: 2, 2, 1>, scalar_prefetch = 0 : i64, scratch_operands = 1 : i64, tpu.core_type = #tpu.core_type<tc>, window_params = [{transform_indices = @transform_0, window_bounds = array<i64: 1, 1, 32, 16>}, {transform_indices = @transform_1, window_bounds = array<i64: 1, 1, 32, 16>}, {transform_indices = @transform_2, window_bounds = array<i64: 1, 1, 32, 16>}, {transform_indices = @transform_3, window_bounds = array<i64: 1, 32, 16>}, {transform_indices = @transform_4, window_bounds = array<i64: 1, 32, 16>}, {transform_indices = @transform_5, window_bounds = array<i64: 1, 32, 16>}, {transform_indices = @transform_6, window_bounds = array<i64: 1, 32, 16>}, {pipeline_mode = #tpu.pipeline_mode<synchronous>, transform_indices = @transform_7, window_bounds = array<i64: 1, 16>}, {pipeline_mode = #tpu.pipeline_mode<synchronous>, transform_indices = @transform_8, window_bounds = array<i64: 1, 16>}, {pipeline_mode = #tpu.pipeline_mode<synchronous>, transform_indices = @transform_9, window_bounds = array<i64: 1, 16>}, {pipeline_mode = #tpu.pipeline_mode<synchronous>, transform_indices = @transform_10, window_bounds = array<i64: 1, 16>}, {pipeline_mode = #tpu.pipeline_mode<synchronous>, transform_indices = @transform_11, window_bounds = array<i64: 16, 16>}, {transform_indices = @transform_12, window_bounds = array<i64: 1, 1, 32, 16>}]} {
    %c0 = arith.constant 0 : index
    %c0_0 = arith.constant 0 : index
    %0 = vector.load %arg14[%c0, %c0_0] : memref<16x16xf32, #tpu.memory_space<vmem>>, vector<16x16xf32>
    %c0_i32 = arith.constant 0 : i32
    %1 = arith.cmpi eq, %arg2, %c0_i32 : i32
    %2 = arith.extui %1 : i1 to i32
    %c0_i32_1 = arith.constant 0 : i32
    %3 = arith.cmpi ne, %2, %c0_i32_1 : i32
    scf.if %3 {
      %c0_38 = arith.constant 0 : index
      %c0_39 = arith.constant 0 : index
      %c0_40 = arith.constant 0 : index
      %c0_41 = arith.constant 0 : index
      %84 = vector.load %arg4[%c0_38, %c0_39, %c0_40, %c0_41] : memref<1x1x32x16xbf16, #tpu.memory_space<vmem>>, vector<1x1x32x16xbf16>
      %85 = vector.shape_cast %84 : vector<1x1x32x16xbf16> to vector<32x16xbf16>
      %86 = arith.extf %85 : vector<32x16xbf16> to vector<32x16xf32>
      %87 = tpu.iota {dimensions = array<i32: 0>} : vector<32x16xi32>
      %c8_i32_42 = arith.constant 8 : i32
      %88 = vector.broadcast %c8_i32_42 : i32 to vector<32x16xi32>
      %89 = arith.cmpi slt, %87, %88 : vector<32x16xi32>
      %c0_43 = arith.constant 0 : index
      %c0_44 = arith.constant 0 : index
      %90 = vector.load %arg12[%c0_43, %c0_44] : memref<1x16xf32, #tpu.memory_space<vmem>>, vector<1x16xf32>
      %c0_45 = arith.constant 0 : index
      %c0_46 = arith.constant 0 : index
      %91 = vector.load %arg13[%c0_45, %c0_46] : memref<1x16xf32, #tpu.memory_space<vmem>>, vector<1x16xf32>
      %92 = vector.shape_cast %90 : vector<1x16xf32> to vector<1x16xf32>
      %93 = vector.broadcast %92 : vector<1x16xf32> to vector<32x16xf32>
      %94 = vector.shape_cast %91 : vector<1x16xf32> to vector<1x16xf32>
      %95 = vector.broadcast %94 : vector<1x16xf32> to vector<32x16xf32>
      %96 = arith.select %89, %93, %95 : vector<32x16xi1>, vector<32x16xf32>
      %c0_47 = arith.constant 0 : index
      %c0_48 = arith.constant 0 : index
      %c0_49 = arith.constant 0 : index
      %97 = vector.load %arg8[%c0_47, %c0_48, %c0_49] : memref<1x32x16xf32, #tpu.memory_space<vmem>>, vector<1x32x16xf32>
      %98 = vector.shape_cast %97 : vector<1x32x16xf32> to vector<32x16xf32>
      %c0_50 = arith.constant 0 : index
      %c0_51 = arith.constant 0 : index
      %c0_52 = arith.constant 0 : index
      %99 = vector.load %arg9[%c0_50, %c0_51, %c0_52] : memref<1x32x16xf32, #tpu.memory_space<vmem>>, vector<1x32x16xf32>
      %100 = vector.shape_cast %99 : vector<1x32x16xf32> to vector<32x16xf32>
      %101 = arith.mulf %86, %86 : vector<32x16xf32>
      %cst_53 = arith.constant dense<0.000000e+00> : vector<32xf32>
      %102 = vector.multi_reduction <add>, %101, %cst_53 [1] : vector<32x16xf32> to vector<32xf32>
      %103 = vector.shape_cast %102 : vector<32xf32> to vector<32x1xf32>
      %cst_54 = arith.constant 1.600000e+01 : f32
      %104 = vector.broadcast %cst_54 : f32 to vector<32x1xf32>
      %105 = arith.divf %103, %104 : vector<32x1xf32>
      %cst_55 = arith.constant 9.99999997E-7 : f32
      %106 = vector.broadcast %cst_55 : f32 to vector<32x1xf32>
      %107 = arith.addf %105, %106 : vector<32x1xf32>
      %108 = math.rsqrt %107 : vector<32x1xf32>
      %109 = vector.broadcast %108 : vector<32x1xf32> to vector<32x16xf32>
      %110 = arith.mulf %86, %109 : vector<32x16xf32>
      %111 = arith.mulf %110, %96 : vector<32x16xf32>
      %cst_56 = arith.constant dense<0.000000e+00> : vector<32x16xf32>
      %112 = tpu.matmul %111, %0, %cst_56 {dimension_numbers = #tpu.dot_dimension_numbers<[1], [0], [0], [1], [0, 0, 1, 1], [], []>} : vector<32x16xf32>, vector<16x16xf32>, vector<32x16xf32> -> vector<32x16xf32>
      %113 = arith.mulf %98, %111 : vector<32x16xf32>
      %114 = arith.mulf %100, %112 : vector<32x16xf32>
      %115 = arith.addf %113, %114 : vector<32x16xf32>
      %116 = arith.truncf %115 : vector<32x16xf32> to vector<32x16xbf16>
      %c0_57 = arith.constant 0 : index
      %c0_58 = arith.constant 0 : index
      %117 = vector.load %arg16[%c0_57, %c0_58] : memref<32x16xbf16, #tpu.memory_space<vmem>>, vector<32x16xbf16>
      tpu.vector_store %arg16[%c0_57, %c0_58], %116 {strides = array<i32>} : memref<32x16xbf16, #tpu.memory_space<vmem>>, vector<32x16xbf16>,
    } else {
    }
    %c0_2 = arith.constant 0 : index
    %c0_3 = arith.constant 0 : index
    %c0_4 = arith.constant 0 : index
    %c0_5 = arith.constant 0 : index
    %4 = vector.load %arg3[%c0_2, %c0_3, %c0_4, %c0_5] : memref<1x1x32x16xbf16, #tpu.memory_space<vmem>>, vector<1x1x32x16xbf16>
    %5 = vector.shape_cast %4 : vector<1x1x32x16xbf16> to vector<32x16xbf16>
    %6 = arith.extf %5 : vector<32x16xbf16> to vector<32x16xf32>
    %c32_i32 = arith.constant 32 : i32
    %7 = arith.muli %arg2, %c32_i32 : i32
    %8 = tpu.iota {dimensions = array<i32: 0>} : vector<32x16xi32>
    %9 = vector.broadcast %7 : i32 to vector<32x16xi32>
    %10 = arith.addi %9, %8 : vector<32x16xi32>
    %c8_i32 = arith.constant 8 : i32
    %11 = vector.broadcast %c8_i32 : i32 to vector<32x16xi32>
    %12 = arith.cmpi slt, %10, %11 : vector<32x16xi32>
    %c0_6 = arith.constant 0 : index
    %c0_7 = arith.constant 0 : index
    %13 = vector.load %arg10[%c0_6, %c0_7] : memref<1x16xf32, #tpu.memory_space<vmem>>, vector<1x16xf32>
    %c0_8 = arith.constant 0 : index
    %c0_9 = arith.constant 0 : index
    %14 = vector.load %arg11[%c0_8, %c0_9] : memref<1x16xf32, #tpu.memory_space<vmem>>, vector<1x16xf32>
    %15 = vector.shape_cast %13 : vector<1x16xf32> to vector<1x16xf32>
    %16 = vector.broadcast %15 : vector<1x16xf32> to vector<32x16xf32>
    %17 = vector.shape_cast %14 : vector<1x16xf32> to vector<1x16xf32>
    %18 = vector.broadcast %17 : vector<1x16xf32> to vector<32x16xf32>
    %19 = arith.select %12, %16, %18 : vector<32x16xi1>, vector<32x16xf32>
    %c0_10 = arith.constant 0 : index
    %c0_11 = arith.constant 0 : index
    %c0_12 = arith.constant 0 : index
    %20 = vector.load %arg6[%c0_10, %c0_11, %c0_12] : memref<1x32x16xf32, #tpu.memory_space<vmem>>, vector<1x32x16xf32>
    %21 = vector.shape_cast %20 : vector<1x32x16xf32> to vector<32x16xf32>
    %c0_13 = arith.constant 0 : index
    %c0_14 = arith.constant 0 : index
    %c0_15 = arith.constant 0 : index
    %22 = vector.load %arg7[%c0_13, %c0_14, %c0_15] : memref<1x32x16xf32, #tpu.memory_space<vmem>>, vector<1x32x16xf32>
    %23 = vector.shape_cast %22 : vector<1x32x16xf32> to vector<32x16xf32>
    %24 = arith.mulf %6, %6 : vector<32x16xf32>
    %cst = arith.constant dense<0.000000e+00> : vector<32xf32>
    %25 = vector.multi_reduction <add>, %24, %cst [1] : vector<32x16xf32> to vector<32xf32>
    %26 = vector.shape_cast %25 : vector<32xf32> to vector<32x1xf32>
    %cst_16 = arith.constant 1.600000e+01 : f32
    %27 = vector.broadcast %cst_16 : f32 to vector<32x1xf32>
    %28 = arith.divf %26, %27 : vector<32x1xf32>
    %cst_17 = arith.constant 9.99999997E-7 : f32
    %29 = vector.broadcast %cst_17 : f32 to vector<32x1xf32>
    %30 = arith.addf %28, %29 : vector<32x1xf32>
    %31 = math.rsqrt %30 : vector<32x1xf32>
    %32 = vector.broadcast %31 : vector<32x1xf32> to vector<32x16xf32>
    %33 = arith.mulf %6, %32 : vector<32x16xf32>
    %34 = arith.mulf %33, %19 : vector<32x16xf32>
    %cst_18 = arith.constant dense<0.000000e+00> : vector<32x16xf32>
    %35 = tpu.matmul %34, %0, %cst_18 {dimension_numbers = #tpu.dot_dimension_numbers<[1], [0], [0], [1], [0, 0, 1, 1], [], []>} : vector<32x16xf32>, vector<16x16xf32>, vector<32x16xf32> -> vector<32x16xf32>
    %36 = arith.mulf %21, %34 : vector<32x16xf32>
    %37 = arith.mulf %23, %35 : vector<32x16xf32>
    %38 = arith.addf %36, %37 : vector<32x16xf32>
    %cst_19 = arith.constant 2.500000e-01 : f32
    %39 = vector.broadcast %cst_19 : f32 to vector<32x16xf32>
    %40 = arith.mulf %38, %39 : vector<32x16xf32>
    %41 = arith.truncf %40 : vector<32x16xf32> to vector<32x16xbf16>
    %cst_20 = arith.constant -1.000000e+30 : f32
    %42 = vector.broadcast %cst_20 : f32 to vector<32x1xf32>
    %cst_21 = arith.constant 0.000000e+00 : f32
    %43 = vector.broadcast %cst_21 : f32 to vector<32x1xf32>
    %cst_22 = arith.constant 0.000000e+00 : f32
    %44 = vector.broadcast %cst_22 : f32 to vector<32x16xf32>
    %c0_i32_23 = arith.constant 0 : i32
    %c32_i32_24 = arith.constant 32 : i32
    %45 = arith.muli %c0_i32_23, %c32_i32_24 : i32
    %46 = tpu.assume_multiple %45, 32 : i32
    %47 = arith.index_cast %46 : i32 to index
    %c0_25 = arith.constant 0 : index
    %48 = vector.load %arg16[%47, %c0_25] : memref<32x16xbf16, #tpu.memory_space<vmem>>, vector<32x16xbf16>
    %c0_26 = arith.constant 0 : index
    %c0_27 = arith.constant 0 : index
    %49 = arith.index_cast %46 : i32 to index
    %c0_28 = arith.constant 0 : index
    %50 = vector.load %arg5[%c0_26, %c0_27, %49, %c0_28] : memref<1x1x32x16xbf16, #tpu.memory_space<vmem>>, vector<1x1x32x16xbf16>
    %51 = vector.shape_cast %50 : vector<1x1x32x16xbf16> to vector<32x16xbf16>
    %cst_29 = arith.constant dense<0.000000e+00> : vector<32x32xf32>
    %52 = tpu.matmul %41, %48, %cst_29 {dimension_numbers = #tpu.dot_dimension_numbers<[1], [1], [0], [0], [0, 0, 1, 0], [], []>} : vector<32x16xbf16>, vector<32x16xbf16>, vector<32x32xf32> -> vector<32x32xf32>
    %53 = tpu.iota {dimensions = array<i32: 1>} : vector<32x32xi32>
    %54 = vector.broadcast %46 : i32 to vector<32x32xi32>
    %55 = arith.addi %54, %53 : vector<32x32xi32>
    %c24_i32 = arith.constant 24 : i32
    %56 = vector.broadcast %c24_i32 : i32 to vector<32x32xi32>
    %57 = arith.cmpi slt, %55, %56 : vector<32x32xi32>
    %cst_30 = arith.constant -1.000000e+30 : f32
    %58 = vector.broadcast %cst_30 : f32 to vector<32x32xf32>
    %59 = arith.select %57, %52, %58 : vector<32x32xi1>, vector<32x32xf32>
    %cst_31 = arith.constant dense<0xFF800000> : vector<32xf32>
    %60 = vector.multi_reduction <maximumf>, %59, %cst_31 [1] : vector<32x32xf32> to vector<32xf32>
    %61 = vector.shape_cast %60 : vector<32xf32> to vector<32x1xf32>
    %62 = arith.maximumf %42, %61 : vector<32x1xf32>
    %63 = arith.subf %42, %62 : vector<32x1xf32>
    %64 = math.exp %63 : vector<32x1xf32>
    %65 = vector.broadcast %62 : vector<32x1xf32> to vector<32x32xf32>
    %66 = arith.subf %59, %65 : vector<32x32xf32>
    %67 = math.exp %66 : vector<32x32xf32>
    %68 = arith.mulf %64, %43 : vector<32x1xf32>
    %cst_32 = arith.constant dense<0.000000e+00> : vector<32xf32>
    %69 = vector.multi_reduction <add>, %67, %cst_32 [1] : vector<32x32xf32> to vector<32xf32>
    %70 = vector.shape_cast %69 : vector<32xf32> to vector<32x1xf32>
    %71 = arith.addf %68, %70 : vector<32x1xf32>
    %72 = vector.broadcast %64 : vector<32x1xf32> to vector<32x16xf32>
    %73 = arith.mulf %72, %44 : vector<32x16xf32>
    %74 = arith.truncf %67 : vector<32x32xf32> to vector<32x32xbf16>
    %cst_33 = arith.constant dense<0.000000e+00> : vector<32x16xf32>
    %75 = tpu.matmul %74, %51, %cst_33 {dimension_numbers = #tpu.dot_dimension_numbers<[1], [0], [0], [1], [0, 0, 1, 1], [], []>} : vector<32x32xbf16>, vector<32x16xbf16>, vector<32x16xf32> -> vector<32x16xf32>
    %76 = arith.addf %73, %75 : vector<32x16xf32>
    %c1_i32 = arith.constant 1 : i32
    %77 = tpu.reciprocal %71 {approx = true} : vector<32x1xf32> -> vector<32x1xf32>
    %78 = vector.broadcast %77 : vector<32x1xf32> to vector<32x16xf32>
    %79 = arith.mulf %76, %78 : vector<32x16xf32>
    %80 = arith.truncf %79 : vector<32x16xf32> to vector<32x16xbf16>
    %c0_34 = arith.constant 0 : index
    %c0_35 = arith.constant 0 : index
    %c0_36 = arith.constant 0 : index
    %c0_37 = arith.constant 0 : index
    %81 = vector.load %arg15[%c0_34, %c0_35, %c0_36, %c0_37] : memref<1x1x32x16xbf16, #tpu.memory_space<vmem>>, vector<1x1x32x16xbf16>
    %82 = vector.shape_cast %81 : vector<1x1x32x16xbf16> to vector<32x16xbf16>
    %83 = vector.shape_cast %80 : vector<32x16xbf16> to vector<1x1x32x16xbf16>
    tpu.vector_store %arg15[%c0_34, %c0_35, %c0_36, %c0_37], %83 {strides = array<i32>} : memref<1x1x32x16xbf16, #tpu.memory_space<vmem>>, vector<1x1x32x16xbf16>,
    return
  }
  func.func @transform_0(%arg0: i32, %arg1: i32, %arg2: i32) -> (i32, i32, i32, i32) {
    %c0_i32 = arith.constant 0 : i32
    %c0_i32_0 = arith.constant 0 : i32
    return %arg0, %arg1, %arg2, %c0_i32 : i32, i32, i32, i32
  }
  func.func @transform_1(%arg0: i32, %arg1: i32, %arg2: i32) -> (i32, i32, i32, i32) {
    %c0_i32 = arith.constant 0 : i32
    %c0_i32_0 = arith.constant 0 : i32
    %c0_i32_1 = arith.constant 0 : i32
    return %arg0, %arg1, %c0_i32, %c0_i32_0 : i32, i32, i32, i32
  }
  func.func @transform_2(%arg0: i32, %arg1: i32, %arg2: i32) -> (i32, i32, i32, i32) {
    %c0_i32 = arith.constant 0 : i32
    %c0_i32_0 = arith.constant 0 : i32
    %c0_i32_1 = arith.constant 0 : i32
    return %arg0, %arg1, %c0_i32, %c0_i32_0 : i32, i32, i32, i32
  }
  func.func @transform_3(%arg0: i32, %arg1: i32, %arg2: i32) -> (i32, i32, i32) {
    %c0_i32 = arith.constant 0 : i32
    %c0_i32_0 = arith.constant 0 : i32
    return %arg0, %arg2, %c0_i32 : i32, i32, i32
  }
  func.func @transform_4(%arg0: i32, %arg1: i32, %arg2: i32) -> (i32, i32, i32) {
    %c0_i32 = arith.constant 0 : i32
    %c0_i32_0 = arith.constant 0 : i32
    return %arg0, %arg2, %c0_i32 : i32, i32, i32
  }
  func.func @transform_5(%arg0: i32, %arg1: i32, %arg2: i32) -> (i32, i32, i32) {
    %c0_i32 = arith.constant 0 : i32
    %c0_i32_0 = arith.constant 0 : i32
    %c0_i32_1 = arith.constant 0 : i32
    return %arg0, %c0_i32, %c0_i32_0 : i32, i32, i32
  }
  func.func @transform_6(%arg0: i32, %arg1: i32, %arg2: i32) -> (i32, i32, i32) {
    %c0_i32 = arith.constant 0 : i32
    %c0_i32_0 = arith.constant 0 : i32
    %c0_i32_1 = arith.constant 0 : i32
    return %arg0, %c0_i32, %c0_i32_0 : i32, i32, i32
  }
  func.func @transform_7(%arg0: i32, %arg1: i32, %arg2: i32) -> (i32, i32) {
    %c0_i32 = arith.constant 0 : i32
    %c0_i32_0 = arith.constant 0 : i32
    %c0_i32_1 = arith.constant 0 : i32
    return %c0_i32, %c0_i32_0 : i32, i32
  }
  func.func @transform_8(%arg0: i32, %arg1: i32, %arg2: i32) -> (i32, i32) {
    %c0_i32 = arith.constant 0 : i32
    %c0_i32_0 = arith.constant 0 : i32
    %c0_i32_1 = arith.constant 0 : i32
    return %c0_i32, %c0_i32_0 : i32, i32
  }
  func.func @transform_9(%arg0: i32, %arg1: i32, %arg2: i32) -> (i32, i32) {
    %c0_i32 = arith.constant 0 : i32
    %c0_i32_0 = arith.constant 0 : i32
    %c0_i32_1 = arith.constant 0 : i32
    return %c0_i32, %c0_i32_0 : i32, i32
  }
  func.func @transform_10(%arg0: i32, %arg1: i32, %arg2: i32) -> (i32, i32) {
    %c0_i32 = arith.constant 0 : i32
    %c0_i32_0 = arith.constant 0 : i32
    %c0_i32_1 = arith.constant 0 : i32
    return %c0_i32, %c0_i32_0 : i32, i32
  }
  func.func @transform_11(%arg0: i32, %arg1: i32, %arg2: i32) -> (i32, i32) {
    %c0_i32 = arith.constant 0 : i32
    %c0_i32_0 = arith.constant 0 : i32
    %c0_i32_1 = arith.constant 0 : i32
    return %c0_i32, %c0_i32_0 : i32, i32
  }
  func.func @transform_12(%arg0: i32, %arg1: i32, %arg2: i32) -> (i32, i32, i32, i32) {
    %c0_i32 = arith.constant 0 : i32
    %c0_i32_0 = arith.constant 0 : i32
    return %arg0, %arg1, %arg2, %c0_i32 : i32, i32, i32, i32
  }
}

module attributes {stable_mosaic.version = 11 : i64} {
  func.func @_linear_kernel(%arg0: i32, %arg1: i32, %arg2: i32, %arg3: i32, %arg4: memref<1x16x128xbf16, #tpu.memory_space<vmem>>, %arg5: memref<128x128xbf16, #tpu.memory_space<vmem>>, %arg6: memref<1x128xf32, #tpu.memory_space<vmem>>, %arg7: memref<1x16x128xbf16, #tpu.memory_space<vmem>>, %arg8: memref<1x1x128xf32, #tpu.memory_space<vmem>>, %arg9: memref<1x16x128xbf16, #tpu.memory_space<vmem>>, %arg10: memref<16x128xf32, #tpu.memory_space<vmem>>) attributes {dimension_semantics = [#tpu.dimension_semantics<parallel>, #tpu.dimension_semantics<parallel>, #tpu.dimension_semantics<parallel>, #tpu.dimension_semantics<arbitrary>], iteration_bounds = array<i64: 2, 1, 1, 1>, scalar_prefetch = 0 : i64, scratch_operands = 1 : i64, tpu.core_type = #tpu.core_type<tc>, window_params = [{transform_indices = @transform_0, window_bounds = array<i64: 1, 16, 128>}, {transform_indices = @transform_1, window_bounds = array<i64: 128, 128>}, {transform_indices = @transform_2, window_bounds = array<i64: 1, 128>}, {transform_indices = @transform_3, window_bounds = array<i64: 1, 16, 128>}, {transform_indices = @transform_4, window_bounds = array<i64: 1, 1, 128>}, {transform_indices = @transform_5, window_bounds = array<i64: 1, 16, 128>}]} {
    %c0_i32 = arith.constant 0 : i32
    %0 = arith.cmpi eq, %arg3, %c0_i32 : i32
    %1 = arith.extui %0 : i1 to i32
    %c0_i32_0 = arith.constant 0 : i32
    %2 = arith.cmpi ne, %1, %c0_i32_0 : i32
    scf.if %2 {
      %cst_11 = arith.constant 0.000000e+00 : f32
      %13 = vector.broadcast %cst_11 : f32 to vector<16x128xf32>
      %c0_12 = arith.constant 0 : index
      %c0_13 = arith.constant 0 : index
      %14 = vector.load %arg10[%c0_12, %c0_13] : memref<16x128xf32, #tpu.memory_space<vmem>>, vector<16x128xf32>
      tpu.vector_store %arg10[%c0_12, %c0_13], %13 {strides = array<i32>} : memref<16x128xf32, #tpu.memory_space<vmem>>, vector<16x128xf32>,
    } else {
    }
    %c0 = arith.constant 0 : index
    %c0_1 = arith.constant 0 : index
    %3 = vector.load %arg10[%c0, %c0_1] : memref<16x128xf32, #tpu.memory_space<vmem>>, vector<16x128xf32>
    %c0_2 = arith.constant 0 : index
    %c0_3 = arith.constant 0 : index
    %c0_4 = arith.constant 0 : index
    %4 = vector.load %arg4[%c0_2, %c0_3, %c0_4] : memref<1x16x128xbf16, #tpu.memory_space<vmem>>, vector<1x16x128xbf16>
    %5 = vector.shape_cast %4 : vector<1x16x128xbf16> to vector<16x128xbf16>
    %c0_5 = arith.constant 0 : index
    %c0_6 = arith.constant 0 : index
    %6 = vector.load %arg5[%c0_5, %c0_6] : memref<128x128xbf16, #tpu.memory_space<vmem>>, vector<128x128xbf16>
    %cst = arith.constant dense<0.000000e+00> : vector<16x128xf32>
    %7 = tpu.matmul %5, %6, %cst {dimension_numbers = #tpu.dot_dimension_numbers<[1], [0], [0], [1], [0, 0, 1, 1], [], []>} : vector<16x128xbf16>, vector<128x128xbf16>, vector<16x128xf32> -> vector<16x128xf32>
    %8 = arith.addf %3, %7 : vector<16x128xf32>
    %c0_7 = arith.constant 0 : index
    %c0_8 = arith.constant 0 : index
    %9 = vector.load %arg10[%c0_7, %c0_8] : memref<16x128xf32, #tpu.memory_space<vmem>>, vector<16x128xf32>
    tpu.vector_store %arg10[%c0_7, %c0_8], %8 {strides = array<i32>} : memref<16x128xf32, #tpu.memory_space<vmem>>, vector<16x128xf32>,
    %c0_i32_9 = arith.constant 0 : i32
    %10 = arith.cmpi eq, %arg3, %c0_i32_9 : i32
    %11 = arith.extui %10 : i1 to i32
    %c0_i32_10 = arith.constant 0 : i32
    %12 = arith.cmpi ne, %11, %c0_i32_10 : i32
    scf.if %12 {
      %c0_11 = arith.constant 0 : index
      %c0_12 = arith.constant 0 : index
      %13 = vector.load %arg10[%c0_11, %c0_12] : memref<16x128xf32, #tpu.memory_space<vmem>>, vector<16x128xf32>
      %c0_13 = arith.constant 0 : index
      %c0_14 = arith.constant 0 : index
      %14 = vector.load %arg6[%c0_13, %c0_14] : memref<1x128xf32, #tpu.memory_space<vmem>>, vector<1x128xf32>
      %15 = vector.broadcast %14 : vector<1x128xf32> to vector<16x128xf32>
      %16 = arith.addf %13, %15 : vector<16x128xf32>
      %c0_15 = arith.constant 0 : index
      %c0_16 = arith.constant 0 : index
      %c0_17 = arith.constant 0 : index
      %17 = vector.load %arg7[%c0_15, %c0_16, %c0_17] : memref<1x16x128xbf16, #tpu.memory_space<vmem>>, vector<1x16x128xbf16>
      %18 = vector.shape_cast %17 : vector<1x16x128xbf16> to vector<16x128xbf16>
      %19 = arith.extf %18 : vector<16x128xbf16> to vector<16x128xf32>
      %c0_18 = arith.constant 0 : index
      %c0_19 = arith.constant 0 : index
      %c0_20 = arith.constant 0 : index
      %20 = vector.load %arg8[%c0_18, %c0_19, %c0_20] : memref<1x1x128xf32, #tpu.memory_space<vmem>>, vector<1x1x128xf32>
      %21 = vector.shape_cast %20 : vector<1x1x128xf32> to vector<1x128xf32>
      %22 = vector.broadcast %21 : vector<1x128xf32> to vector<16x128xf32>
      %23 = arith.mulf %22, %16 : vector<16x128xf32>
      %24 = arith.addf %19, %23 : vector<16x128xf32>
      %25 = arith.truncf %24 : vector<16x128xf32> to vector<16x128xbf16>
      %c0_21 = arith.constant 0 : index
      %c0_22 = arith.constant 0 : index
      %c0_23 = arith.constant 0 : index
      %26 = vector.load %arg9[%c0_21, %c0_22, %c0_23] : memref<1x16x128xbf16, #tpu.memory_space<vmem>>, vector<1x16x128xbf16>
      %27 = vector.shape_cast %26 : vector<1x16x128xbf16> to vector<16x128xbf16>
      %28 = vector.shape_cast %25 : vector<16x128xbf16> to vector<1x16x128xbf16>
      tpu.vector_store %arg9[%c0_21, %c0_22, %c0_23], %28 {strides = array<i32>} : memref<1x16x128xbf16, #tpu.memory_space<vmem>>, vector<1x16x128xbf16>,
    } else {
    }
    return
  }
  func.func @transform_0(%arg0: i32, %arg1: i32, %arg2: i32, %arg3: i32) -> (i32, i32, i32) {
    %c0_i32 = arith.constant 0 : i32
    return %arg0, %arg1, %arg3 : i32, i32, i32
  }
  func.func @transform_1(%arg0: i32, %arg1: i32, %arg2: i32, %arg3: i32) -> (i32, i32) {
    %c0_i32 = arith.constant 0 : i32
    return %arg3, %arg2 : i32, i32
  }
  func.func @transform_2(%arg0: i32, %arg1: i32, %arg2: i32, %arg3: i32) -> (i32, i32) {
    %c0_i32 = arith.constant 0 : i32
    %c0_i32_0 = arith.constant 0 : i32
    return %c0_i32, %arg2 : i32, i32
  }
  func.func @transform_3(%arg0: i32, %arg1: i32, %arg2: i32, %arg3: i32) -> (i32, i32, i32) {
    %c0_i32 = arith.constant 0 : i32
    return %arg0, %arg1, %arg2 : i32, i32, i32
  }
  func.func @transform_4(%arg0: i32, %arg1: i32, %arg2: i32, %arg3: i32) -> (i32, i32, i32) {
    %c0_i32 = arith.constant 0 : i32
    %c0_i32_0 = arith.constant 0 : i32
    return %arg0, %c0_i32, %arg2 : i32, i32, i32
  }
  func.func @transform_5(%arg0: i32, %arg1: i32, %arg2: i32, %arg3: i32) -> (i32, i32, i32) {
    %c0_i32 = arith.constant 0 : i32
    return %arg0, %arg1, %arg2 : i32, i32, i32
  }
}

module attributes {stable_mosaic.version = 11 : i64} {
  func.func @_linear_ln_kernel(%arg0: i32, %arg1: i32, %arg2: i32, %arg3: memref<1x16x128xbf16, #tpu.memory_space<vmem>>, %arg4: memref<1x1x128xf32, #tpu.memory_space<vmem>>, %arg5: memref<1x1x128xf32, #tpu.memory_space<vmem>>, %arg6: memref<128x128xbf16, #tpu.memory_space<vmem>>, %arg7: memref<1x128xf32, #tpu.memory_space<vmem>>, %arg8: memref<1x16x128xbf16, #tpu.memory_space<vmem>>, %arg9: memref<16x128xbf16, #tpu.memory_space<vmem>>) attributes {dimension_semantics = [#tpu.dimension_semantics<parallel>, #tpu.dimension_semantics<parallel>, #tpu.dimension_semantics<arbitrary>], iteration_bounds = array<i64: 2, 1, 1>, scalar_prefetch = 0 : i64, scratch_operands = 1 : i64, tpu.core_type = #tpu.core_type<tc>, window_params = [{transform_indices = @transform_0, window_bounds = array<i64: 1, 16, 128>}, {transform_indices = @transform_1, window_bounds = array<i64: 1, 1, 128>}, {transform_indices = @transform_2, window_bounds = array<i64: 1, 1, 128>}, {transform_indices = @transform_3, window_bounds = array<i64: 128, 128>}, {transform_indices = @transform_4, window_bounds = array<i64: 1, 128>}, {transform_indices = @transform_5, window_bounds = array<i64: 1, 16, 128>}]} {
    %c0_i32 = arith.constant 0 : i32
    %0 = arith.cmpi eq, %arg2, %c0_i32 : i32
    %1 = arith.extui %0 : i1 to i32
    %c0_i32_0 = arith.constant 0 : i32
    %2 = arith.cmpi ne, %1, %c0_i32_0 : i32
    scf.if %2 {
      %c0_13 = arith.constant 0 : index
      %c0_14 = arith.constant 0 : index
      %c0_15 = arith.constant 0 : index
      %26 = vector.load %arg3[%c0_13, %c0_14, %c0_15] : memref<1x16x128xbf16, #tpu.memory_space<vmem>>, vector<1x16x128xbf16>
      %27 = vector.shape_cast %26 : vector<1x16x128xbf16> to vector<16x128xbf16>
      %28 = arith.extf %27 : vector<16x128xbf16> to vector<16x128xf32>
      %29 = tpu.iota {dimensions = array<i32: 1>} : vector<16x128xi32>
      %c32_i32 = arith.constant 32 : i32
      %30 = vector.broadcast %c32_i32 : i32 to vector<16x128xi32>
      %31 = arith.cmpi slt, %29, %30 : vector<16x128xi32>
      %cst_16 = arith.constant dense<0.000000e+00> : vector<16xf32>
      %32 = vector.multi_reduction <add>, %28, %cst_16 [1] : vector<16x128xf32> to vector<16xf32>
      %33 = vector.shape_cast %32 : vector<16xf32> to vector<16x1xf32>
      %cst_17 = arith.constant 3.200000e+01 : f32
      %34 = vector.broadcast %cst_17 : f32 to vector<16x1xf32>
      %35 = arith.divf %33, %34 : vector<16x1xf32>
      %36 = vector.broadcast %35 : vector<16x1xf32> to vector<16x128xf32>
      %37 = arith.subf %28, %36 : vector<16x128xf32>
      %cst_18 = arith.constant 0.000000e+00 : f32
      %38 = vector.broadcast %cst_18 : f32 to vector<16x128xf32>
      %39 = arith.select %31, %37, %38 : vector<16x128xi1>, vector<16x128xf32>
      %40 = arith.mulf %39, %39 : vector<16x128xf32>
      %cst_19 = arith.constant dense<0.000000e+00> : vector<16xf32>
      %41 = vector.multi_reduction <add>, %40, %cst_19 [1] : vector<16x128xf32> to vector<16xf32>
      %42 = vector.shape_cast %41 : vector<16xf32> to vector<16x1xf32>
      %cst_20 = arith.constant 3.200000e+01 : f32
      %43 = vector.broadcast %cst_20 : f32 to vector<16x1xf32>
      %44 = arith.divf %42, %43 : vector<16x1xf32>
      %cst_21 = arith.constant 9.99999997E-7 : f32
      %45 = vector.broadcast %cst_21 : f32 to vector<16x1xf32>
      %46 = arith.addf %44, %45 : vector<16x1xf32>
      %47 = math.rsqrt %46 : vector<16x1xf32>
      %48 = vector.broadcast %47 : vector<16x1xf32> to vector<16x128xf32>
      %49 = arith.mulf %39, %48 : vector<16x128xf32>
      %c0_22 = arith.constant 0 : index
      %c0_23 = arith.constant 0 : index
      %c0_24 = arith.constant 0 : index
      %50 = vector.load %arg4[%c0_22, %c0_23, %c0_24] : memref<1x1x128xf32, #tpu.memory_space<vmem>>, vector<1x1x128xf32>
      %51 = vector.shape_cast %50 : vector<1x1x128xf32> to vector<1x128xf32>
      %c0_25 = arith.constant 0 : index
      %c0_26 = arith.constant 0 : index
      %c0_27 = arith.constant 0 : index
      %52 = vector.load %arg5[%c0_25, %c0_26, %c0_27] : memref<1x1x128xf32, #tpu.memory_space<vmem>>, vector<1x1x128xf32>
      %53 = vector.shape_cast %52 : vector<1x1x128xf32> to vector<1x128xf32>
      %cst_28 = arith.constant 1.000000e+00 : f32
      %54 = vector.broadcast %cst_28 : f32 to vector<1x128xf32>
      %55 = arith.addf %54, %51 : vector<1x128xf32>
      %56 = vector.broadcast %55 : vector<1x128xf32> to vector<16x128xf32>
      %57 = arith.mulf %56, %49 : vector<16x128xf32>
      %58 = vector.broadcast %53 : vector<1x128xf32> to vector<16x128xf32>
      %59 = arith.addf %57, %58 : vector<16x128xf32>
      %60 = arith.truncf %59 : vector<16x128xf32> to vector<16x128xbf16>
      %c0_29 = arith.constant 0 : index
      %c0_30 = arith.constant 0 : index
      %61 = vector.load %arg9[%c0_29, %c0_30] : memref<16x128xbf16, #tpu.memory_space<vmem>>, vector<16x128xbf16>
      tpu.vector_store %arg9[%c0_29, %c0_30], %60 {strides = array<i32>} : memref<16x128xbf16, #tpu.memory_space<vmem>>, vector<16x128xbf16>,
    } else {
    }
    %c0 = arith.constant 0 : index
    %c0_1 = arith.constant 0 : index
    %3 = vector.load %arg9[%c0, %c0_1] : memref<16x128xbf16, #tpu.memory_space<vmem>>, vector<16x128xbf16>
    %c0_2 = arith.constant 0 : index
    %c0_3 = arith.constant 0 : index
    %4 = vector.load %arg6[%c0_2, %c0_3] : memref<128x128xbf16, #tpu.memory_space<vmem>>, vector<128x128xbf16>
    %cst = arith.constant dense<0.000000e+00> : vector<16x128xf32>
    %5 = tpu.matmul %3, %4, %cst {dimension_numbers = #tpu.dot_dimension_numbers<[1], [0], [0], [1], [0, 0, 1, 1], [], []>} : vector<16x128xbf16>, vector<128x128xbf16>, vector<16x128xf32> -> vector<16x128xf32>
    %c0_4 = arith.constant 0 : index
    %c0_5 = arith.constant 0 : index
    %6 = vector.load %arg7[%c0_4, %c0_5] : memref<1x128xf32, #tpu.memory_space<vmem>>, vector<1x128xf32>
    %7 = vector.broadcast %6 : vector<1x128xf32> to vector<16x128xf32>
    %8 = arith.addf %5, %7 : vector<16x128xf32>
    %cst_6 = arith.constant 5.000000e-01 : f32
    %9 = vector.broadcast %cst_6 : f32 to vector<16x128xf32>
    %10 = arith.mulf %9, %8 : vector<16x128xf32>
    %cst_7 = arith.constant 4.471500e-02 : f32
    %11 = vector.broadcast %cst_7 : f32 to vector<16x128xf32>
    %12 = arith.mulf %11, %8 : vector<16x128xf32>
    %13 = arith.mulf %12, %8 : vector<16x128xf32>
    %14 = arith.mulf %13, %8 : vector<16x128xf32>
    %15 = arith.addf %8, %14 : vector<16x128xf32>
    %cst_8 = arith.constant 0.797884583 : f32
    %16 = vector.broadcast %cst_8 : f32 to vector<16x128xf32>
    %17 = arith.mulf %16, %15 : vector<16x128xf32>
    %18 = math.tanh %17 : vector<16x128xf32>
    %cst_9 = arith.constant 1.000000e+00 : f32
    %19 = vector.broadcast %cst_9 : f32 to vector<16x128xf32>
    %20 = arith.addf %19, %18 : vector<16x128xf32>
    %21 = arith.mulf %10, %20 : vector<16x128xf32>
    %22 = arith.truncf %21 : vector<16x128xf32> to vector<16x128xbf16>
    %c0_10 = arith.constant 0 : index
    %c0_11 = arith.constant 0 : index
    %c0_12 = arith.constant 0 : index
    %23 = vector.load %arg8[%c0_10, %c0_11, %c0_12] : memref<1x16x128xbf16, #tpu.memory_space<vmem>>, vector<1x16x128xbf16>
    %24 = vector.shape_cast %23 : vector<1x16x128xbf16> to vector<16x128xbf16>
    %25 = vector.shape_cast %22 : vector<16x128xbf16> to vector<1x16x128xbf16>
    tpu.vector_store %arg8[%c0_10, %c0_11, %c0_12], %25 {strides = array<i32>} : memref<1x16x128xbf16, #tpu.memory_space<vmem>>, vector<1x16x128xbf16>,
    return
  }
  func.func @transform_0(%arg0: i32, %arg1: i32, %arg2: i32) -> (i32, i32, i32) {
    %c0_i32 = arith.constant 0 : i32
    %c0_i32_0 = arith.constant 0 : i32
    return %arg0, %arg1, %c0_i32 : i32, i32, i32
  }
  func.func @transform_1(%arg0: i32, %arg1: i32, %arg2: i32) -> (i32, i32, i32) {
    %c0_i32 = arith.constant 0 : i32
    %c0_i32_0 = arith.constant 0 : i32
    %c0_i32_1 = arith.constant 0 : i32
    return %arg0, %c0_i32, %c0_i32_0 : i32, i32, i32
  }
  func.func @transform_2(%arg0: i32, %arg1: i32, %arg2: i32) -> (i32, i32, i32) {
    %c0_i32 = arith.constant 0 : i32
    %c0_i32_0 = arith.constant 0 : i32
    %c0_i32_1 = arith.constant 0 : i32
    return %arg0, %c0_i32, %c0_i32_0 : i32, i32, i32
  }
  func.func @transform_3(%arg0: i32, %arg1: i32, %arg2: i32) -> (i32, i32) {
    %c0_i32 = arith.constant 0 : i32
    %c0_i32_0 = arith.constant 0 : i32
    return %c0_i32, %arg2 : i32, i32
  }
  func.func @transform_4(%arg0: i32, %arg1: i32, %arg2: i32) -> (i32, i32) {
    %c0_i32 = arith.constant 0 : i32
    %c0_i32_0 = arith.constant 0 : i32
    return %c0_i32, %arg2 : i32, i32
  }
  func.func @transform_5(%arg0: i32, %arg1: i32, %arg2: i32) -> (i32, i32, i32) {
    %c0_i32 = arith.constant 0 : i32
    return %arg0, %arg1, %arg2 : i32, i32, i32
  }
}

</mosaic_0001>

<llo_original>
// kernel: double_stream_block.10
$region0: #{double_stream_block.10}
  #allocation0 [shape = 'u32[]', space=smem, size = 0x4, offset = 0x4, fixed_abs, tag = 'smem constant byte address 0x4 - core index']
  #allocation1 [shape = 'u32[144,128]{1,0:T(1,128)}', space=vmem, size = 0x12000, scoped, tag = 'internal scratch']
  #allocation2 [shape = 'bf16[16,128]{1,0:T(8,128)(2,1)}', space=vmem, size = 0x1000, scoped, tag = 'scratch operand']
  %s0 = inlined_call_operand.vmem [shape: bf16[2,16,128], index: 0, kind: input, shape index: {}]
  %s1 = inlined_call_operand.vmem [shape: f32[2,1,128], index: 1, kind: input, shape index: {}]
  %s2 = inlined_call_operand.vmem [shape: f32[2,1,128], index: 2, kind: input, shape index: {}]
  %s3 = inlined_call_operand.vmem [shape: bf16[128,128], index: 3, kind: input, shape index: {}]
  %s4 = inlined_call_operand.vmem [shape: f32[1,128], index: 4, kind: input, shape index: {}]
  %s5 = inlined_call_operand.vmem [shape: bf16[2,16,128], index: 5, kind: output, shape index: {}]
  %s6 = sld [smem:[#allocation0]]
  $region57: #{double_stream_block.10} parent=0
    _
  %s8 = ssub.s32 1, %s6
  %s9 = scalar_select 0, %s8, %s6
  loop: start=0, step=1, limit=4
  $region2: #{double_stream_block.10} parent=0 // loop_pre_header
    _
  $region3: #{double_stream_block.10} parent=0 // loop_header
    %s11 = sphi 0, %s15
    %p12 = scmp.ge.s32.totalorder %s11, 4
    %s18 = sphi 0, %s37
    %s19 = sphi 0, %s33
    %s20 = sphi 0, %s29
    %s21 = sphi 0, %s18
    %s22 = sphi 0, %s19
    %s23 = sphi 0, %s20
    %s24 = sphi 0, %s21
    %s25 = sphi 0, %s22
    %s26 = sphi 0, %s23
    %s42 = sphi 0, %s44
    %s45 = sphi 0, %s42
    %s46 = sphi 0, %s45
    %s62 = sphi 0, %s46
    %s68 = sphi 0, %s70
    %s71 = sphi 0, %s68
    %s72 = sphi 0, %s71
    %s88 = sphi 0, %s72
    %s94 = sphi 0, %s96
    %s97 = sphi 0, %s94
    %s98 = sphi 0, %s97
    %s114 = sphi 0, %s98
    %s120 = sphi 0, %s122
    %s123 = sphi 0, %s120
    %s124 = sphi 0, %s123
    %s140 = sphi 0, %s124
    %s146 = sphi 0, %s148
    %s149 = sphi 0, %s146
    %s150 = sphi 0, %s149
    %s166 = sphi 0, %s150
    %s176 = sphi 0, %s178
    %s179 = sphi 0, %s176
    %s180 = sphi 0, %s179
    %s196 = sphi 0, %s180
  $region4: #{double_stream_block.10} parent=0 // loop_header_branch
    %14 = sbr.rel (%p12) target = $region8
  $region5: #{double_stream_block.10} parent=0 // loop_body
    %s16 = ssub.s32 %s11, 1
    %s17 = ssub.s32 %s11, 2
    %s27 = sadd.s32 1, %s20
    %p28 = scmp.ge.s32.totalorder %s27, 1
    %s29 = scalar_select %p28, 0, %s27
    %s30 = sadd.s32 1, %s19
    %s31 = scalar_select %p28, %s30, %s19
    %p32 = scmp.ge.s32.totalorder %s31, 1
    %s33 = scalar_select %p32, 0, %s31
    %s34 = sadd.s32 1, %s18
    %s35 = scalar_select %p32, %s34, %s18
    %p36 = scmp.ge.s32.totalorder %s35, 2
    %s37 = scalar_select %p36, 0, %s35
    %s38 = ssub.s32 %s18, %s37
    %s39 = ssub.s32 %s19, %s33
    %s40 = sor.u32 %s38, %s39
    %p41 = scmp.eq.s32.totalorder %s40, 0
    %s43 = sadd.s32 %s42, 1
    %s44 = scalar_select %p41, %s42, %s43
    %p47 = pneg %p41
    %p48 = scmp.eq.s32.totalorder %s11, 1
    %p49 = por %p47, %p48
    %p50 = scmp.ne.s32.totalorder %s42, %s45
    %p51 = scmp.eq.s32.totalorder %s11, 0
    %p52 = por %p50, %p51
    %p53 = scmp.ne.s32.totalorder %s42, %s45
    %p54 = scmp.eq.s32.totalorder %s16, 1
    %p55 = por %p53, %p54
    %p56 = scmp.ne.s32.totalorder %s45, %s46
    %p57 = scmp.eq.s32.totalorder %s16, 0
    %p58 = por %p56, %p57
    %p59 = scmp.ne.s32.totalorder %s45, %s46
    %p60 = scmp.eq.s32.totalorder %s17, 1
    %p61 = por %p59, %p60
    %p63 = scmp.ne.s32.totalorder %s46, %s62
    %p64 = scmp.eq.s32.totalorder %s17, 0
    %p65 = por %p63, %p64
    %s66 = ssub.s32 %s18, %s37
    %p67 = scmp.eq.s32.totalorder %s66, 0
    %s69 = sadd.s32 %s68, 1
    %s70 = scalar_select %p67, %s68, %s69
    %p73 = pneg %p67
    %p74 = scmp.eq.s32.totalorder %s11, 1
    %p75 = por %p73, %p74
    %p76 = scmp.ne.s32.totalorder %s68, %s71
    %p77 = scmp.eq.s32.totalorder %s11, 0
    %p78 = por %p76, %p77
    %p79 = scmp.ne.s32.totalorder %s68, %s71
    %p80 = scmp.eq.s32.totalorder %s16, 1
    %p81 = por %p79, %p80
    %p82 = scmp.ne.s32.totalorder %s71, %s72
    %p83 = scmp.eq.s32.totalorder %s16, 0
    %p84 = por %p82, %p83
    %p85 = scmp.ne.s32.totalorder %s71, %s72
    %p86 = scmp.eq.s32.totalorder %s17, 1
    %p87 = por %p85, %p86
    %p89 = scmp.ne.s32.totalorder %s72, %s88
    %p90 = scmp.eq.s32.totalorder %s17, 0
    %p91 = por %p89, %p90
    %s92 = ssub.s32 %s18, %s37
    %p93 = scmp.eq.s32.totalorder %s92, 0
    %s95 = sadd.s32 %s94, 1
    %s96 = scalar_select %p93, %s94, %s95
    %p99 = pneg %p93
    %p100 = scmp.eq.s32.totalorder %s11, 1
    %p101 = por %p99, %p100
    %p102 = scmp.ne.s32.totalorder %s94, %s97
    %p103 = scmp.eq.s32.totalorder %s11, 0
    %p104 = por %p102, %p103
    %p105 = scmp.ne.s32.totalorder %s94, %s97
    %p106 = scmp.eq.s32.totalorder %s16, 1
    %p107 = por %p105, %p106
    %p108 = scmp.ne.s32.totalorder %s97, %s98
    %p109 = scmp.eq.s32.totalorder %s16, 0
    %p110 = por %p108, %p109
    %p111 = scmp.ne.s32.totalorder %s97, %s98
    %p112 = scmp.eq.s32.totalorder %s17, 1
    %p113 = por %p111, %p112
    %p115 = scmp.ne.s32.totalorder %s98, %s114
    %p116 = scmp.eq.s32.totalorder %s17, 0
    %p117 = por %p115, %p116
    %s118 = ssub.s32 %s20, %s29
    %p119 = scmp.eq.s32.totalorder %s118, 0
    %s121 = sadd.s32 %s120, 1
    %s122 = scalar_select %p119, %s120, %s121
    %p125 = pneg %p119
    %p126 = scmp.eq.s32.totalorder %s11, 1
    %p127 = por %p125, %p126
    %p128 = scmp.ne.s32.totalorder %s120, %s123
    %p129 = scmp.eq.s32.totalorder %s11, 0
    %p130 = por %p128, %p129
    %p131 = scmp.ne.s32.totalorder %s120, %s123
    %p132 = scmp.eq.s32.totalorder %s16, 1
    %p133 = por %p131, %p132
    %p134 = scmp.ne.s32.totalorder %s123, %s124
    %p135 = scmp.eq.s32.totalorder %s16, 0
    %p136 = por %p134, %p135
    %p137 = scmp.ne.s32.totalorder %s123, %s124
    %p138 = scmp.eq.s32.totalorder %s17, 1
    %p139 = por %p137, %p138
    %p141 = scmp.ne.s32.totalorder %s124, %s140
    %p142 = scmp.eq.s32.totalorder %s17, 0
    %p143 = por %p141, %p142
    %s144 = ssub.s32 %s20, %s29
    %p145 = scmp.eq.s32.totalorder %s144, 0
    %s147 = sadd.s32 %s146, 1
    %s148 = scalar_select %p145, %s146, %s147
    %p151 = pneg %p145
    %p152 = scmp.eq.s32.totalorder %s11, 1
    %p153 = por %p151, %p152
    %p154 = scmp.ne.s32.totalorder %s146, %s149
    %p155 = scmp.eq.s32.totalorder %s11, 0
    %p156 = por %p154, %p155
    %p157 = scmp.ne.s32.totalorder %s146, %s149
    %p158 = scmp.eq.s32.totalorder %s16, 1
    %p159 = por %p157, %p158
    %p160 = scmp.ne.s32.totalorder %s149, %s150
    %p161 = scmp.eq.s32.totalorder %s16, 0
    %p162 = por %p160, %p161
    %p163 = scmp.ne.s32.totalorder %s149, %s150
    %p164 = scmp.eq.s32.totalorder %s17, 1
    %p165 = por %p163, %p164
    %p167 = scmp.ne.s32.totalorder %s150, %s166
    %p168 = scmp.eq.s32.totalorder %s17, 0
    %p169 = por %p167, %p168
    %s170 = ssub.s32 %s18, %s37
    %s171 = ssub.s32 %s19, %s33
    %s172 = sor.u32 %s170, %s171
    %s173 = ssub.s32 %s20, %s29
    %s174 = sor.u32 %s172, %s173
    %p175 = scmp.eq.s32.totalorder %s174, 0
    %s177 = sadd.s32 %s176, 1
    %s178 = scalar_select %p175, %s176, %s177
    %p181 = pneg %p175
    %p182 = scmp.eq.s32.totalorder %s11, 1
    %p183 = por %p181, %p182
    %p184 = scmp.ne.s32.totalorder %s176, %s179
    %p185 = scmp.eq.s32.totalorder %s11, 0
    %p186 = por %p184, %p185
    %p187 = scmp.ne.s32.totalorder %s176, %s179
    %p188 = scmp.eq.s32.totalorder %s16, 1
    %p189 = por %p187, %p188
    %p190 = scmp.ne.s32.totalorder %s179, %s180
    %p191 = scmp.eq.s32.totalorder %s16, 0
    %p192 = por %p190, %p191
    %p193 = scmp.ne.s32.totalorder %s179, %s180
    %p194 = scmp.eq.s32.totalorder %s17, 1
    %p195 = por %p193, %p194
    %p197 = scmp.ne.s32.totalorder %s180, %s196
    %p198 = scmp.eq.s32.totalorder %s17, 0
    %p199 = por %p197, %p198
    %p200 = scmp.le.s32.totalorder 1, %s11
    %p201 = scmp.lt.s32.totalorder %s11, 3
    %p202 = pnand %p200, %p201
    %p203 = pneg %p202
    // Predicated region
    $region9: #{double_stream_block.10} parent=5 // pred_check
      _
    $region10: #{double_stream_block.10} parent=5 // pred_check_branch
      %205 = sbr.rel (%p202) target = $region12
    $region11: #{double_stream_block.10} parent=5 // pred_region
      %s206 = ssub.s32 %s11, 1
      // Predicated region
      $region13: #{double_stream_block.10} parent=11 // pred_check
        %p207 = pneg %p136
      $region14: #{double_stream_block.10} parent=11 // pred_check_branch
        %209 = sbr.rel (%p207) target = $region16
      $region15: #{double_stream_block.10} parent=11 // pred_region
        %p210 = scmp.lt.s32.totalorder %s23, 0
        %s211 = scalar_select %p210, %s23, 0
        %s212 = smul.addr %s211, 4
        %s213 = scalar_lea.vmem %s3, %s212
      $region16: #{double_stream_block.10} parent=11 // pred_fallthru
        _
      // Predicated region
      $region17: #{double_stream_block.10} parent=11 // pred_check
        %p214 = pneg %p162
      $region18: #{double_stream_block.10} parent=11 // pred_check_branch
        %216 = sbr.rel (%p214) target = $region20
      $region19: #{double_stream_block.10} parent=11 // pred_region
        %p217 = scmp.lt.s32.totalorder %s23, 0
        %s218 = scalar_select %p217, %s23, 0
        %s219 = scalar_lea.vmem %s4, %s218
      $region20: #{double_stream_block.10} parent=11 // pred_fallthru
        _
    $region12: #{double_stream_block.10} parent=5 // pred_fallthru
      _
    %p220 = scmp.lt.s32.totalorder %s11, 2
    // Predicated region
    $region21: #{double_stream_block.10} parent=5 // pred_check
      %p221 = pneg %p220
    $region22: #{double_stream_block.10} parent=5 // pred_check_branch
      %223 = sbr.rel (%p221) target = $region24
    $region23: #{double_stream_block.10} parent=5 // pred_region
      // Predicated region
      $region25: #{double_stream_block.10} parent=23 // pred_check
        %p224 = pneg %p52
      $region26: #{double_stream_block.10} parent=23 // pred_check_branch
        %226 = sbr.rel (%p224) target = $region28
      $region27: #{double_stream_block.10} parent=23 // pred_region
        %s227 = smul.u32 2, %s19
        %p228 = scmp.lt.s32.totalorder %s18, 1
        %s229 = scalar_select %p228, %s18, 1
        %p230 = scmp.lt.s32.totalorder %s227, 1
        %s231 = scalar_select %p230, %s227, 1
        %s232 = smul.addr %s229, 2
        %s233 = sadd.s32 %s231, %s232
        %s234 = smul.addr %s233, 4
        %s235 = scalar_lea.vmem %s0, %s234
        %s236 = smul.u32 2, %s19
      $region28: #{double_stream_block.10} parent=23 // pred_fallthru
        _
      // Predicated region
      $region29: #{double_stream_block.10} parent=23 // pred_check
        %p237 = pneg %p78
      $region30: #{double_stream_block.10} parent=23 // pred_check_branch
        %239 = sbr.rel (%p237) target = $region32
      $region31: #{double_stream_block.10} parent=23 // pred_region
        %p240 = scmp.lt.s32.totalorder %s18, 1
        %s241 = scalar_select %p240, %s18, 1
        %s242 = scalar_lea.vmem %s1, %s241
      $region32: #{double_stream_block.10} parent=23 // pred_fallthru
        _
      // Predicated region
      $region33: #{double_stream_block.10} parent=23 // pred_check
        %p243 = pneg %p104
      $region34: #{double_stream_block.10} parent=23 // pred_check_branch
        %245 = sbr.rel (%p243) target = $region36
      $region35: #{double_stream_block.10} parent=23 // pred_region
        %p246 = scmp.lt.s32.totalorder %s18, 1
        %s247 = scalar_select %p246, %s18, 1
        %s248 = scalar_lea.vmem %s2, %s247
      $region36: #{double_stream_block.10} parent=23 // pred_fallthru
        _
    $region24: #{double_stream_block.10} parent=5 // pred_fallthru
      _
    %p249 = scmp.le.s32.totalorder 1, %s11
    %p250 = scmp.lt.s32.totalorder %s11, 3
    %p251 = pnand %p249, %p250
    %p252 = pneg %p251
    // Predicated region
    $region37: #{double_stream_block.10} parent=5 // pred_check
      _
    $region38: #{double_stream_block.10} parent=5 // pred_check_branch
      %254 = sbr.rel (%p251) target = $region40
    $region39: #{double_stream_block.10} parent=5 // pred_region
      %s255 = ssub.s32 %s11, 1
      %s256 = smul.u32 2, %s22
      %p257 = scmp.lt.s32.totalorder %s21, 1
      %s258 = scalar_select %p257, %s21, 1
      %p259 = scmp.lt.s32.totalorder %s256, 1
      %s260 = scalar_select %p259, %s256, 1
      %s261 = smul.addr %s258, 2
      %s262 = sadd.s32 %s260, %s261
      %s263 = smul.addr %s262, 4
      %s264 = scalar_lea.vmem %s0, %s263
      %p265 = pneg %p58
      %p266 = pneg %p55
      %p267 = scmp.lt.s32.totalorder %s21, 1
      %s268 = scalar_select %p267, %s21, 1
      %s269 = scalar_lea.vmem %s1, %s268
      %p270 = pneg %p84
      %p271 = pneg %p81
      %p272 = scmp.lt.s32.totalorder %s21, 1
      %s273 = scalar_select %p272, %s21, 1
      %s274 = scalar_lea.vmem %s2, %s273
      %p275 = pneg %p110
      %p276 = pneg %p107
      %p277 = scmp.lt.s32.totalorder %s23, 0
      %s278 = scalar_select %p277, %s23, 0
      %s279 = smul.addr %s278, 4
      %s280 = scalar_lea.vmem %s3, %s279
      %p281 = pneg %p136
      %p282 = pneg %p133
      %p283 = scmp.lt.s32.totalorder %s23, 0
      %s284 = scalar_select %p283, %s23, 0
      %s285 = scalar_lea.vmem %s4, %s284
      %p286 = pneg %p162
      %p287 = pneg %p159
      %p288 = pneg %p192
      %p289 = pneg %p189
      %s290 = smul.u32 2, %s22
      %p291 = scmp.lt.s32.totalorder %s21, 1
      %s292 = scalar_select %p291, %s21, 1
      %p293 = scmp.lt.s32.totalorder %s290, 1
      %s294 = scalar_select %p293, %s290, 1
      %p295 = scmp.lt.s32.totalorder %s23, 0
      %s296 = scalar_select %p295, %s23, 0
      %s297 = sadd.s32 %s296, %s294
      %s298 = smul.addr %s292, 2
      %s299 = sadd.s32 %s297, %s298
      %s300 = smul.addr %s299, 4
      %s301 = scalar_lea.vmem %s5, %s300
      %s302 = smul.u32 2, %s22
      %p303 = scmp.lt.s32.totalorder %s21, 1
      %s304 = scalar_select %p303, %s21, 1
      %p305 = scmp.lt.s32.totalorder %s302, 1
      %s306 = scalar_select %p305, %s302, 1
      %s307 = smul.addr %s304, 2
      %s308 = sadd.s32 %s306, %s307
      %s309 = smul.addr %s308, 4
      %s310 = scalar_lea.vmem %s0, %s309
      %s311 = smul.u32 2, %s22
      %p312 = scmp.lt.s32.totalorder %s21, 1
      %s313 = scalar_select %p312, %s21, 1
      %s314 = scalar_lea.vmem %s1, %s313
      %p315 = scmp.lt.s32.totalorder %s21, 1
      %s316 = scalar_select %p315, %s21, 1
      %s317 = scalar_lea.vmem %s2, %s316
      %p318 = scmp.lt.s32.totalorder %s23, 0
      %s319 = scalar_select %p318, %s23, 0
      %s320 = smul.addr %s319, 4
      %s321 = scalar_lea.vmem %s3, %s320
      %p322 = scmp.lt.s32.totalorder %s23, 0
      %s323 = scalar_select %p322, %s23, 0
      %s324 = scalar_lea.vmem %s4, %s323
      %s325 = smul.u32 2, %s22
      %p326 = scmp.lt.s32.totalorder %s21, 1
      %s327 = scalar_select %p326, %s21, 1
      %p328 = scmp.lt.s32.totalorder %s325, 1
      %s329 = scalar_select %p328, %s325, 1
      %p330 = scmp.lt.s32.totalorder %s23, 0
      %s331 = scalar_select %p330, %s23, 0
      %s332 = sadd.s32 %s331, %s329
      %s333 = smul.addr %s327, 2
      %s334 = sadd.s32 %s332, %s333
      %s335 = smul.addr %s334, 4
      %s336 = scalar_lea.vmem %s5, %s335
      %s337 = smul.u32 2, %s22
      %p339 = scmp.eq.s32.totalorder %s23, 0
      // Predicated region
      $region41: #{double_stream_block.10} parent=39 // pred_check
        %p340 = pneg %p339
      $region42: #{double_stream_block.10} parent=39 // pred_check_branch
        %342 = sbr.rel (%p340) target = $region44
      $region43: #{double_stream_block.10} parent=39 // pred_region
        %v343 = vld [vmem:[%s310] sm:$0xf]
        %v344 = vld [vmem:[%s310 + $0x4] sm:$0xf]
        %v345 = vunpack.c.l.bf16 %v343
        %v346 = vunpack.c.l.bf16 %v344
        %v347 = vlaneseq
        %v348 = vand.u32 %v347, 127
        %vm349 = vcmp.lt.s32.totalorder %v348, 32
        %350 = vadd.xlane.f32.xlu0 %v345
        %v351 = vpop.xlane.xlu0 %350
        %352 = vadd.xlane.f32.xlu0 %v346
        %v353 = vpop.xlane.xlu0 %352
        %v354 = vrcp.pop 32.0
        %v355 = vmul.f32 %v351, %v354
        %v356 = vmul.f32 %v353, %v354
        %v357 = vsub.f32 %v345, %v355
        %v358 = vsub.f32 %v346, %v356
        %v359 = vsel %vm349, %v357, 0.0
        %v360 = vsel %vm349, %v358, 0.0
        %v361 = vmul.f32 %v359, %v359
        %v362 = vmul.f32 %v360, %v360
        %363 = vadd.xlane.f32.xlu0 %v361
        %v364 = vpop.xlane.xlu0 %363
        %365 = vadd.xlane.f32.xlu0 %v362
        %v366 = vpop.xlane.xlu0 %365
        %v367 = vmul.f32 %v364, %v354
        %v368 = vmul.f32 %v366, %v354
        %v369 = vadd.f32 %v367, 1e-06
        %v370 = vadd.f32 %v368, 1e-06
        %v371 = vrsqrt.pop %v369
        %v372 = vrsqrt.pop %v370
        %v373 = vmul.f32 %v359, %v371
        %v374 = vmul.f32 %v360, %v372
        %v375 = vld [vmem:[%s314] sm:$0x1]
        %v376 = vld [vmem:[%s317] sm:$0x1]
        %v377 = vadd.f32 %v375, 1.0
        %v379 = vlaneseq
        %v380 = vshrl.u32 %v379, 7
        %v381 = vsub.s32 0, %v380
        %v382 = vrot.slane %v377, %v381
        %v384 = vmul.f32 %v382, %v373
        %v385 = vmul.f32 %v382, %v374
        %v387 = vlaneseq
        %v388 = vshrl.u32 %v387, 7
        %v389 = vsub.s32 0, %v388
        %v390 = vrot.slane %v376, %v389
        %v392 = vadd.f32 %v384, %v390
        %v393 = vadd.f32 %v385, %v390
        %v394 = vpack.c.bf16 %v393, %v392
        %v396 = vunpack.c.l.b16 %v394
        %v397 = vunpack.c.h.b16 %v394
        %v398 = vpack.c.b16 %v396, %v396
        %v399 = vpack.c.b16 %v397, %v397
        %402 = vst [vmem:[#allocation2] sm:$0xf] %v398
        %403 = vst [vmem:[#allocation2 + $0x4] sm:$0xf] %v399
      $region44: #{double_stream_block.10} parent=39 // pred_fallthru
        _
      %v404 = vld [vmem:[#allocation2] sm:$0xf]
      %v405 = vld [vmem:[#allocation2 + $0x4] sm:$0xf]
      %v406 = vld [vmem:[%s321] sm:$0xf]
      %v407 = vld [vmem:[%s321 + $0x4] sm:$0xf]
      %v408 = vld [vmem:[%s321 + $0x8] sm:$0xf]
      %v409 = vld [vmem:[%s321 + $0xc] sm:$0xf]
      %v410 = vld [vmem:[%s321 + $0x10] sm:$0xf]
      %v411 = vld [vmem:[%s321 + $0x14] sm:$0xf]
      %v412 = vld [vmem:[%s321 + $0x18] sm:$0xf]
      %v413 = vld [vmem:[%s321 + $0x1c] sm:$0xf]
      %v414 = vld [vmem:[%s321 + $0x20] sm:$0xf]
      %v415 = vld [vmem:[%s321 + $0x24] sm:$0xf]
      %v416 = vld [vmem:[%s321 + $0x28] sm:$0xf]
      %v417 = vld [vmem:[%s321 + $0x2c] sm:$0xf]
      %v418 = vld [vmem:[%s321 + $0x30] sm:$0xf]
      %v419 = vld [vmem:[%s321 + $0x34] sm:$0xf]
      %v420 = vld [vmem:[%s321 + $0x38] sm:$0xf]
      %v421 = vld [vmem:[%s321 + $0x3c] sm:$0xf]
      %v422 = vld [vmem:[%s324] sm:$0x1]
      %v424 = vlaneseq
      %v425 = vshrl.u32 %v424, 7
      %v426 = vsub.s32 0, %v425
      %v427 = vrot.slane %v422, %v426
      %v431 = vunpack.c.l.b16 %v404
      %v432 = vunpack.c.l.b16 %v405
      %v433 = vpack.c.b16 %v432, %v431
      %v451 = vunpack.c.l.b16 %v406
      %v452 = vunpack.c.l.b16 %v407
      %v453 = vunpack.c.l.b16 %v408
      %v454 = vunpack.c.l.b16 %v409
      %v455 = vunpack.c.l.b16 %v410
      %v456 = vunpack.c.l.b16 %v411
      %v457 = vunpack.c.l.b16 %v412
      %v458 = vunpack.c.l.b16 %v413
      %v459 = vunpack.c.l.b16 %v414
      %v460 = vunpack.c.l.b16 %v415
      %v461 = vunpack.c.l.b16 %v416
      %v462 = vunpack.c.l.b16 %v417
      %v463 = vunpack.c.l.b16 %v418
      %v464 = vunpack.c.l.b16 %v419
      %v465 = vunpack.c.l.b16 %v420
      %v466 = vunpack.c.l.b16 %v421
      %v467 = vpack.c.b16 %v452, %v451
      %v468 = vpack.c.b16 %v454, %v453
      %v469 = vpack.c.b16 %v456, %v455
      %v470 = vpack.c.b16 %v458, %v457
      %v471 = vpack.c.b16 %v460, %v459
      %v472 = vpack.c.b16 %v462, %v461
      %v473 = vpack.c.b16 %v464, %v463
      %v474 = vpack.c.b16 %v466, %v465
      %483 = vmatprep.subr.bf16.mxu0 0
      %484 = vmatpush1.bf16.msra.mxu0 %v474
      %485 = vmatprep.subr.bf16.mxu0 0
      %486 = vmatpush1.bf16.msra.mxu0 %v473
      %487 = vmatprep.subr.bf16.mxu0 0
      %488 = vmatpush1.bf16.msra.mxu0 %v472
      %489 = vmatprep.subr.bf16.mxu0 0
      %490 = vmatpush1.bf16.msra.mxu0 %v471
      %491 = vmatprep.subr.bf16.mxu0 0
      %492 = vmatpush1.bf16.msra.mxu0 %v470
      %493 = vmatprep.subr.bf16.mxu0 0
      %494 = vmatpush1.bf16.msra.mxu0 %v469
      %495 = vmatprep.subr.bf16.mxu0 0
      %496 = vmatpush1.bf16.msra.mxu0 %v468
      %497 = vmatprep.subr.bf16.mxu0 0
      %498 = vmatpush1.bf16.msra.mxu0 %v467
      %499 = vmatprep.subr.bf16.mxu0 0
      %500 = vmatpush2.bf16.msra.mxu0 0
      %501 = vmatprep.subr.bf16.mxu0 0
      %502 = vmatpush2.bf16.msra.mxu0 0
      %503 = vmatprep.subr.bf16.mxu0 0
      %504 = vmatpush2.bf16.msra.mxu0 0
      %505 = vmatprep.subr.bf16.mxu0 0
      %506 = vmatpush2.bf16.msra.mxu0 0
      %507 = vmatprep.subr.bf16.mxu0 0
      %508 = vmatpush2.bf16.msra.mxu0 0
      %509 = vmatprep.subr.bf16.mxu0 0
      %510 = vmatpush2.bf16.msra.mxu0 0
      %511 = vmatprep.subr.bf16.mxu0 0
      %512 = vmatpush2.bf16.msra.mxu0 0
      %513 = vmatprep.subr.bf16.mxu0 0
      %514 = vmatpush2.bf16.msra.mxu0 0
      %515 = vmatprep.mubr.bf16.mxu0 0
      %516 = vmatmul.mubr.bf16.gmra.mxu0 %v433
      %v517 = vpop.f32.mrf.mxu0
      %v518 = vadd.f32 %v427, %v517
      %v519 = vpop.f32.mrf.mxu0
      %v520 = vpop.f32.mrf.mxu0
      %v521 = vadd.f32 %v427, %v520
      %v522 = vpop.f32.mrf.mxu0
      %523 = vdwg.mxu0
      %v524 = vpack.c.bf16 %v521, %v518
      %v526 = vunpack.c.l.b16 %v524
      %v527 = vunpack.c.h.b16 %v524
      %v528 = vpack.c.b16 %v526, %v526
      %v529 = vpack.c.b16 %v527, %v527
      %532 = vst [vmem:[%s336] sm:$0xf] %v528
      %533 = vst [vmem:[%s336 + $0x4] sm:$0xf] %v529
      %s534 = smul.u32 2, %s22
      %p535 = scmp.lt.s32.totalorder %s21, 1
      %s536 = scalar_select %p535, %s21, 1
      %p537 = scmp.lt.s32.totalorder %s534, 1
      %s538 = scalar_select %p537, %s534, 1
      %p539 = scmp.lt.s32.totalorder %s23, 0
      %s540 = scalar_select %p539, %s23, 0
      %s541 = sadd.s32 %s540, %s538
      %s542 = smul.addr %s536, 2
      %s543 = sadd.s32 %s541, %s542
      %s544 = smul.addr %s543, 4
      %s545 = scalar_lea.vmem %s5, %s544
      // Predicated region
      $region45: #{double_stream_block.10} parent=39 // pred_check
        %p546 = pneg %p189
      $region46: #{double_stream_block.10} parent=39 // pred_check_branch
        %548 = sbr.rel (%p546) target = $region48
      $region47: #{double_stream_block.10} parent=39 // pred_region
        %s549 = smul.u32 2, %s22
      $region48: #{double_stream_block.10} parent=39 // pred_fallthru
        _
    $region40: #{double_stream_block.10} parent=5 // pred_fallthru
      _
    %p550 = scmp.le.s32.totalorder 2, %s11
    // Predicated region
    $region49: #{double_stream_block.10} parent=5 // pred_check
      %p551 = pneg %p550
    $region50: #{double_stream_block.10} parent=5 // pred_check_branch
      %553 = sbr.rel (%p551) target = $region52
    $region51: #{double_stream_block.10} parent=5 // pred_region
      %s554 = ssub.s32 %s11, 2
      // Predicated region
      $region53: #{double_stream_block.10} parent=51 // pred_check
        %p555 = pneg %p195
      $region54: #{double_stream_block.10} parent=51 // pred_check_branch
        %557 = sbr.rel (%p555) target = $region56
      $region55: #{double_stream_block.10} parent=51 // pred_region
        %s558 = smul.u32 2, %s25
        %p559 = scmp.lt.s32.totalorder %s24, 1
        %s560 = scalar_select %p559, %s24, 1
        %p561 = scmp.lt.s32.totalorder %s558, 1
        %s562 = scalar_select %p561, %s558, 1
        %p563 = scmp.lt.s32.totalorder %s26, 0
        %s564 = scalar_select %p563, %s26, 0
        %s565 = sadd.s32 %s564, %s562
        %s566 = smul.addr %s560, 2
        %s567 = sadd.s32 %s565, %s566
        %s568 = smul.addr %s567, 4
        %s569 = scalar_lea.vmem %s5, %s568
      $region56: #{double_stream_block.10} parent=51 // pred_fallthru
        _
    $region52: #{double_stream_block.10} parent=5 // pred_fallthru
      _
  $region6: #{double_stream_block.10} parent=0 // loop_footer
    %s15 = sadd.s32 1, %s11
  $region7: #{double_stream_block.10} parent=0 // loop_footer_branch
    %10 = sbr.rel target = $region3
  $region8: #{double_stream_block.10} parent=0 // loop_exit
    _

// kernel: double_stream_block.15
$region0: #{double_stream_block.15}
  #allocation0 [shape = 'u32[]', space=smem, size = 0x4, offset = 0x4, fixed_abs, tag = 'smem constant byte address 0x4 - core index']
  #allocation1 [shape = 'u32[144,128]{1,0:T(1,128)}', space=vmem, size = 0x12000, scoped, tag = 'internal scratch']
  #allocation2 [shape = 'f32[16,128]{1,0:T(8,128)}', space=vmem, size = 0x2000, scoped, tag = 'scratch operand']
  %s0 = inlined_call_operand.vmem [shape: bf16[2,16,128], index: 0, kind: input, shape index: {}]
  %s1 = inlined_call_operand.vmem [shape: bf16[128,128], index: 1, kind: input, shape index: {}]
  %s2 = inlined_call_operand.vmem [shape: f32[1,128], index: 2, kind: input, shape index: {}]
  %s3 = inlined_call_operand.vmem [shape: bf16[2,16,128], index: 3, kind: input, shape index: {}]
  %s4 = inlined_call_operand.vmem [shape: f32[2,1,128], index: 4, kind: input, shape index: {}]
  %s5 = inlined_call_operand.vmem [shape: bf16[2,16,128], index: 5, kind: output, shape index: {}]
  %s6 = sld [smem:[#allocation0]]
  $region61: #{double_stream_block.15} parent=0
    _
  %s8 = ssub.s32 1, %s6
  %s9 = scalar_select 0, %s8, %s6
  loop: start=0, step=1, limit=4
  $region2: #{double_stream_block.15} parent=0 // loop_pre_header
    _
  $region3: #{double_stream_block.15} parent=0 // loop_header
    %s11 = sphi 0, %s15
    %p12 = scmp.ge.s32.totalorder %s11, 4
    %s18 = sphi 0, %s44
    %s19 = sphi 0, %s40
    %s20 = sphi 0, %s36
    %s21 = sphi 0, %s32
    %s22 = sphi 0, %s18
    %s23 = sphi 0, %s19
    %s24 = sphi 0, %s20
    %s25 = sphi 0, %s21
    %s26 = sphi 0, %s22
    %s27 = sphi 0, %s23
    %s28 = sphi 0, %s24
    %s29 = sphi 0, %s25
    %s51 = sphi 0, %s53
    %s54 = sphi 0, %s51
    %s55 = sphi 0, %s54
    %s71 = sphi 0, %s55
    %s79 = sphi 0, %s81
    %s82 = sphi 0, %s79
    %s83 = sphi 0, %s82
    %s99 = sphi 0, %s83
    %s105 = sphi 0, %s107
    %s108 = sphi 0, %s105
    %s109 = sphi 0, %s108
    %s125 = sphi 0, %s109
    %s135 = sphi 0, %s137
    %s138 = sphi 0, %s135
    %s139 = sphi 0, %s138
    %s155 = sphi 0, %s139
    %s163 = sphi 0, %s165
    %s166 = sphi 0, %s163
    %s167 = sphi 0, %s166
    %s183 = sphi 0, %s167
    %s193 = sphi 0, %s195
    %s196 = sphi 0, %s193
    %s197 = sphi 0, %s196
    %s213 = sphi 0, %s197
  $region4: #{double_stream_block.15} parent=0 // loop_header_branch
    %14 = sbr.rel (%p12) target = $region8
  $region5: #{double_stream_block.15} parent=0 // loop_body
    %s16 = ssub.s32 %s11, 1
    %s17 = ssub.s32 %s11, 2
    %s30 = sadd.s32 1, %s21
    %p31 = scmp.ge.s32.totalorder %s30, 1
    %s32 = scalar_select %p31, 0, %s30
    %s33 = sadd.s32 1, %s20
    %s34 = scalar_select %p31, %s33, %s20
    %p35 = scmp.ge.s32.totalorder %s34, 1
    %s36 = scalar_select %p35, 0, %s34
    %s37 = sadd.s32 1, %s19
    %s38 = scalar_select %p35, %s37, %s19
    %p39 = scmp.ge.s32.totalorder %s38, 1
    %s40 = scalar_select %p39, 0, %s38
    %s41 = sadd.s32 1, %s18
    %s42 = scalar_select %p39, %s41, %s18
    %p43 = scmp.ge.s32.totalorder %s42, 2
    %s44 = scalar_select %p43, 0, %s42
    %s45 = ssub.s32 %s18, %s44
    %s46 = ssub.s32 %s19, %s40
    %s47 = sor.u32 %s45, %s46
    %s48 = ssub.s32 %s21, %s32
    %s49 = sor.u32 %s47, %s48
    %p50 = scmp.eq.s32.totalorder %s49, 0
    %s52 = sadd.s32 %s51, 1
    %s53 = scalar_select %p50, %s51, %s52
    %p56 = pneg %p50
    %p57 = scmp.eq.s32.totalorder %s11, 1
    %p58 = por %p56, %p57
    %p59 = scmp.ne.s32.totalorder %s51, %s54
    %p60 = scmp.eq.s32.totalorder %s11, 0
    %p61 = por %p59, %p60
    %p62 = scmp.ne.s32.totalorder %s51, %s54
    %p63 = scmp.eq.s32.totalorder %s16, 1
    %p64 = por %p62, %p63
    %p65 = scmp.ne.s32.totalorder %s54, %s55
    %p66 = scmp.eq.s32.totalorder %s16, 0
    %p67 = por %p65, %p66
    %p68 = scmp.ne.s32.totalorder %s54, %s55
    %p69 = scmp.eq.s32.totalorder %s17, 1
    %p70 = por %p68, %p69
    %p72 = scmp.ne.s32.totalorder %s55, %s71
    %p73 = scmp.eq.s32.totalorder %s17, 0
    %p74 = por %p72, %p73
    %s75 = ssub.s32 %s21, %s32
    %s76 = ssub.s32 %s20, %s36
    %s77 = sor.u32 %s75, %s76
    %p78 = scmp.eq.s32.totalorder %s77, 0
    %s80 = sadd.s32 %s79, 1
    %s81 = scalar_select %p78, %s79, %s80
    %p84 = pneg %p78
    %p85 = scmp.eq.s32.totalorder %s11, 1
    %p86 = por %p84, %p85
    %p87 = scmp.ne.s32.totalorder %s79, %s82
    %p88 = scmp.eq.s32.totalorder %s11, 0
    %p89 = por %p87, %p88
    %p90 = scmp.ne.s32.totalorder %s79, %s82
    %p91 = scmp.eq.s32.totalorder %s16, 1
    %p92 = por %p90, %p91
    %p93 = scmp.ne.s32.totalorder %s82, %s83
    %p94 = scmp.eq.s32.totalorder %s16, 0
    %p95 = por %p93, %p94
    %p96 = scmp.ne.s32.totalorder %s82, %s83
    %p97 = scmp.eq.s32.totalorder %s17, 1
    %p98 = por %p96, %p97
    %p100 = scmp.ne.s32.totalorder %s83, %s99
    %p101 = scmp.eq.s32.totalorder %s17, 0
    %p102 = por %p100, %p101
    %s103 = ssub.s32 %s20, %s36
    %p104 = scmp.eq.s32.totalorder %s103, 0
    %s106 = sadd.s32 %s105, 1
    %s107 = scalar_select %p104, %s105, %s106
    %p110 = pneg %p104
    %p111 = scmp.eq.s32.totalorder %s11, 1
    %p112 = por %p110, %p111
    %p113 = scmp.ne.s32.totalorder %s105, %s108
    %p114 = scmp.eq.s32.totalorder %s11, 0
    %p115 = por %p113, %p114
    %p116 = scmp.ne.s32.totalorder %s105, %s108
    %p117 = scmp.eq.s32.totalorder %s16, 1
    %p118 = por %p116, %p117
    %p119 = scmp.ne.s32.totalorder %s108, %s109
    %p120 = scmp.eq.s32.totalorder %s16, 0
    %p121 = por %p119, %p120
    %p122 = scmp.ne.s32.totalorder %s108, %s109
    %p123 = scmp.eq.s32.totalorder %s17, 1
    %p124 = por %p122, %p123
    %p126 = scmp.ne.s32.totalorder %s109, %s125
    %p127 = scmp.eq.s32.totalorder %s17, 0
    %p128 = por %p126, %p127
    %s129 = ssub.s32 %s18, %s44
    %s130 = ssub.s32 %s19, %s40
    %s131 = sor.u32 %s129, %s130
    %s132 = ssub.s32 %s20, %s36
    %s133 = sor.u32 %s131, %s132
    %p134 = scmp.eq.s32.totalorder %s133, 0
    %s136 = sadd.s32 %s135, 1
    %s137 = scalar_select %p134, %s135, %s136
    %p140 = pneg %p134
    %p141 = scmp.eq.s32.totalorder %s11, 1
    %p142 = por %p140, %p141
    %p143 = scmp.ne.s32.totalorder %s135, %s138
    %p144 = scmp.eq.s32.totalorder %s11, 0
    %p145 = por %p143, %p144
    %p146 = scmp.ne.s32.totalorder %s135, %s138
    %p147 = scmp.eq.s32.totalorder %s16, 1
    %p148 = por %p146, %p147
    %p149 = scmp.ne.s32.totalorder %s138, %s139
    %p150 = scmp.eq.s32.totalorder %s16, 0
    %p151 = por %p149, %p150
    %p152 = scmp.ne.s32.totalorder %s138, %s139
    %p153 = scmp.eq.s32.totalorder %s17, 1
    %p154 = por %p152, %p153
    %p156 = scmp.ne.s32.totalorder %s139, %s155
    %p157 = scmp.eq.s32.totalorder %s17, 0
    %p158 = por %p156, %p157
    %s159 = ssub.s32 %s18, %s44
    %s160 = ssub.s32 %s20, %s36
    %s161 = sor.u32 %s159, %s160
    %p162 = scmp.eq.s32.totalorder %s161, 0
    %s164 = sadd.s32 %s163, 1
    %s165 = scalar_select %p162, %s163, %s164
    %p168 = pneg %p162
    %p169 = scmp.eq.s32.totalorder %s11, 1
    %p170 = por %p168, %p169
    %p171 = scmp.ne.s32.totalorder %s163, %s166
    %p172 = scmp.eq.s32.totalorder %s11, 0
    %p173 = por %p171, %p172
    %p174 = scmp.ne.s32.totalorder %s163, %s166
    %p175 = scmp.eq.s32.totalorder %s16, 1
    %p176 = por %p174, %p175
    %p177 = scmp.ne.s32.totalorder %s166, %s167
    %p178 = scmp.eq.s32.totalorder %s16, 0
    %p179 = por %p177, %p178
    %p180 = scmp.ne.s32.totalorder %s166, %s167
    %p181 = scmp.eq.s32.totalorder %s17, 1
    %p182 = por %p180, %p181
    %p184 = scmp.ne.s32.totalorder %s167, %s183
    %p185 = scmp.eq.s32.totalorder %s17, 0
    %p186 = por %p184, %p185
    %s187 = ssub.s32 %s18, %s44
    %s188 = ssub.s32 %s19, %s40
    %s189 = sor.u32 %s187, %s188
    %s190 = ssub.s32 %s20, %s36
    %s191 = sor.u32 %s189, %s190
    %p192 = scmp.eq.s32.totalorder %s191, 0
    %s194 = sadd.s32 %s193, 1
    %s195 = scalar_select %p192, %s193, %s194
    %p198 = pneg %p192
    %p199 = scmp.eq.s32.totalorder %s11, 1
    %p200 = por %p198, %p199
    %p201 = scmp.ne.s32.totalorder %s193, %s196
    %p202 = scmp.eq.s32.totalorder %s11, 0
    %p203 = por %p201, %p202
    %p204 = scmp.ne.s32.totalorder %s193, %s196
    %p205 = scmp.eq.s32.totalorder %s16, 1
    %p206 = por %p204, %p205
    %p207 = scmp.ne.s32.totalorder %s196, %s197
    %p208 = scmp.eq.s32.totalorder %s16, 0
    %p209 = por %p207, %p208
    %p210 = scmp.ne.s32.totalorder %s196, %s197
    %p211 = scmp.eq.s32.totalorder %s17, 1
    %p212 = por %p210, %p211
    %p214 = scmp.ne.s32.totalorder %s197, %s213
    %p215 = scmp.eq.s32.totalorder %s17, 0
    %p216 = por %p214, %p215
    %p217 = scmp.le.s32.totalorder 1, %s11
    %p218 = scmp.lt.s32.totalorder %s11, 3
    %p219 = pnand %p217, %p218
    %p220 = pneg %p219
    // Predicated region
    $region9: #{double_stream_block.15} parent=5 // pred_check
      _
    $region10: #{double_stream_block.15} parent=5 // pred_check_branch
      %222 = sbr.rel (%p219) target = $region12
    $region11: #{double_stream_block.15} parent=5 // pred_region
      %s223 = ssub.s32 %s11, 1
      // Predicated region
      $region13: #{double_stream_block.15} parent=11 // pred_check
        %p224 = pneg %p95
      $region14: #{double_stream_block.15} parent=11 // pred_check_branch
        %226 = sbr.rel (%p224) target = $region16
      $region15: #{double_stream_block.15} parent=11 // pred_region
        %s227 = smul.u32 16, %s25
        %p228 = scmp.lt.s32.totalorder %s227, 15
        %s229 = scalar_select %p228, %s227, 15
        %p230 = scmp.lt.s32.totalorder %s24, 0
        %s231 = scalar_select %p230, %s24, 0
        %s232 = sadd.s32 %s231, %s229
        %s233 = smul.addr %s232, 4
        %s234 = scalar_lea.vmem %s1, %s233
        %s235 = smul.u32 16, %s25
      $region16: #{double_stream_block.15} parent=11 // pred_fallthru
        _
      // Predicated region
      $region17: #{double_stream_block.15} parent=11 // pred_check
        %p236 = pneg %p121
      $region18: #{double_stream_block.15} parent=11 // pred_check_branch
        %238 = sbr.rel (%p236) target = $region20
      $region19: #{double_stream_block.15} parent=11 // pred_region
        %p239 = scmp.lt.s32.totalorder %s24, 0
        %s240 = scalar_select %p239, %s24, 0
        %s241 = scalar_lea.vmem %s2, %s240
      $region20: #{double_stream_block.15} parent=11 // pred_fallthru
        _
    $region12: #{double_stream_block.15} parent=5 // pred_fallthru
      _
    %p242 = scmp.lt.s32.totalorder %s11, 2
    // Predicated region
    $region21: #{double_stream_block.15} parent=5 // pred_check
      %p243 = pneg %p242
    $region22: #{double_stream_block.15} parent=5 // pred_check_branch
      %245 = sbr.rel (%p243) target = $region24
    $region23: #{double_stream_block.15} parent=5 // pred_region
      // Predicated region
      $region25: #{double_stream_block.15} parent=23 // pred_check
        %p246 = pneg %p61
      $region26: #{double_stream_block.15} parent=23 // pred_check_branch
        %248 = sbr.rel (%p246) target = $region28
      $region27: #{double_stream_block.15} parent=23 // pred_region
        %s249 = smul.u32 2, %s19
        %p250 = scmp.lt.s32.totalorder %s18, 1
        %s251 = scalar_select %p250, %s18, 1
        %p252 = scmp.lt.s32.totalorder %s249, 1
        %s253 = scalar_select %p252, %s249, 1
        %p254 = scmp.lt.s32.totalorder %s21, 0
        %s255 = scalar_select %p254, %s21, 0
        %s256 = sadd.s32 %s255, %s253
        %s257 = smul.addr %s251, 2
        %s258 = sadd.s32 %s256, %s257
        %s259 = smul.addr %s258, 4
        %s260 = scalar_lea.vmem %s0, %s259
        %s261 = smul.u32 2, %s19
      $region28: #{double_stream_block.15} parent=23 // pred_fallthru
        _
      // Predicated region
      $region29: #{double_stream_block.15} parent=23 // pred_check
        %p262 = pneg %p145
      $region30: #{double_stream_block.15} parent=23 // pred_check_branch
        %264 = sbr.rel (%p262) target = $region32
      $region31: #{double_stream_block.15} parent=23 // pred_region
        %s265 = smul.u32 2, %s19
        %p266 = scmp.lt.s32.totalorder %s18, 1
        %s267 = scalar_select %p266, %s18, 1
        %p268 = scmp.lt.s32.totalorder %s265, 1
        %s269 = scalar_select %p268, %s265, 1
        %p270 = scmp.lt.s32.totalorder %s20, 0
        %s271 = scalar_select %p270, %s20, 0
        %s272 = sadd.s32 %s271, %s269
        %s273 = smul.addr %s267, 2
        %s274 = sadd.s32 %s272, %s273
        %s275 = smul.addr %s274, 4
        %s276 = scalar_lea.vmem %s3, %s275
        %s277 = smul.u32 2, %s19
      $region32: #{double_stream_block.15} parent=23 // pred_fallthru
        _
      // Predicated region
      $region33: #{double_stream_block.15} parent=23 // pred_check
        %p278 = pneg %p173
      $region34: #{double_stream_block.15} parent=23 // pred_check_branch
        %280 = sbr.rel (%p278) target = $region36
      $region35: #{double_stream_block.15} parent=23 // pred_region
        %p281 = scmp.lt.s32.totalorder %s18, 1
        %s282 = scalar_select %p281, %s18, 1
        %p283 = scmp.lt.s32.totalorder %s20, 0
        %s284 = scalar_select %p283, %s20, 0
        %s285 = sadd.s32 %s284, %s282
        %s286 = scalar_lea.vmem %s4, %s285
      $region36: #{double_stream_block.15} parent=23 // pred_fallthru
        _
    $region24: #{double_stream_block.15} parent=5 // pred_fallthru
      _
    %p287 = scmp.le.s32.totalorder 1, %s11
    %p288 = scmp.lt.s32.totalorder %s11, 3
    %p289 = pnand %p287, %p288
    %p290 = pneg %p289
    // Predicated region
    $region37: #{double_stream_block.15} parent=5 // pred_check
      _
    $region38: #{double_stream_block.15} parent=5 // pred_check_branch
      %292 = sbr.rel (%p289) target = $region40
    $region39: #{double_stream_block.15} parent=5 // pred_region
      %s293 = ssub.s32 %s11, 1
      %s294 = smul.u32 2, %s23
      %p295 = scmp.lt.s32.totalorder %s22, 1
      %s296 = scalar_select %p295, %s22, 1
      %p297 = scmp.lt.s32.totalorder %s294, 1
      %s298 = scalar_select %p297, %s294, 1
      %p299 = scmp.lt.s32.totalorder %s25, 0
      %s300 = scalar_select %p299, %s25, 0
      %s301 = sadd.s32 %s300, %s298
      %s302 = smul.addr %s296, 2
      %s303 = sadd.s32 %s301, %s302
      %s304 = smul.addr %s303, 4
      %s305 = scalar_lea.vmem %s0, %s304
      %p306 = pneg %p67
      %p307 = pneg %p64
      %s308 = smul.u32 16, %s25
      %p309 = scmp.lt.s32.totalorder %s308, 15
      %s310 = scalar_select %p309, %s308, 15
      %p311 = scmp.lt.s32.totalorder %s24, 0
      %s312 = scalar_select %p311, %s24, 0
      %s313 = sadd.s32 %s312, %s310
      %s314 = smul.addr %s313, 4
      %s315 = scalar_lea.vmem %s1, %s314
      %p316 = pneg %p95
      %p317 = pneg %p92
      %p318 = scmp.lt.s32.totalorder %s24, 0
      %s319 = scalar_select %p318, %s24, 0
      %s320 = scalar_lea.vmem %s2, %s319
      %p321 = pneg %p121
      %p322 = pneg %p118
      %s323 = smul.u32 2, %s23
      %p324 = scmp.lt.s32.totalorder %s22, 1
      %s325 = scalar_select %p324, %s22, 1
      %p326 = scmp.lt.s32.totalorder %s323, 1
      %s327 = scalar_select %p326, %s323, 1
      %p328 = scmp.lt.s32.totalorder %s24, 0
      %s329 = scalar_select %p328, %s24, 0
      %s330 = sadd.s32 %s329, %s327
      %s331 = smul.addr %s325, 2
      %s332 = sadd.s32 %s330, %s331
      %s333 = smul.addr %s332, 4
      %s334 = scalar_lea.vmem %s3, %s333
      %p335 = pneg %p151
      %p336 = pneg %p148
      %p337 = scmp.lt.s32.totalorder %s22, 1
      %s338 = scalar_select %p337, %s22, 1
      %p339 = scmp.lt.s32.totalorder %s24, 0
      %s340 = scalar_select %p339, %s24, 0
      %s341 = sadd.s32 %s340, %s338
      %s342 = scalar_lea.vmem %s4, %s341
      %p343 = pneg %p179
      %p344 = pneg %p176
      %p345 = pneg %p209
      %p346 = pneg %p206
      %s347 = smul.u32 2, %s23
      %p348 = scmp.lt.s32.totalorder %s22, 1
      %s349 = scalar_select %p348, %s22, 1
      %p350 = scmp.lt.s32.totalorder %s347, 1
      %s351 = scalar_select %p350, %s347, 1
      %p352 = scmp.lt.s32.totalorder %s24, 0
      %s353 = scalar_select %p352, %s24, 0
      %s354 = sadd.s32 %s353, %s351
      %s355 = smul.addr %s349, 2
      %s356 = sadd.s32 %s354, %s355
      %s357 = smul.addr %s356, 4
      %s358 = scalar_lea.vmem %s5, %s357
      %s359 = smul.u32 2, %s23
      %p360 = scmp.lt.s32.totalorder %s22, 1
      %s361 = scalar_select %p360, %s22, 1
      %p362 = scmp.lt.s32.totalorder %s359, 1
      %s363 = scalar_select %p362, %s359, 1
      %p364 = scmp.lt.s32.totalorder %s25, 0
      %s365 = scalar_select %p364, %s25, 0
      %s366 = sadd.s32 %s365, %s363
      %s367 = smul.addr %s361, 2
      %s368 = sadd.s32 %s366, %s367
      %s369 = smul.addr %s368, 4
      %s370 = scalar_lea.vmem %s0, %s369
      %s371 = smul.u32 2, %s23
      %s372 = smul.u32 16, %s25
      %p373 = scmp.lt.s32.totalorder %s372, 15
      %s374 = scalar_select %p373, %s372, 15
      %p375 = scmp.lt.s32.totalorder %s24, 0
      %s376 = scalar_select %p375, %s24, 0
      %s377 = sadd.s32 %s376, %s374
      %s378 = smul.addr %s377, 4
      %s379 = scalar_lea.vmem %s1, %s378
      %s380 = smul.u32 16, %s25
      %p381 = scmp.lt.s32.totalorder %s24, 0
      %s382 = scalar_select %p381, %s24, 0
      %s383 = scalar_lea.vmem %s2, %s382
      %s384 = smul.u32 2, %s23
      %p385 = scmp.lt.s32.totalorder %s22, 1
      %s386 = scalar_select %p385, %s22, 1
      %p387 = scmp.lt.s32.totalorder %s384, 1
      %s388 = scalar_select %p387, %s384, 1
      %p389 = scmp.lt.s32.totalorder %s24, 0
      %s390 = scalar_select %p389, %s24, 0
      %s391 = sadd.s32 %s390, %s388
      %s392 = smul.addr %s386, 2
      %s393 = sadd.s32 %s391, %s392
      %s394 = smul.addr %s393, 4
      %s395 = scalar_lea.vmem %s3, %s394
      %s396 = smul.u32 2, %s23
      %p397 = scmp.lt.s32.totalorder %s22, 1
      %s398 = scalar_select %p397, %s22, 1
      %p399 = scmp.lt.s32.totalorder %s24, 0
      %s400 = scalar_select %p399, %s24, 0
      %s401 = sadd.s32 %s400, %s398
      %s402 = scalar_lea.vmem %s4, %s401
      %s403 = smul.u32 2, %s23
      %p404 = scmp.lt.s32.totalorder %s22, 1
      %s405 = scalar_select %p404, %s22, 1
      %p406 = scmp.lt.s32.totalorder %s403, 1
      %s407 = scalar_select %p406, %s403, 1
      %p408 = scmp.lt.s32.totalorder %s24, 0
      %s409 = scalar_select %p408, %s24, 0
      %s410 = sadd.s32 %s409, %s407
      %s411 = smul.addr %s405, 2
      %s412 = sadd.s32 %s410, %s411
      %s413 = smul.addr %s412, 4
      %s414 = scalar_lea.vmem %s5, %s413
      %s415 = smul.u32 2, %s23
      %p417 = scmp.eq.s32.totalorder %s25, 0
      // Predicated region
      $region41: #{double_stream_block.15} parent=39 // pred_check
        %p418 = pneg %p417
      $region42: #{double_stream_block.15} parent=39 // pred_check_branch
        %420 = sbr.rel (%p418) target = $region44
      $region43: #{double_stream_block.15} parent=39 // pred_region
        %421 = vst [vmem:[#allocation2] sm:$0xff] 0.0
        %422 = vst [vmem:[#allocation2 + $0x8] sm:$0xff] 0.0
      $region44: #{double_stream_block.15} parent=39 // pred_fallthru
        _
      %v423 = vld [vmem:[#allocation2] sm:$0xff]
      %v424 = vld [vmem:[#allocation2 + $0x8] sm:$0xff]
      %v425 = vld [vmem:[%s370] sm:$0xf]
      %v426 = vld [vmem:[%s370 + $0x4] sm:$0xf]
      %v427 = vld [vmem:[%s379] sm:$0xf]
      %v428 = vld [vmem:[%s379 + $0x4] sm:$0xf]
      %v429 = vld [vmem:[%s379 + $0x8] sm:$0xf]
      %v430 = vld [vmem:[%s379 + $0xc] sm:$0xf]
      %v431 = vld [vmem:[%s379 + $0x10] sm:$0xf]
      %v432 = vld [vmem:[%s379 + $0x14] sm:$0xf]
      %v433 = vld [vmem:[%s379 + $0x18] sm:$0xf]
      %v434 = vld [vmem:[%s379 + $0x1c] sm:$0xf]
      %v435 = vld [vmem:[%s379 + $0x20] sm:$0xf]
      %v436 = vld [vmem:[%s379 + $0x24] sm:$0xf]
      %v437 = vld [vmem:[%s379 + $0x28] sm:$0xf]
      %v438 = vld [vmem:[%s379 + $0x2c] sm:$0xf]
      %v439 = vld [vmem:[%s379 + $0x30] sm:$0xf]
      %v440 = vld [vmem:[%s379 + $0x34] sm:$0xf]
      %v441 = vld [vmem:[%s379 + $0x38] sm:$0xf]
      %v442 = vld [vmem:[%s379 + $0x3c] sm:$0xf]
      %v445 = vunpack.c.l.b16 %v425
      %v446 = vunpack.c.l.b16 %v426
      %v447 = vpack.c.b16 %v446, %v445
      %v465 = vunpack.c.l.b16 %v427
      %v466 = vunpack.c.l.b16 %v428
      %v467 = vunpack.c.l.b16 %v429
      %v468 = vunpack.c.l.b16 %v430
      %v469 = vunpack.c.l.b16 %v431
      %v470 = vunpack.c.l.b16 %v432
      %v471 = vunpack.c.l.b16 %v433
      %v472 = vunpack.c.l.b16 %v434
      %v473 = vunpack.c.l.b16 %v435
      %v474 = vunpack.c.l.b16 %v436
      %v475 = vunpack.c.l.b16 %v437
      %v476 = vunpack.c.l.b16 %v438
      %v477 = vunpack.c.l.b16 %v439
      %v478 = vunpack.c.l.b16 %v440
      %v479 = vunpack.c.l.b16 %v441
      %v480 = vunpack.c.l.b16 %v442
      %v481 = vpack.c.b16 %v466, %v465
      %v482 = vpack.c.b16 %v468, %v467
      %v483 = vpack.c.b16 %v470, %v469
      %v484 = vpack.c.b16 %v472, %v471
      %v485 = vpack.c.b16 %v474, %v473
      %v486 = vpack.c.b16 %v476, %v475
      %v487 = vpack.c.b16 %v478, %v477
      %v488 = vpack.c.b16 %v480, %v479
      %497 = vmatprep.subr.bf16.mxu0 0
      %498 = vmatpush1.bf16.msra.mxu0 %v488
      %499 = vmatprep.subr.bf16.mxu0 0
      %500 = vmatpush1.bf16.msra.mxu0 %v487
      %501 = vmatprep.subr.bf16.mxu0 0
      %502 = vmatpush1.bf16.msra.mxu0 %v486
      %503 = vmatprep.subr.bf16.mxu0 0
      %504 = vmatpush1.bf16.msra.mxu0 %v485
      %505 = vmatprep.subr.bf16.mxu0 0
      %506 = vmatpush1.bf16.msra.mxu0 %v484
      %507 = vmatprep.subr.bf16.mxu0 0
      %508 = vmatpush1.bf16.msra.mxu0 %v483
      %509 = vmatprep.subr.bf16.mxu0 0
      %510 = vmatpush1.bf16.msra.mxu0 %v482
      %511 = vmatprep.subr.bf16.mxu0 0
      %512 = vmatpush1.bf16.msra.mxu0 %v481
      %513 = vmatprep.subr.bf16.mxu0 0
      %514 = vmatpush2.bf16.msra.mxu0 0
      %515 = vmatprep.subr.bf16.mxu0 0
      %516 = vmatpush2.bf16.msra.mxu0 0
      %517 = vmatprep.subr.bf16.mxu0 0
      %518 = vmatpush2.bf16.msra.mxu0 0
      %519 = vmatprep.subr.bf16.mxu0 0
      %520 = vmatpush2.bf16.msra.mxu0 0
      %521 = vmatprep.subr.bf16.mxu0 0
      %522 = vmatpush2.bf16.msra.mxu0 0
      %523 = vmatprep.subr.bf16.mxu0 0
      %524 = vmatpush2.bf16.msra.mxu0 0
      %525 = vmatprep.subr.bf16.mxu0 0
      %526 = vmatpush2.bf16.msra.mxu0 0
      %527 = vmatprep.subr.bf16.mxu0 0
      %528 = vmatpush2.bf16.msra.mxu0 0
      %529 = vmatprep.mubr.bf16.mxu0 0
      %530 = vmatmul.mubr.bf16.gmra.mxu0 %v447
      %v531 = vpop.f32.mrf.mxu0
      %v532 = vadd.f32 0.0, %v531
      %v533 = vpop.f32.mrf.mxu0
      %v534 = vpop.f32.mrf.mxu0
      %v535 = vadd.f32 0.0, %v534
      %v536 = vpop.f32.mrf.mxu0
      %537 = vdwg.mxu0
      %v538 = vadd.f32 %v423, %v532
      %v539 = vadd.f32 %v424, %v535
      %540 = vst [vmem:[#allocation2] sm:$0xff] %v538
      %541 = vst [vmem:[#allocation2 + $0x8] sm:$0xff] %v539
      // Predicated region
      $region45: #{double_stream_block.15} parent=39 // pred_check
        %p542 = pneg %p417
      $region46: #{double_stream_block.15} parent=39 // pred_check_branch
        %544 = sbr.rel (%p542) target = $region48
      $region47: #{double_stream_block.15} parent=39 // pred_region
        %v545 = vld [vmem:[#allocation2] sm:$0xff]
        %v546 = vld [vmem:[#allocation2 + $0x8] sm:$0xff]
        %v547 = vld [vmem:[%s383] sm:$0x1]
        %v549 = vlaneseq
        %v550 = vshrl.u32 %v549, 7
        %v551 = vsub.s32 0, %v550
        %v552 = vrot.slane %v547, %v551
        %v554 = vadd.f32 %v545, %v552
        %v555 = vadd.f32 %v546, %v552
        %v556 = vld [vmem:[%s395] sm:$0xf]
        %v557 = vld [vmem:[%s395 + $0x4] sm:$0xf]
        %v558 = vunpack.c.l.bf16 %v556
        %v559 = vunpack.c.l.bf16 %v557
        %v560 = vld [vmem:[%s402] sm:$0x1]
        %v562 = vlaneseq
        %v563 = vshrl.u32 %v562, 7
        %v564 = vsub.s32 0, %v563
        %v565 = vrot.slane %v560, %v564
        %v567 = vmul.f32 %v565, %v554
        %v568 = vmul.f32 %v565, %v555
        %v569 = vadd.f32 %v558, %v567
        %v570 = vadd.f32 %v559, %v568
        %v571 = vpack.c.bf16 %v570, %v569
        %v573 = vunpack.c.l.b16 %v571
        %v574 = vunpack.c.h.b16 %v571
        %v575 = vpack.c.b16 %v573, %v573
        %v576 = vpack.c.b16 %v574, %v574
        %579 = vst [vmem:[%s414] sm:$0xf] %v575
        %580 = vst [vmem:[%s414 + $0x4] sm:$0xf] %v576
      $region48: #{double_stream_block.15} parent=39 // pred_fallthru
        _
      %s581 = smul.u32 2, %s23
      %p582 = scmp.lt.s32.totalorder %s22, 1
      %s583 = scalar_select %p582, %s22, 1
      %p584 = scmp.lt.s32.totalorder %s581, 1
      %s585 = scalar_select %p584, %s581, 1
      %p586 = scmp.lt.s32.totalorder %s24, 0
      %s587 = scalar_select %p586, %s24, 0
      %s588 = sadd.s32 %s587, %s585
      %s589 = smul.addr %s583, 2
      %s590 = sadd.s32 %s588, %s589
      %s591 = smul.addr %s590, 4
      %s592 = scalar_lea.vmem %s5, %s591
      // Predicated region
      $region49: #{double_stream_block.15} parent=39 // pred_check
        %p593 = pneg %p206
      $region50: #{double_stream_block.15} parent=39 // pred_check_branch
        %595 = sbr.rel (%p593) target = $region52
      $region51: #{double_stream_block.15} parent=39 // pred_region
        %s596 = smul.u32 2, %s23
      $region52: #{double_stream_block.15} parent=39 // pred_fallthru
        _
    $region40: #{double_stream_block.15} parent=5 // pred_fallthru
      _
    %p597 = scmp.le.s32.totalorder 2, %s11
    // Predicated region
    $region53: #{double_stream_block.15} parent=5 // pred_check
      %p598 = pneg %p597
    $region54: #{double_stream_block.15} parent=5 // pred_check_branch
      %600 = sbr.rel (%p598) target = $region56
    $region55: #{double_stream_block.15} parent=5 // pred_region
      %s601 = ssub.s32 %s11, 2
      // Predicated region
      $region57: #{double_stream_block.15} parent=55 // pred_check
        %p602 = pneg %p212
      $region58: #{double_stream_block.15} parent=55 // pred_check_branch
        %604 = sbr.rel (%p602) target = $region60
      $region59: #{double_stream_block.15} parent=55 // pred_region
        %s605 = smul.u32 2, %s27
        %p606 = scmp.lt.s32.totalorder %s26, 1
        %s607 = scalar_select %p606, %s26, 1
        %p608 = scmp.lt.s32.totalorder %s605, 1
        %s609 = scalar_select %p608, %s605, 1
        %p610 = scmp.lt.s32.totalorder %s28, 0
        %s611 = scalar_select %p610, %s28, 0
        %s612 = sadd.s32 %s611, %s609
        %s613 = smul.addr %s607, 2
        %s614 = sadd.s32 %s612, %s613
        %s615 = smul.addr %s614, 4
        %s616 = scalar_lea.vmem %s5, %s615
      $region60: #{double_stream_block.15} parent=55 // pred_fallthru
        _
    $region56: #{double_stream_block.15} parent=5 // pred_fallthru
      _
  $region6: #{double_stream_block.15} parent=0 // loop_footer
    %s15 = sadd.s32 1, %s11
  $region7: #{double_stream_block.15} parent=0 // loop_footer_branch
    %10 = sbr.rel target = $region3
  $region8: #{double_stream_block.15} parent=0 // loop_exit
    _

// kernel: double_stream_block.16
$region0: #{double_stream_block.16}
  #allocation0 [shape = 'u32[]', space=smem, size = 0x4, offset = 0x4, fixed_abs, tag = 'smem constant byte address 0x4 - core index']
  #allocation1 [shape = 'u32[144,128]{1,0:T(1,128)}', space=vmem, size = 0x12000, scoped, tag = 'internal scratch']
  #allocation2 [shape = 'bf16[16,128]{1,0:T(8,128)(2,1)}', space=vmem, size = 0x1000, scoped, tag = 'scratch operand']
  %s0 = inlined_call_operand.vmem [shape: bf16[2,16,128], index: 0, kind: input, shape index: {}]
  %s1 = inlined_call_operand.vmem [shape: f32[2,1,128], index: 1, kind: input, shape index: {}]
  %s2 = inlined_call_operand.vmem [shape: f32[2,1,128], index: 2, kind: input, shape index: {}]
  %s3 = inlined_call_operand.vmem [shape: bf16[128,128], index: 3, kind: input, shape index: {}]
  %s4 = inlined_call_operand.vmem [shape: f32[1,128], index: 4, kind: input, shape index: {}]
  %s5 = inlined_call_operand.vmem [shape: bf16[2,16,128], index: 5, kind: output, shape index: {}]
  %s6 = sld [smem:[#allocation0]]
  $region57: #{double_stream_block.16} parent=0
    _
  %s8 = ssub.s32 1, %s6
  %s9 = scalar_select 0, %s8, %s6
  loop: start=0, step=1, limit=4
  $region2: #{double_stream_block.16} parent=0 // loop_pre_header
    _
  $region3: #{double_stream_block.16} parent=0 // loop_header
    %s11 = sphi 0, %s15
    %p12 = scmp.ge.s32.totalorder %s11, 4
    %s18 = sphi 0, %s37
    %s19 = sphi 0, %s33
    %s20 = sphi 0, %s29
    %s21 = sphi 0, %s18
    %s22 = sphi 0, %s19
    %s23 = sphi 0, %s20
    %s24 = sphi 0, %s21
    %s25 = sphi 0, %s22
    %s26 = sphi 0, %s23
    %s42 = sphi 0, %s44
    %s45 = sphi 0, %s42
    %s46 = sphi 0, %s45
    %s62 = sphi 0, %s46
    %s68 = sphi 0, %s70
    %s71 = sphi 0, %s68
    %s72 = sphi 0, %s71
    %s88 = sphi 0, %s72
    %s94 = sphi 0, %s96
    %s97 = sphi 0, %s94
    %s98 = sphi 0, %s97
    %s114 = sphi 0, %s98
    %s120 = sphi 0, %s122
    %s123 = sphi 0, %s120
    %s124 = sphi 0, %s123
    %s140 = sphi 0, %s124
    %s146 = sphi 0, %s148
    %s149 = sphi 0, %s146
    %s150 = sphi 0, %s149
    %s166 = sphi 0, %s150
    %s176 = sphi 0, %s178
    %s179 = sphi 0, %s176
    %s180 = sphi 0, %s179
    %s196 = sphi 0, %s180
  $region4: #{double_stream_block.16} parent=0 // loop_header_branch
    %14 = sbr.rel (%p12) target = $region8
  $region5: #{double_stream_block.16} parent=0 // loop_body
    %s16 = ssub.s32 %s11, 1
    %s17 = ssub.s32 %s11, 2
    %s27 = sadd.s32 1, %s20
    %p28 = scmp.ge.s32.totalorder %s27, 1
    %s29 = scalar_select %p28, 0, %s27
    %s30 = sadd.s32 1, %s19
    %s31 = scalar_select %p28, %s30, %s19
    %p32 = scmp.ge.s32.totalorder %s31, 1
    %s33 = scalar_select %p32, 0, %s31
    %s34 = sadd.s32 1, %s18
    %s35 = scalar_select %p32, %s34, %s18
    %p36 = scmp.ge.s32.totalorder %s35, 2
    %s37 = scalar_select %p36, 0, %s35
    %s38 = ssub.s32 %s18, %s37
    %s39 = ssub.s32 %s19, %s33
    %s40 = sor.u32 %s38, %s39
    %p41 = scmp.eq.s32.totalorder %s40, 0
    %s43 = sadd.s32 %s42, 1
    %s44 = scalar_select %p41, %s42, %s43
    %p47 = pneg %p41
    %p48 = scmp.eq.s32.totalorder %s11, 1
    %p49 = por %p47, %p48
    %p50 = scmp.ne.s32.totalorder %s42, %s45
    %p51 = scmp.eq.s32.totalorder %s11, 0
    %p52 = por %p50, %p51
    %p53 = scmp.ne.s32.totalorder %s42, %s45
    %p54 = scmp.eq.s32.totalorder %s16, 1
    %p55 = por %p53, %p54
    %p56 = scmp.ne.s32.totalorder %s45, %s46
    %p57 = scmp.eq.s32.totalorder %s16, 0
    %p58 = por %p56, %p57
    %p59 = scmp.ne.s32.totalorder %s45, %s46
    %p60 = scmp.eq.s32.totalorder %s17, 1
    %p61 = por %p59, %p60
    %p63 = scmp.ne.s32.totalorder %s46, %s62
    %p64 = scmp.eq.s32.totalorder %s17, 0
    %p65 = por %p63, %p64
    %s66 = ssub.s32 %s18, %s37
    %p67 = scmp.eq.s32.totalorder %s66, 0
    %s69 = sadd.s32 %s68, 1
    %s70 = scalar_select %p67, %s68, %s69
    %p73 = pneg %p67
    %p74 = scmp.eq.s32.totalorder %s11, 1
    %p75 = por %p73, %p74
    %p76 = scmp.ne.s32.totalorder %s68, %s71
    %p77 = scmp.eq.s32.totalorder %s11, 0
    %p78 = por %p76, %p77
    %p79 = scmp.ne.s32.totalorder %s68, %s71
    %p80 = scmp.eq.s32.totalorder %s16, 1
    %p81 = por %p79, %p80
    %p82 = scmp.ne.s32.totalorder %s71, %s72
    %p83 = scmp.eq.s32.totalorder %s16, 0
    %p84 = por %p82, %p83
    %p85 = scmp.ne.s32.totalorder %s71, %s72
    %p86 = scmp.eq.s32.totalorder %s17, 1
    %p87 = por %p85, %p86
    %p89 = scmp.ne.s32.totalorder %s72, %s88
    %p90 = scmp.eq.s32.totalorder %s17, 0
    %p91 = por %p89, %p90
    %s92 = ssub.s32 %s18, %s37
    %p93 = scmp.eq.s32.totalorder %s92, 0
    %s95 = sadd.s32 %s94, 1
    %s96 = scalar_select %p93, %s94, %s95
    %p99 = pneg %p93
    %p100 = scmp.eq.s32.totalorder %s11, 1
    %p101 = por %p99, %p100
    %p102 = scmp.ne.s32.totalorder %s94, %s97
    %p103 = scmp.eq.s32.totalorder %s11, 0
    %p104 = por %p102, %p103
    %p105 = scmp.ne.s32.totalorder %s94, %s97
    %p106 = scmp.eq.s32.totalorder %s16, 1
    %p107 = por %p105, %p106
    %p108 = scmp.ne.s32.totalorder %s97, %s98
    %p109 = scmp.eq.s32.totalorder %s16, 0
    %p110 = por %p108, %p109
    %p111 = scmp.ne.s32.totalorder %s97, %s98
    %p112 = scmp.eq.s32.totalorder %s17, 1
    %p113 = por %p111, %p112
    %p115 = scmp.ne.s32.totalorder %s98, %s114
    %p116 = scmp.eq.s32.totalorder %s17, 0
    %p117 = por %p115, %p116
    %s118 = ssub.s32 %s20, %s29
    %p119 = scmp.eq.s32.totalorder %s118, 0
    %s121 = sadd.s32 %s120, 1
    %s122 = scalar_select %p119, %s120, %s121
    %p125 = pneg %p119
    %p126 = scmp.eq.s32.totalorder %s11, 1
    %p127 = por %p125, %p126
    %p128 = scmp.ne.s32.totalorder %s120, %s123
    %p129 = scmp.eq.s32.totalorder %s11, 0
    %p130 = por %p128, %p129
    %p131 = scmp.ne.s32.totalorder %s120, %s123
    %p132 = scmp.eq.s32.totalorder %s16, 1
    %p133 = por %p131, %p132
    %p134 = scmp.ne.s32.totalorder %s123, %s124
    %p135 = scmp.eq.s32.totalorder %s16, 0
    %p136 = por %p134, %p135
    %p137 = scmp.ne.s32.totalorder %s123, %s124
    %p138 = scmp.eq.s32.totalorder %s17, 1
    %p139 = por %p137, %p138
    %p141 = scmp.ne.s32.totalorder %s124, %s140
    %p142 = scmp.eq.s32.totalorder %s17, 0
    %p143 = por %p141, %p142
    %s144 = ssub.s32 %s20, %s29
    %p145 = scmp.eq.s32.totalorder %s144, 0
    %s147 = sadd.s32 %s146, 1
    %s148 = scalar_select %p145, %s146, %s147
    %p151 = pneg %p145
    %p152 = scmp.eq.s32.totalorder %s11, 1
    %p153 = por %p151, %p152
    %p154 = scmp.ne.s32.totalorder %s146, %s149
    %p155 = scmp.eq.s32.totalorder %s11, 0
    %p156 = por %p154, %p155
    %p157 = scmp.ne.s32.totalorder %s146, %s149
    %p158 = scmp.eq.s32.totalorder %s16, 1
    %p159 = por %p157, %p158
    %p160 = scmp.ne.s32.totalorder %s149, %s150
    %p161 = scmp.eq.s32.totalorder %s16, 0
    %p162 = por %p160, %p161
    %p163 = scmp.ne.s32.totalorder %s149, %s150
    %p164 = scmp.eq.s32.totalorder %s17, 1
    %p165 = por %p163, %p164
    %p167 = scmp.ne.s32.totalorder %s150, %s166
    %p168 = scmp.eq.s32.totalorder %s17, 0
    %p169 = por %p167, %p168
    %s170 = ssub.s32 %s18, %s37
    %s171 = ssub.s32 %s19, %s33
    %s172 = sor.u32 %s170, %s171
    %s173 = ssub.s32 %s20, %s29
    %s174 = sor.u32 %s172, %s173
    %p175 = scmp.eq.s32.totalorder %s174, 0
    %s177 = sadd.s32 %s176, 1
    %s178 = scalar_select %p175, %s176, %s177
    %p181 = pneg %p175
    %p182 = scmp.eq.s32.totalorder %s11, 1
    %p183 = por %p181, %p182
    %p184 = scmp.ne.s32.totalorder %s176, %s179
    %p185 = scmp.eq.s32.totalorder %s11, 0
    %p186 = por %p184, %p185
    %p187 = scmp.ne.s32.totalorder %s176, %s179
    %p188 = scmp.eq.s32.totalorder %s16, 1
    %p189 = por %p187, %p188
    %p190 = scmp.ne.s32.totalorder %s179, %s180
    %p191 = scmp.eq.s32.totalorder %s16, 0
    %p192 = por %p190, %p191
    %p193 = scmp.ne.s32.totalorder %s179, %s180
    %p194 = scmp.eq.s32.totalorder %s17, 1
    %p195 = por %p193, %p194
    %p197 = scmp.ne.s32.totalorder %s180, %s196
    %p198 = scmp.eq.s32.totalorder %s17, 0
    %p199 = por %p197, %p198
    %p200 = scmp.le.s32.totalorder 1, %s11
    %p201 = scmp.lt.s32.totalorder %s11, 3
    %p202 = pnand %p200, %p201
    %p203 = pneg %p202
    // Predicated region
    $region9: #{double_stream_block.16} parent=5 // pred_check
      _
    $region10: #{double_stream_block.16} parent=5 // pred_check_branch
      %205 = sbr.rel (%p202) target = $region12
    $region11: #{double_stream_block.16} parent=5 // pred_region
      %s206 = ssub.s32 %s11, 1
      // Predicated region
      $region13: #{double_stream_block.16} parent=11 // pred_check
        %p207 = pneg %p136
      $region14: #{double_stream_block.16} parent=11 // pred_check_branch
        %209 = sbr.rel (%p207) target = $region16
      $region15: #{double_stream_block.16} parent=11 // pred_region
        %p210 = scmp.lt.s32.totalorder %s23, 0
        %s211 = scalar_select %p210, %s23, 0
        %s212 = smul.addr %s211, 4
        %s213 = scalar_lea.vmem %s3, %s212
      $region16: #{double_stream_block.16} parent=11 // pred_fallthru
        _
      // Predicated region
      $region17: #{double_stream_block.16} parent=11 // pred_check
        %p214 = pneg %p162
      $region18: #{double_stream_block.16} parent=11 // pred_check_branch
        %216 = sbr.rel (%p214) target = $region20
      $region19: #{double_stream_block.16} parent=11 // pred_region
        %p217 = scmp.lt.s32.totalorder %s23, 0
        %s218 = scalar_select %p217, %s23, 0
        %s219 = scalar_lea.vmem %s4, %s218
      $region20: #{double_stream_block.16} parent=11 // pred_fallthru
        _
    $region12: #{double_stream_block.16} parent=5 // pred_fallthru
      _
    %p220 = scmp.lt.s32.totalorder %s11, 2
    // Predicated region
    $region21: #{double_stream_block.16} parent=5 // pred_check
      %p221 = pneg %p220
    $region22: #{double_stream_block.16} parent=5 // pred_check_branch
      %223 = sbr.rel (%p221) target = $region24
    $region23: #{double_stream_block.16} parent=5 // pred_region
      // Predicated region
      $region25: #{double_stream_block.16} parent=23 // pred_check
        %p224 = pneg %p52
      $region26: #{double_stream_block.16} parent=23 // pred_check_branch
        %226 = sbr.rel (%p224) target = $region28
      $region27: #{double_stream_block.16} parent=23 // pred_region
        %s227 = smul.u32 2, %s19
        %p228 = scmp.lt.s32.totalorder %s18, 1
        %s229 = scalar_select %p228, %s18, 1
        %p230 = scmp.lt.s32.totalorder %s227, 1
        %s231 = scalar_select %p230, %s227, 1
        %s232 = smul.addr %s229, 2
        %s233 = sadd.s32 %s231, %s232
        %s234 = smul.addr %s233, 4
        %s235 = scalar_lea.vmem %s0, %s234
        %s236 = smul.u32 2, %s19
      $region28: #{double_stream_block.16} parent=23 // pred_fallthru
        _
      // Predicated region
      $region29: #{double_stream_block.16} parent=23 // pred_check
        %p237 = pneg %p78
      $region30: #{double_stream_block.16} parent=23 // pred_check_branch
        %239 = sbr.rel (%p237) target = $region32
      $region31: #{double_stream_block.16} parent=23 // pred_region
        %p240 = scmp.lt.s32.totalorder %s18, 1
        %s241 = scalar_select %p240, %s18, 1
        %s242 = scalar_lea.vmem %s1, %s241
      $region32: #{double_stream_block.16} parent=23 // pred_fallthru
        _
      // Predicated region
      $region33: #{double_stream_block.16} parent=23 // pred_check
        %p243 = pneg %p104
      $region34: #{double_stream_block.16} parent=23 // pred_check_branch
        %245 = sbr.rel (%p243) target = $region36
      $region35: #{double_stream_block.16} parent=23 // pred_region
        %p246 = scmp.lt.s32.totalorder %s18, 1
        %s247 = scalar_select %p246, %s18, 1
        %s248 = scalar_lea.vmem %s2, %s247
      $region36: #{double_stream_block.16} parent=23 // pred_fallthru
        _
    $region24: #{double_stream_block.16} parent=5 // pred_fallthru
      _
    %p249 = scmp.le.s32.totalorder 1, %s11
    %p250 = scmp.lt.s32.totalorder %s11, 3
    %p251 = pnand %p249, %p250
    %p252 = pneg %p251
    // Predicated region
    $region37: #{double_stream_block.16} parent=5 // pred_check
      _
    $region38: #{double_stream_block.16} parent=5 // pred_check_branch
      %254 = sbr.rel (%p251) target = $region40
    $region39: #{double_stream_block.16} parent=5 // pred_region
      %s255 = ssub.s32 %s11, 1
      %s256 = smul.u32 2, %s22
      %p257 = scmp.lt.s32.totalorder %s21, 1
      %s258 = scalar_select %p257, %s21, 1
      %p259 = scmp.lt.s32.totalorder %s256, 1
      %s260 = scalar_select %p259, %s256, 1
      %s261 = smul.addr %s258, 2
      %s262 = sadd.s32 %s260, %s261
      %s263 = smul.addr %s262, 4
      %s264 = scalar_lea.vmem %s0, %s263
      %p265 = pneg %p58
      %p266 = pneg %p55
      %p267 = scmp.lt.s32.totalorder %s21, 1
      %s268 = scalar_select %p267, %s21, 1
      %s269 = scalar_lea.vmem %s1, %s268
      %p270 = pneg %p84
      %p271 = pneg %p81
      %p272 = scmp.lt.s32.totalorder %s21, 1
      %s273 = scalar_select %p272, %s21, 1
      %s274 = scalar_lea.vmem %s2, %s273
      %p275 = pneg %p110
      %p276 = pneg %p107
      %p277 = scmp.lt.s32.totalorder %s23, 0
      %s278 = scalar_select %p277, %s23, 0
      %s279 = smul.addr %s278, 4
      %s280 = scalar_lea.vmem %s3, %s279
      %p281 = pneg %p136
      %p282 = pneg %p133
      %p283 = scmp.lt.s32.totalorder %s23, 0
      %s284 = scalar_select %p283, %s23, 0
      %s285 = scalar_lea.vmem %s4, %s284
      %p286 = pneg %p162
      %p287 = pneg %p159
      %p288 = pneg %p192
      %p289 = pneg %p189
      %s290 = smul.u32 2, %s22
      %p291 = scmp.lt.s32.totalorder %s21, 1
      %s292 = scalar_select %p291, %s21, 1
      %p293 = scmp.lt.s32.totalorder %s290, 1
      %s294 = scalar_select %p293, %s290, 1
      %p295 = scmp.lt.s32.totalorder %s23, 0
      %s296 = scalar_select %p295, %s23, 0
      %s297 = sadd.s32 %s296, %s294
      %s298 = smul.addr %s292, 2
      %s299 = sadd.s32 %s297, %s298
      %s300 = smul.addr %s299, 4
      %s301 = scalar_lea.vmem %s5, %s300
      %s302 = smul.u32 2, %s22
      %p303 = scmp.lt.s32.totalorder %s21, 1
      %s304 = scalar_select %p303, %s21, 1
      %p305 = scmp.lt.s32.totalorder %s302, 1
      %s306 = scalar_select %p305, %s302, 1
      %s307 = smul.addr %s304, 2
      %s308 = sadd.s32 %s306, %s307
      %s309 = smul.addr %s308, 4
      %s310 = scalar_lea.vmem %s0, %s309
      %s311 = smul.u32 2, %s22
      %p312 = scmp.lt.s32.totalorder %s21, 1
      %s313 = scalar_select %p312, %s21, 1
      %s314 = scalar_lea.vmem %s1, %s313
      %p315 = scmp.lt.s32.totalorder %s21, 1
      %s316 = scalar_select %p315, %s21, 1
      %s317 = scalar_lea.vmem %s2, %s316
      %p318 = scmp.lt.s32.totalorder %s23, 0
      %s319 = scalar_select %p318, %s23, 0
      %s320 = smul.addr %s319, 4
      %s321 = scalar_lea.vmem %s3, %s320
      %p322 = scmp.lt.s32.totalorder %s23, 0
      %s323 = scalar_select %p322, %s23, 0
      %s324 = scalar_lea.vmem %s4, %s323
      %s325 = smul.u32 2, %s22
      %p326 = scmp.lt.s32.totalorder %s21, 1
      %s327 = scalar_select %p326, %s21, 1
      %p328 = scmp.lt.s32.totalorder %s325, 1
      %s329 = scalar_select %p328, %s325, 1
      %p330 = scmp.lt.s32.totalorder %s23, 0
      %s331 = scalar_select %p330, %s23, 0
      %s332 = sadd.s32 %s331, %s329
      %s333 = smul.addr %s327, 2
      %s334 = sadd.s32 %s332, %s333
      %s335 = smul.addr %s334, 4
      %s336 = scalar_lea.vmem %s5, %s335
      %s337 = smul.u32 2, %s22
      %p339 = scmp.eq.s32.totalorder %s23, 0
      // Predicated region
      $region41: #{double_stream_block.16} parent=39 // pred_check
        %p340 = pneg %p339
      $region42: #{double_stream_block.16} parent=39 // pred_check_branch
        %342 = sbr.rel (%p340) target = $region44
      $region43: #{double_stream_block.16} parent=39 // pred_region
        %v343 = vld [vmem:[%s310] sm:$0xf]
        %v344 = vld [vmem:[%s310 + $0x4] sm:$0xf]
        %v345 = vunpack.c.l.bf16 %v343
        %v346 = vunpack.c.l.bf16 %v344
        %v347 = vlaneseq
        %v348 = vand.u32 %v347, 127
        %vm349 = vcmp.lt.s32.totalorder %v348, 32
        %350 = vadd.xlane.f32.xlu0 %v345
        %v351 = vpop.xlane.xlu0 %350
        %352 = vadd.xlane.f32.xlu0 %v346
        %v353 = vpop.xlane.xlu0 %352
        %v354 = vrcp.pop 32.0
        %v355 = vmul.f32 %v351, %v354
        %v356 = vmul.f32 %v353, %v354
        %v357 = vsub.f32 %v345, %v355
        %v358 = vsub.f32 %v346, %v356
        %v359 = vsel %vm349, %v357, 0.0
        %v360 = vsel %vm349, %v358, 0.0
        %v361 = vmul.f32 %v359, %v359
        %v362 = vmul.f32 %v360, %v360
        %363 = vadd.xlane.f32.xlu0 %v361
        %v364 = vpop.xlane.xlu0 %363
        %365 = vadd.xlane.f32.xlu0 %v362
        %v366 = vpop.xlane.xlu0 %365
        %v367 = vmul.f32 %v364, %v354
        %v368 = vmul.f32 %v366, %v354
        %v369 = vadd.f32 %v367, 1e-06
        %v370 = vadd.f32 %v368, 1e-06
        %v371 = vrsqrt.pop %v369
        %v372 = vrsqrt.pop %v370
        %v373 = vmul.f32 %v359, %v371
        %v374 = vmul.f32 %v360, %v372
        %v375 = vld [vmem:[%s314] sm:$0x1]
        %v376 = vld [vmem:[%s317] sm:$0x1]
        %v377 = vadd.f32 %v375, 1.0
        %v379 = vlaneseq
        %v380 = vshrl.u32 %v379, 7
        %v381 = vsub.s32 0, %v380
        %v382 = vrot.slane %v377, %v381
        %v384 = vmul.f32 %v382, %v373
        %v385 = vmul.f32 %v382, %v374
        %v387 = vlaneseq
        %v388 = vshrl.u32 %v387, 7
        %v389 = vsub.s32 0, %v388
        %v390 = vrot.slane %v376, %v389
        %v392 = vadd.f32 %v384, %v390
        %v393 = vadd.f32 %v385, %v390
        %v394 = vpack.c.bf16 %v393, %v392
        %v396 = vunpack.c.l.b16 %v394
        %v397 = vunpack.c.h.b16 %v394
        %v398 = vpack.c.b16 %v396, %v396
        %v399 = vpack.c.b16 %v397, %v397
        %402 = vst [vmem:[#allocation2] sm:$0xf] %v398
        %403 = vst [vmem:[#allocation2 + $0x4] sm:$0xf] %v399
      $region44: #{double_stream_block.16} parent=39 // pred_fallthru
        _
      %v404 = vld [vmem:[#allocation2] sm:$0xf]
      %v405 = vld [vmem:[#allocation2 + $0x4] sm:$0xf]
      %v406 = vld [vmem:[%s321] sm:$0xf]
      %v407 = vld [vmem:[%s321 + $0x4] sm:$0xf]
      %v408 = vld [vmem:[%s321 + $0x8] sm:$0xf]
      %v409 = vld [vmem:[%s321 + $0xc] sm:$0xf]
      %v410 = vld [vmem:[%s321 + $0x10] sm:$0xf]
      %v411 = vld [vmem:[%s321 + $0x14] sm:$0xf]
      %v412 = vld [vmem:[%s321 + $0x18] sm:$0xf]
      %v413 = vld [vmem:[%s321 + $0x1c] sm:$0xf]
      %v414 = vld [vmem:[%s321 + $0x20] sm:$0xf]
      %v415 = vld [vmem:[%s321 + $0x24] sm:$0xf]
      %v416 = vld [vmem:[%s321 + $0x28] sm:$0xf]
      %v417 = vld [vmem:[%s321 + $0x2c] sm:$0xf]
      %v418 = vld [vmem:[%s321 + $0x30] sm:$0xf]
      %v419 = vld [vmem:[%s321 + $0x34] sm:$0xf]
      %v420 = vld [vmem:[%s321 + $0x38] sm:$0xf]
      %v421 = vld [vmem:[%s321 + $0x3c] sm:$0xf]
      %v422 = vld [vmem:[%s324] sm:$0x1]
      %v424 = vlaneseq
      %v425 = vshrl.u32 %v424, 7
      %v426 = vsub.s32 0, %v425
      %v427 = vrot.slane %v422, %v426
      %v431 = vunpack.c.l.b16 %v404
      %v432 = vunpack.c.l.b16 %v405
      %v433 = vpack.c.b16 %v432, %v431
      %v451 = vunpack.c.l.b16 %v406
      %v452 = vunpack.c.l.b16 %v407
      %v453 = vunpack.c.l.b16 %v408
      %v454 = vunpack.c.l.b16 %v409
      %v455 = vunpack.c.l.b16 %v410
      %v456 = vunpack.c.l.b16 %v411
      %v457 = vunpack.c.l.b16 %v412
      %v458 = vunpack.c.l.b16 %v413
      %v459 = vunpack.c.l.b16 %v414
      %v460 = vunpack.c.l.b16 %v415
      %v461 = vunpack.c.l.b16 %v416
      %v462 = vunpack.c.l.b16 %v417
      %v463 = vunpack.c.l.b16 %v418
      %v464 = vunpack.c.l.b16 %v419
      %v465 = vunpack.c.l.b16 %v420
      %v466 = vunpack.c.l.b16 %v421
      %v467 = vpack.c.b16 %v452, %v451
      %v468 = vpack.c.b16 %v454, %v453
      %v469 = vpack.c.b16 %v456, %v455
      %v470 = vpack.c.b16 %v458, %v457
      %v471 = vpack.c.b16 %v460, %v459
      %v472 = vpack.c.b16 %v462, %v461
      %v473 = vpack.c.b16 %v464, %v463
      %v474 = vpack.c.b16 %v466, %v465
      %483 = vmatprep.subr.bf16.mxu0 0
      %484 = vmatpush1.bf16.msra.mxu0 %v474
      %485 = vmatprep.subr.bf16.mxu0 0
      %486 = vmatpush1.bf16.msra.mxu0 %v473
      %487 = vmatprep.subr.bf16.mxu0 0
      %488 = vmatpush1.bf16.msra.mxu0 %v472
      %489 = vmatprep.subr.bf16.mxu0 0
      %490 = vmatpush1.bf16.msra.mxu0 %v471
      %491 = vmatprep.subr.bf16.mxu0 0
      %492 = vmatpush1.bf16.msra.mxu0 %v470
      %493 = vmatprep.subr.bf16.mxu0 0
      %494 = vmatpush1.bf16.msra.mxu0 %v469
      %495 = vmatprep.subr.bf16.mxu0 0
      %496 = vmatpush1.bf16.msra.mxu0 %v468
      %497 = vmatprep.subr.bf16.mxu0 0
      %498 = vmatpush1.bf16.msra.mxu0 %v467
      %499 = vmatprep.subr.bf16.mxu0 0
      %500 = vmatpush2.bf16.msra.mxu0 0
      %501 = vmatprep.subr.bf16.mxu0 0
      %502 = vmatpush2.bf16.msra.mxu0 0
      %503 = vmatprep.subr.bf16.mxu0 0
      %504 = vmatpush2.bf16.msra.mxu0 0
      %505 = vmatprep.subr.bf16.mxu0 0
      %506 = vmatpush2.bf16.msra.mxu0 0
      %507 = vmatprep.subr.bf16.mxu0 0
      %508 = vmatpush2.bf16.msra.mxu0 0
      %509 = vmatprep.subr.bf16.mxu0 0
      %510 = vmatpush2.bf16.msra.mxu0 0
      %511 = vmatprep.subr.bf16.mxu0 0
      %512 = vmatpush2.bf16.msra.mxu0 0
      %513 = vmatprep.subr.bf16.mxu0 0
      %514 = vmatpush2.bf16.msra.mxu0 0
      %515 = vmatprep.mubr.bf16.mxu0 0
      %516 = vmatmul.mubr.bf16.gmra.mxu0 %v433
      %v517 = vpop.f32.mrf.mxu0
      %v518 = vadd.f32 %v427, %v517
      %v519 = vpop.f32.mrf.mxu0
      %v520 = vpop.f32.mrf.mxu0
      %v521 = vadd.f32 %v427, %v520
      %v522 = vpop.f32.mrf.mxu0
      %523 = vdwg.mxu0
      %v524 = vmul.f32 %v518, 0.5
      %v525 = vmul.f32 %v521, 0.5
      %v526 = vmul.f32 %v518, 0.044715
      %v527 = vmul.f32 %v521, 0.044715
      %v528 = vmul.f32 %v526, %v518
      %v529 = vmul.f32 %v527, %v521
      %v530 = vmul.f32 %v528, %v518
      %v531 = vmul.f32 %v529, %v521
      %v532 = vadd.f32 %v518, %v530
      %v533 = vadd.f32 %v521, %v531
      %v534 = vmul.f32 %v532, 0.7978846
      %v535 = vmul.f32 %v533, 0.7978846
      %v536 = vtanh.pop %v534
      %v537 = vtanh.pop %v535
      %v538 = vadd.f32 %v536, 1.0
      %v539 = vadd.f32 %v537, 1.0
      %v540 = vmul.f32 %v524, %v538
      %v541 = vmul.f32 %v525, %v539
      %v542 = vpack.c.bf16 %v541, %v540
      %v544 = vunpack.c.l.b16 %v542
      %v545 = vunpack.c.h.b16 %v542
      %v546 = vpack.c.b16 %v544, %v544
      %v547 = vpack.c.b16 %v545, %v545
      %550 = vst [vmem:[%s336] sm:$0xf] %v546
      %551 = vst [vmem:[%s336 + $0x4] sm:$0xf] %v547
      %s552 = smul.u32 2, %s22
      %p553 = scmp.lt.s32.totalorder %s21, 1
      %s554 = scalar_select %p553, %s21, 1
      %p555 = scmp.lt.s32.totalorder %s552, 1
      %s556 = scalar_select %p555, %s552, 1
      %p557 = scmp.lt.s32.totalorder %s23, 0
      %s558 = scalar_select %p557, %s23, 0
      %s559 = sadd.s32 %s558, %s556
      %s560 = smul.addr %s554, 2
      %s561 = sadd.s32 %s559, %s560
      %s562 = smul.addr %s561, 4
      %s563 = scalar_lea.vmem %s5, %s562
      // Predicated region
      $region45: #{double_stream_block.16} parent=39 // pred_check
        %p564 = pneg %p189
      $region46: #{double_stream_block.16} parent=39 // pred_check_branch
        %566 = sbr.rel (%p564) target = $region48
      $region47: #{double_stream_block.16} parent=39 // pred_region
        %s567 = smul.u32 2, %s22
      $region48: #{double_stream_block.16} parent=39 // pred_fallthru
        _
    $region40: #{double_stream_block.16} parent=5 // pred_fallthru
      _
    %p568 = scmp.le.s32.totalorder 2, %s11
    // Predicated region
    $region49: #{double_stream_block.16} parent=5 // pred_check
      %p569 = pneg %p568
    $region50: #{double_stream_block.16} parent=5 // pred_check_branch
      %571 = sbr.rel (%p569) target = $region52
    $region51: #{double_stream_block.16} parent=5 // pred_region
      %s572 = ssub.s32 %s11, 2
      // Predicated region
      $region53: #{double_stream_block.16} parent=51 // pred_check
        %p573 = pneg %p195
      $region54: #{double_stream_block.16} parent=51 // pred_check_branch
        %575 = sbr.rel (%p573) target = $region56
      $region55: #{double_stream_block.16} parent=51 // pred_region
        %s576 = smul.u32 2, %s25
        %p577 = scmp.lt.s32.totalorder %s24, 1
        %s578 = scalar_select %p577, %s24, 1
        %p579 = scmp.lt.s32.totalorder %s576, 1
        %s580 = scalar_select %p579, %s576, 1
        %p581 = scmp.lt.s32.totalorder %s26, 0
        %s582 = scalar_select %p581, %s26, 0
        %s583 = sadd.s32 %s582, %s580
        %s584 = smul.addr %s578, 2
        %s585 = sadd.s32 %s583, %s584
        %s586 = smul.addr %s585, 4
        %s587 = scalar_lea.vmem %s5, %s586
      $region56: #{double_stream_block.16} parent=51 // pred_fallthru
        _
    $region52: #{double_stream_block.16} parent=5 // pred_fallthru
      _
  $region6: #{double_stream_block.16} parent=0 // loop_footer
    %s15 = sadd.s32 1, %s11
  $region7: #{double_stream_block.16} parent=0 // loop_footer_branch
    %10 = sbr.rel target = $region3
  $region8: #{double_stream_block.16} parent=0 // loop_exit
    _

// kernel: double_stream_block.11
$region0: #{double_stream_block.11}
  #allocation0 [shape = 'u32[]', space=smem, size = 0x4, offset = 0x4, fixed_abs, tag = 'smem constant byte address 0x4 - core index']
  #allocation1 [shape = 'u32[144,128]{1,0:T(1,128)}', space=vmem, size = 0x12000, scoped, tag = 'internal scratch']
  #allocation2 [shape = 'bf16[32,16]{1,0:T(8,128)(2,1)}', space=vmem, size = 0x2000, scoped, tag = 'scratch operand']
  %s0 = inlined_call_operand.vmem [shape: bf16[2,2,32,16], index: 0, kind: input, shape index: {}]
  %s1 = inlined_call_operand.vmem [shape: bf16[2,2,32,16], index: 1, kind: input, shape index: {}]
  %s2 = inlined_call_operand.vmem [shape: bf16[2,2,32,16], index: 2, kind: input, shape index: {}]
  %s3 = inlined_call_operand.vmem [shape: f32[2,32,16], index: 3, kind: input, shape index: {}, may-alias: {3,5}]
  %s4 = inlined_call_operand.vmem [shape: f32[2,32,16], index: 4, kind: input, shape index: {}, may-alias: {4,6}]
  %s5 = inlined_call_operand.vmem [shape: f32[2,32,16], index: 5, kind: input, shape index: {}, may-alias: {3,5}]
  %s6 = inlined_call_operand.vmem [shape: f32[2,32,16], index: 6, kind: input, shape index: {}, may-alias: {4,6}]
  %s7 = inlined_call_operand.vmem [shape: f32[1,16], index: 7, kind: input, shape index: {}]
  %s8 = inlined_call_operand.vmem [shape: f32[1,16], index: 8, kind: input, shape index: {}]
  %s9 = inlined_call_operand.vmem [shape: f32[1,16], index: 9, kind: input, shape index: {}]
  %s10 = inlined_call_operand.vmem [shape: f32[1,16], index: 10, kind: input, shape index: {}]
  %s11 = inlined_call_operand.vmem [shape: f32[16,16], index: 11, kind: input, shape index: {}]
  %s12 = inlined_call_operand.vmem [shape: bf16[2,2,32,16], index: 12, kind: output, shape index: {}]
  %s13 = sld [smem:[#allocation0]]
  $region85: #{double_stream_block.11} parent=0
    _
  %s15 = ssub.s32 1, %s13
  %s16 = scalar_select 0, %s15, %s13
  loop: start=0, step=1, limit=6
  $region2: #{double_stream_block.11} parent=0 // loop_pre_header
    _
  $region3: #{double_stream_block.11} parent=0 // loop_header
    %s18 = sphi 0, %s22
    %p19 = scmp.ge.s32.totalorder %s18, 6
    %s25 = sphi 0, %s44
    %s26 = sphi 0, %s40
    %s27 = sphi 0, %s36
    %s28 = sphi 0, %s25
    %s29 = sphi 0, %s26
    %s30 = sphi 0, %s27
    %s31 = sphi 0, %s28
    %s32 = sphi 0, %s29
    %s33 = sphi 0, %s30
    %s51 = sphi 0, %s53
    %s54 = sphi 0, %s51
    %s55 = sphi 0, %s54
    %s71 = sphi 0, %s55
    %s79 = sphi 0, %s81
    %s82 = sphi 0, %s79
    %s83 = sphi 0, %s82
    %s99 = sphi 0, %s83
    %s107 = sphi 0, %s109
    %s110 = sphi 0, %s107
    %s111 = sphi 0, %s110
    %s127 = sphi 0, %s111
    %s135 = sphi 0, %s137
    %s138 = sphi 0, %s135
    %s139 = sphi 0, %s138
    %s155 = sphi 0, %s139
    %s163 = sphi 0, %s165
    %s166 = sphi 0, %s163
    %s167 = sphi 0, %s166
    %s183 = sphi 0, %s167
    %s189 = sphi 0, %s191
    %s192 = sphi 0, %s189
    %s193 = sphi 0, %s192
    %s209 = sphi 0, %s193
    %s215 = sphi 0, %s217
    %s218 = sphi 0, %s215
    %s219 = sphi 0, %s218
    %s235 = sphi 0, %s219
    %s239 = sphi 0, %s239
    %s241 = sphi 0, %s239
    %s242 = sphi 0, %s241
    %s256 = sphi 0, %s242
    %s260 = sphi 0, %s260
    %s262 = sphi 0, %s260
    %s263 = sphi 0, %s262
    %s277 = sphi 0, %s263
    %s281 = sphi 0, %s281
    %s283 = sphi 0, %s281
    %s284 = sphi 0, %s283
    %s298 = sphi 0, %s284
    %s302 = sphi 0, %s302
    %s304 = sphi 0, %s302
    %s305 = sphi 0, %s304
    %s319 = sphi 0, %s305
    %s323 = sphi 0, %s323
    %s325 = sphi 0, %s323
    %s326 = sphi 0, %s325
    %s340 = sphi 0, %s326
    %s350 = sphi 0, %s352
    %s353 = sphi 0, %s350
    %s354 = sphi 0, %s353
    %s370 = sphi 0, %s354
  $region4: #{double_stream_block.11} parent=0 // loop_header_branch
    %21 = sbr.rel (%p19) target = $region8
  $region5: #{double_stream_block.11} parent=0 // loop_body
    %s23 = ssub.s32 %s18, 1
    %s24 = ssub.s32 %s18, 2
    %s34 = sadd.s32 1, %s27
    %p35 = scmp.ge.s32.totalorder %s34, 1
    %s36 = scalar_select %p35, 0, %s34
    %s37 = sadd.s32 1, %s26
    %s38 = scalar_select %p35, %s37, %s26
    %p39 = scmp.ge.s32.totalorder %s38, 2
    %s40 = scalar_select %p39, 0, %s38
    %s41 = sadd.s32 1, %s25
    %s42 = scalar_select %p39, %s41, %s25
    %p43 = scmp.ge.s32.totalorder %s42, 2
    %s44 = scalar_select %p43, 0, %s42
    %s45 = ssub.s32 %s25, %s44
    %s46 = ssub.s32 %s26, %s40
    %s47 = sor.u32 %s45, %s46
    %s48 = ssub.s32 %s27, %s36
    %s49 = sor.u32 %s47, %s48
    %p50 = scmp.eq.s32.totalorder %s49, 0
    %s52 = sadd.s32 %s51, 1
    %s53 = scalar_select %p50, %s51, %s52
    %p56 = pneg %p50
    %p57 = scmp.eq.s32.totalorder %s18, 3
    %p58 = por %p56, %p57
    %p59 = scmp.ne.s32.totalorder %s51, %s54
    %p60 = scmp.eq.s32.totalorder %s18, 0
    %p61 = por %p59, %p60
    %p62 = scmp.ne.s32.totalorder %s51, %s54
    %p63 = scmp.eq.s32.totalorder %s23, 3
    %p64 = por %p62, %p63
    %p65 = scmp.ne.s32.totalorder %s54, %s55
    %p66 = scmp.eq.s32.totalorder %s23, 0
    %p67 = por %p65, %p66
    %p68 = scmp.ne.s32.totalorder %s54, %s55
    %p69 = scmp.eq.s32.totalorder %s24, 3
    %p70 = por %p68, %p69
    %p72 = scmp.ne.s32.totalorder %s55, %s71
    %p73 = scmp.eq.s32.totalorder %s24, 0
    %p74 = por %p72, %p73
    %s75 = ssub.s32 %s25, %s44
    %s76 = ssub.s32 %s26, %s40
    %s77 = sor.u32 %s75, %s76
    %p78 = scmp.eq.s32.totalorder %s77, 0
    %s80 = sadd.s32 %s79, 1
    %s81 = scalar_select %p78, %s79, %s80
    %p84 = pneg %p78
    %p85 = scmp.eq.s32.totalorder %s18, 3
    %p86 = por %p84, %p85
    %p87 = scmp.ne.s32.totalorder %s79, %s82
    %p88 = scmp.eq.s32.totalorder %s18, 0
    %p89 = por %p87, %p88
    %p90 = scmp.ne.s32.totalorder %s79, %s82
    %p91 = scmp.eq.s32.totalorder %s23, 3
    %p92 = por %p90, %p91
    %p93 = scmp.ne.s32.totalorder %s82, %s83
    %p94 = scmp.eq.s32.totalorder %s23, 0
    %p95 = por %p93, %p94
    %p96 = scmp.ne.s32.totalorder %s82, %s83
    %p97 = scmp.eq.s32.totalorder %s24, 3
    %p98 = por %p96, %p97
    %p100 = scmp.ne.s32.totalorder %s83, %s99
    %p101 = scmp.eq.s32.totalorder %s24, 0
    %p102 = por %p100, %p101
    %s103 = ssub.s32 %s25, %s44
    %s104 = ssub.s32 %s26, %s40
    %s105 = sor.u32 %s103, %s104
    %p106 = scmp.eq.s32.totalorder %s105, 0
    %s108 = sadd.s32 %s107, 1
    %s109 = scalar_select %p106, %s107, %s108
    %p112 = pneg %p106
    %p113 = scmp.eq.s32.totalorder %s18, 3
    %p114 = por %p112, %p113
    %p115 = scmp.ne.s32.totalorder %s107, %s110
    %p116 = scmp.eq.s32.totalorder %s18, 0
    %p117 = por %p115, %p116
    %p118 = scmp.ne.s32.totalorder %s107, %s110
    %p119 = scmp.eq.s32.totalorder %s23, 3
    %p120 = por %p118, %p119
    %p121 = scmp.ne.s32.totalorder %s110, %s111
    %p122 = scmp.eq.s32.totalorder %s23, 0
    %p123 = por %p121, %p122
    %p124 = scmp.ne.s32.totalorder %s110, %s111
    %p125 = scmp.eq.s32.totalorder %s24, 3
    %p126 = por %p124, %p125
    %p128 = scmp.ne.s32.totalorder %s111, %s127
    %p129 = scmp.eq.s32.totalorder %s24, 0
    %p130 = por %p128, %p129
    %s131 = ssub.s32 %s25, %s44
    %s132 = ssub.s32 %s27, %s36
    %s133 = sor.u32 %s131, %s132
    %p134 = scmp.eq.s32.totalorder %s133, 0
    %s136 = sadd.s32 %s135, 1
    %s137 = scalar_select %p134, %s135, %s136
    %p140 = pneg %p134
    %p141 = scmp.eq.s32.totalorder %s18, 3
    %p142 = por %p140, %p141
    %p143 = scmp.ne.s32.totalorder %s135, %s138
    %p144 = scmp.eq.s32.totalorder %s18, 0
    %p145 = por %p143, %p144
    %p146 = scmp.ne.s32.totalorder %s135, %s138
    %p147 = scmp.eq.s32.totalorder %s23, 3
    %p148 = por %p146, %p147
    %p149 = scmp.ne.s32.totalorder %s138, %s139
    %p150 = scmp.eq.s32.totalorder %s23, 0
    %p151 = por %p149, %p150
    %p152 = scmp.ne.s32.totalorder %s138, %s139
    %p153 = scmp.eq.s32.totalorder %s24, 3
    %p154 = por %p152, %p153
    %p156 = scmp.ne.s32.totalorder %s139, %s155
    %p157 = scmp.eq.s32.totalorder %s24, 0
    %p158 = por %p156, %p157
    %s159 = ssub.s32 %s25, %s44
    %s160 = ssub.s32 %s27, %s36
    %s161 = sor.u32 %s159, %s160
    %p162 = scmp.eq.s32.totalorder %s161, 0
    %s164 = sadd.s32 %s163, 1
    %s165 = scalar_select %p162, %s163, %s164
    %p168 = pneg %p162
    %p169 = scmp.eq.s32.totalorder %s18, 3
    %p170 = por %p168, %p169
    %p171 = scmp.ne.s32.totalorder %s163, %s166
    %p172 = scmp.eq.s32.totalorder %s18, 0
    %p173 = por %p171, %p172
    %p174 = scmp.ne.s32.totalorder %s163, %s166
    %p175 = scmp.eq.s32.totalorder %s23, 3
    %p176 = por %p174, %p175
    %p177 = scmp.ne.s32.totalorder %s166, %s167
    %p178 = scmp.eq.s32.totalorder %s23, 0
    %p179 = por %p177, %p178
    %p180 = scmp.ne.s32.totalorder %s166, %s167
    %p181 = scmp.eq.s32.totalorder %s24, 3
    %p182 = por %p180, %p181
    %p184 = scmp.ne.s32.totalorder %s167, %s183
    %p185 = scmp.eq.s32.totalorder %s24, 0
    %p186 = por %p184, %p185
    %s187 = ssub.s32 %s25, %s44
    %p188 = scmp.eq.s32.totalorder %s187, 0
    %s190 = sadd.s32 %s189, 1
    %s191 = scalar_select %p188, %s189, %s190
    %p194 = pneg %p188
    %p195 = scmp.eq.s32.totalorder %s18, 3
    %p196 = por %p194, %p195
    %p197 = scmp.ne.s32.totalorder %s189, %s192
    %p198 = scmp.eq.s32.totalorder %s18, 0
    %p199 = por %p197, %p198
    %p200 = scmp.ne.s32.totalorder %s189, %s192
    %p201 = scmp.eq.s32.totalorder %s23, 3
    %p202 = por %p200, %p201
    %p203 = scmp.ne.s32.totalorder %s192, %s193
    %p204 = scmp.eq.s32.totalorder %s23, 0
    %p205 = por %p203, %p204
    %p206 = scmp.ne.s32.totalorder %s192, %s193
    %p207 = scmp.eq.s32.totalorder %s24, 3
    %p208 = por %p206, %p207
    %p210 = scmp.ne.s32.totalorder %s193, %s209
    %p211 = scmp.eq.s32.totalorder %s24, 0
    %p212 = por %p210, %p211
    %s213 = ssub.s32 %s25, %s44
    %p214 = scmp.eq.s32.totalorder %s213, 0
    %s216 = sadd.s32 %s215, 1
    %s217 = scalar_select %p214, %s215, %s216
    %p220 = pneg %p214
    %p221 = scmp.eq.s32.totalorder %s18, 3
    %p222 = por %p220, %p221
    %p223 = scmp.ne.s32.totalorder %s215, %s218
    %p224 = scmp.eq.s32.totalorder %s18, 0
    %p225 = por %p223, %p224
    %p226 = scmp.ne.s32.totalorder %s215, %s218
    %p227 = scmp.eq.s32.totalorder %s23, 3
    %p228 = por %p226, %p227
    %p229 = scmp.ne.s32.totalorder %s218, %s219
    %p230 = scmp.eq.s32.totalorder %s23, 0
    %p231 = por %p229, %p230
    %p232 = scmp.ne.s32.totalorder %s218, %s219
    %p233 = scmp.eq.s32.totalorder %s24, 3
    %p234 = por %p232, %p233
    %p236 = scmp.ne.s32.totalorder %s219, %s235
    %p237 = scmp.eq.s32.totalorder %s24, 0
    %p238 = por %p236, %p237
    %s240 = sadd.s32 %s239, 1
    %p243 = scmp.eq.s32.totalorder %s18, 3
    %p244 = scmp.ne.s32.totalorder %s239, %s241
    %p245 = scmp.eq.s32.totalorder %s18, 0
    %p246 = por %p244, %p245
    %p247 = scmp.ne.s32.totalorder %s239, %s241
    %p248 = scmp.eq.s32.totalorder %s23, 3
    %p249 = por %p247, %p248
    %p250 = scmp.ne.s32.totalorder %s241, %s242
    %p251 = scmp.eq.s32.totalorder %s23, 0
    %p252 = por %p250, %p251
    %p253 = scmp.ne.s32.totalorder %s241, %s242
    %p254 = scmp.eq.s32.totalorder %s24, 3
    %p255 = por %p253, %p254
    %p257 = scmp.ne.s32.totalorder %s242, %s256
    %p258 = scmp.eq.s32.totalorder %s24, 0
    %p259 = por %p257, %p258
    %s261 = sadd.s32 %s260, 1
    %p264 = scmp.eq.s32.totalorder %s18, 3
    %p265 = scmp.ne.s32.totalorder %s260, %s262
    %p266 = scmp.eq.s32.totalorder %s18, 0
    %p267 = por %p265, %p266
    %p268 = scmp.ne.s32.totalorder %s260, %s262
    %p269 = scmp.eq.s32.totalorder %s23, 3
    %p270 = por %p268, %p269
    %p271 = scmp.ne.s32.totalorder %s262, %s263
    %p272 = scmp.eq.s32.totalorder %s23, 0
    %p273 = por %p271, %p272
    %p274 = scmp.ne.s32.totalorder %s262, %s263
    %p275 = scmp.eq.s32.totalorder %s24, 3
    %p276 = por %p274, %p275
    %p278 = scmp.ne.s32.totalorder %s263, %s277
    %p279 = scmp.eq.s32.totalorder %s24, 0
    %p280 = por %p278, %p279
    %s282 = sadd.s32 %s281, 1
    %p285 = scmp.eq.s32.totalorder %s18, 3
    %p286 = scmp.ne.s32.totalorder %s281, %s283
    %p287 = scmp.eq.s32.totalorder %s18, 0
    %p288 = por %p286, %p287
    %p289 = scmp.ne.s32.totalorder %s281, %s283
    %p290 = scmp.eq.s32.totalorder %s23, 3
    %p291 = por %p289, %p290
    %p292 = scmp.ne.s32.totalorder %s283, %s284
    %p293 = scmp.eq.s32.totalorder %s23, 0
    %p294 = por %p292, %p293
    %p295 = scmp.ne.s32.totalorder %s283, %s284
    %p296 = scmp.eq.s32.totalorder %s24, 3
    %p297 = por %p295, %p296
    %p299 = scmp.ne.s32.totalorder %s284, %s298
    %p300 = scmp.eq.s32.totalorder %s24, 0
    %p301 = por %p299, %p300
    %s303 = sadd.s32 %s302, 1
    %p306 = scmp.eq.s32.totalorder %s18, 3
    %p307 = scmp.ne.s32.totalorder %s302, %s304
    %p308 = scmp.eq.s32.totalorder %s18, 0
    %p309 = por %p307, %p308
    %p310 = scmp.ne.s32.totalorder %s302, %s304
    %p311 = scmp.eq.s32.totalorder %s23, 3
    %p312 = por %p310, %p311
    %p313 = scmp.ne.s32.totalorder %s304, %s305
    %p314 = scmp.eq.s32.totalorder %s23, 0
    %p315 = por %p313, %p314
    %p316 = scmp.ne.s32.totalorder %s304, %s305
    %p317 = scmp.eq.s32.totalorder %s24, 3
    %p318 = por %p316, %p317
    %p320 = scmp.ne.s32.totalorder %s305, %s319
    %p321 = scmp.eq.s32.totalorder %s24, 0
    %p322 = por %p320, %p321
    %s324 = sadd.s32 %s323, 1
    %p327 = scmp.eq.s32.totalorder %s18, 3
    %p328 = scmp.ne.s32.totalorder %s323, %s325
    %p329 = scmp.eq.s32.totalorder %s18, 0
    %p330 = por %p328, %p329
    %p331 = scmp.ne.s32.totalorder %s323, %s325
    %p332 = scmp.eq.s32.totalorder %s23, 3
    %p333 = por %p331, %p332
    %p334 = scmp.ne.s32.totalorder %s325, %s326
    %p335 = scmp.eq.s32.totalorder %s23, 0
    %p336 = por %p334, %p335
    %p337 = scmp.ne.s32.totalorder %s325, %s326
    %p338 = scmp.eq.s32.totalorder %s24, 3
    %p339 = por %p337, %p338
    %p341 = scmp.ne.s32.totalorder %s326, %s340
    %p342 = scmp.eq.s32.totalorder %s24, 0
    %p343 = por %p341, %p342
    %s344 = ssub.s32 %s25, %s44
    %s345 = ssub.s32 %s26, %s40
    %s346 = sor.u32 %s344, %s345
    %s347 = ssub.s32 %s27, %s36
    %s348 = sor.u32 %s346, %s347
    %p349 = scmp.eq.s32.totalorder %s348, 0
    %s351 = sadd.s32 %s350, 1
    %s352 = scalar_select %p349, %s350, %s351
    %p355 = pneg %p349
    %p356 = scmp.eq.s32.totalorder %s18, 3
    %p357 = por %p355, %p356
    %p358 = scmp.ne.s32.totalorder %s350, %s353
    %p359 = scmp.eq.s32.totalorder %s18, 0
    %p360 = por %p358, %p359
    %p361 = scmp.ne.s32.totalorder %s350, %s353
    %p362 = scmp.eq.s32.totalorder %s23, 3
    %p363 = por %p361, %p362
    %p364 = scmp.ne.s32.totalorder %s353, %s354
    %p365 = scmp.eq.s32.totalorder %s23, 0
    %p366 = por %p364, %p365
    %p367 = scmp.ne.s32.totalorder %s353, %s354
    %p368 = scmp.eq.s32.totalorder %s24, 3
    %p369 = por %p367, %p368
    %p371 = scmp.ne.s32.totalorder %s354, %s370
    %p372 = scmp.eq.s32.totalorder %s24, 0
    %p373 = por %p371, %p372
    %p374 = scmp.le.s32.totalorder 1, %s18
    %p375 = scmp.lt.s32.totalorder %s18, 5
    %p376 = pnand %p374, %p375
    %p377 = pneg %p376
    // Predicated region
    $region9: #{double_stream_block.11} parent=5 // pred_check
      _
    $region10: #{double_stream_block.11} parent=5 // pred_check_branch
      %379 = sbr.rel (%p376) target = $region12
    $region11: #{double_stream_block.11} parent=5 // pred_region
      %s380 = ssub.s32 %s18, 1
      // Predicated region
      $region13: #{double_stream_block.11} parent=11 // pred_check
        %p381 = pneg %p252
      $region14: #{double_stream_block.11} parent=11 // pred_check_branch
        %383 = sbr.rel (%p381) target = $region16
      $region15: #{double_stream_block.11} parent=11 // pred_region
        _
      $region16: #{double_stream_block.11} parent=11 // pred_fallthru
        _
      // Predicated region
      $region17: #{double_stream_block.11} parent=11 // pred_check
        %p384 = pneg %p273
      $region18: #{double_stream_block.11} parent=11 // pred_check_branch
        %386 = sbr.rel (%p384) target = $region20
      $region19: #{double_stream_block.11} parent=11 // pred_region
        _
      $region20: #{double_stream_block.11} parent=11 // pred_fallthru
        _
      // Predicated region
      $region21: #{double_stream_block.11} parent=11 // pred_check
        %p387 = pneg %p294
      $region22: #{double_stream_block.11} parent=11 // pred_check_branch
        %389 = sbr.rel (%p387) target = $region24
      $region23: #{double_stream_block.11} parent=11 // pred_region
        _
      $region24: #{double_stream_block.11} parent=11 // pred_fallthru
        _
      // Predicated region
      $region25: #{double_stream_block.11} parent=11 // pred_check
        %p390 = pneg %p315
      $region26: #{double_stream_block.11} parent=11 // pred_check_branch
        %392 = sbr.rel (%p390) target = $region28
      $region27: #{double_stream_block.11} parent=11 // pred_region
        _
      $region28: #{double_stream_block.11} parent=11 // pred_fallthru
        _
      // Predicated region
      $region29: #{double_stream_block.11} parent=11 // pred_check
        %p393 = pneg %p336
      $region30: #{double_stream_block.11} parent=11 // pred_check_branch
        %395 = sbr.rel (%p393) target = $region32
      $region31: #{double_stream_block.11} parent=11 // pred_region
        _
      $region32: #{double_stream_block.11} parent=11 // pred_fallthru
        _
    $region12: #{double_stream_block.11} parent=5 // pred_fallthru
      _
    %p396 = scmp.lt.s32.totalorder %s18, 4
    // Predicated region
    $region33: #{double_stream_block.11} parent=5 // pred_check
      %p397 = pneg %p396
    $region34: #{double_stream_block.11} parent=5 // pred_check_branch
      %399 = sbr.rel (%p397) target = $region36
    $region35: #{double_stream_block.11} parent=5 // pred_region
      // Predicated region
      $region37: #{double_stream_block.11} parent=35 // pred_check
        %p400 = pneg %p61
      $region38: #{double_stream_block.11} parent=35 // pred_check_branch
        %402 = sbr.rel (%p400) target = $region40
      $region39: #{double_stream_block.11} parent=35 // pred_region
        %s403 = smul.u32 4, %s27
        %p404 = scmp.lt.s32.totalorder %s25, 1
        %s405 = scalar_select %p404, %s25, 1
        %p406 = scmp.lt.s32.totalorder %s26, 1
        %s407 = scalar_select %p406, %s26, 1
        %p408 = scmp.lt.s32.totalorder %s403, 3
        %s409 = scalar_select %p408, %s403, 3
        %s410 = smul.addr %s407, 4
        %s411 = sadd.s32 %s409, %s410
        %s412 = smul.addr %s405, 8
        %s413 = sadd.s32 %s411, %s412
        %s414 = smul.addr %s413, 4
        %s415 = scalar_lea.vmem %s0, %s414
        %s416 = smul.u32 4, %s27
      $region40: #{double_stream_block.11} parent=35 // pred_fallthru
        _
      // Predicated region
      $region41: #{double_stream_block.11} parent=35 // pred_check
        %p417 = pneg %p89
      $region42: #{double_stream_block.11} parent=35 // pred_check_branch
        %419 = sbr.rel (%p417) target = $region44
      $region43: #{double_stream_block.11} parent=35 // pred_region
        %p420 = scmp.lt.s32.totalorder %s25, 1
        %s421 = scalar_select %p420, %s25, 1
        %p422 = scmp.lt.s32.totalorder %s26, 1
        %s423 = scalar_select %p422, %s26, 1
        %s424 = smul.addr %s423, 4
        %s425 = smul.addr %s421, 8
        %s426 = sadd.s32 %s424, %s425
        %s427 = smul.addr %s426, 4
        %s428 = scalar_lea.vmem %s1, %s427
      $region44: #{double_stream_block.11} parent=35 // pred_fallthru
        _
      // Predicated region
      $region45: #{double_stream_block.11} parent=35 // pred_check
        %p429 = pneg %p117
      $region46: #{double_stream_block.11} parent=35 // pred_check_branch
        %431 = sbr.rel (%p429) target = $region48
      $region47: #{double_stream_block.11} parent=35 // pred_region
        %p432 = scmp.lt.s32.totalorder %s25, 1
        %s433 = scalar_select %p432, %s25, 1
        %p434 = scmp.lt.s32.totalorder %s26, 1
        %s435 = scalar_select %p434, %s26, 1
        %s436 = smul.addr %s435, 4
        %s437 = smul.addr %s433, 8
        %s438 = sadd.s32 %s436, %s437
        %s439 = smul.addr %s438, 4
        %s440 = scalar_lea.vmem %s2, %s439
      $region48: #{double_stream_block.11} parent=35 // pred_fallthru
        _
      // Predicated region
      $region49: #{double_stream_block.11} parent=35 // pred_check
        %p441 = pneg %p145
      $region50: #{double_stream_block.11} parent=35 // pred_check_branch
        %443 = sbr.rel (%p441) target = $region52
      $region51: #{double_stream_block.11} parent=35 // pred_region
        %s444 = smul.u32 4, %s27
        %p445 = scmp.lt.s32.totalorder %s25, 1
        %s446 = scalar_select %p445, %s25, 1
        %p447 = scmp.lt.s32.totalorder %s444, 3
        %s448 = scalar_select %p447, %s444, 3
        %s449 = smul.addr %s446, 4
        %s450 = sadd.s32 %s448, %s449
        %s451 = smul.addr %s450, 8
        %s452 = scalar_lea.vmem %s3, %s451
        %s453 = smul.u32 4, %s27
      $region52: #{double_stream_block.11} parent=35 // pred_fallthru
        _
      // Predicated region
      $region53: #{double_stream_block.11} parent=35 // pred_check
        %p454 = pneg %p173
      $region54: #{double_stream_block.11} parent=35 // pred_check_branch
        %456 = sbr.rel (%p454) target = $region56
      $region55: #{double_stream_block.11} parent=35 // pred_region
        %s457 = smul.u32 4, %s27
        %p458 = scmp.lt.s32.totalorder %s25, 1
        %s459 = scalar_select %p458, %s25, 1
        %p460 = scmp.lt.s32.totalorder %s457, 3
        %s461 = scalar_select %p460, %s457, 3
        %s462 = smul.addr %s459, 4
        %s463 = sadd.s32 %s461, %s462
        %s464 = smul.addr %s463, 8
        %s465 = scalar_lea.vmem %s4, %s464
        %s466 = smul.u32 4, %s27
      $region56: #{double_stream_block.11} parent=35 // pred_fallthru
        _
      // Predicated region
      $region57: #{double_stream_block.11} parent=35 // pred_check
        %p467 = pneg %p199
      $region58: #{double_stream_block.11} parent=35 // pred_check_branch
        %469 = sbr.rel (%p467) target = $region60
      $region59: #{double_stream_block.11} parent=35 // pred_region
        %p470 = scmp.lt.s32.totalorder %s25, 1
        %s471 = scalar_select %p470, %s25, 1
        %s472 = smul.addr %s471, 4
        %s473 = smul.addr %s472, 8
        %s474 = scalar_lea.vmem %s5, %s473
      $region60: #{double_stream_block.11} parent=35 // pred_fallthru
        _
      // Predicated region
      $region61: #{double_stream_block.11} parent=35 // pred_check
        %p475 = pneg %p225
      $region62: #{double_stream_block.11} parent=35 // pred_check_branch
        %477 = sbr.rel (%p475) target = $region64
      $region63: #{double_stream_block.11} parent=35 // pred_region
        %p478 = scmp.lt.s32.totalorder %s25, 1
        %s479 = scalar_select %p478, %s25, 1
        %s480 = smul.addr %s479, 4
        %s481 = smul.addr %s480, 8
        %s482 = scalar_lea.vmem %s6, %s481
      $region64: #{double_stream_block.11} parent=35 // pred_fallthru
        _
    $region36: #{double_stream_block.11} parent=5 // pred_fallthru
      _
    %p483 = scmp.le.s32.totalorder 1, %s18
    %p484 = scmp.lt.s32.totalorder %s18, 5
    %p485 = pnand %p483, %p484
    %p486 = pneg %p485
    // Predicated region
    $region65: #{double_stream_block.11} parent=5 // pred_check
      _
    $region66: #{double_stream_block.11} parent=5 // pred_check_branch
      %488 = sbr.rel (%p485) target = $region68
    $region67: #{double_stream_block.11} parent=5 // pred_region
      %s489 = ssub.s32 %s18, 1
      %s490 = smul.u32 4, %s30
      %p491 = scmp.lt.s32.totalorder %s28, 1
      %s492 = scalar_select %p491, %s28, 1
      %p493 = scmp.lt.s32.totalorder %s29, 1
      %s494 = scalar_select %p493, %s29, 1
      %p495 = scmp.lt.s32.totalorder %s490, 3
      %s496 = scalar_select %p495, %s490, 3
      %s497 = smul.addr %s494, 4
      %s498 = sadd.s32 %s496, %s497
      %s499 = smul.addr %s492, 8
      %s500 = sadd.s32 %s498, %s499
      %s501 = smul.addr %s500, 4
      %s502 = scalar_lea.vmem %s0, %s501
      %p503 = pneg %p67
      %p504 = pneg %p64
      %p505 = scmp.lt.s32.totalorder %s28, 1
      %s506 = scalar_select %p505, %s28, 1
      %p507 = scmp.lt.s32.totalorder %s29, 1
      %s508 = scalar_select %p507, %s29, 1
      %s509 = smul.addr %s508, 4
      %s510 = smul.addr %s506, 8
      %s511 = sadd.s32 %s509, %s510
      %s512 = smul.addr %s511, 4
      %s513 = scalar_lea.vmem %s1, %s512
      %p514 = pneg %p95
      %p515 = pneg %p92
      %p516 = scmp.lt.s32.totalorder %s28, 1
      %s517 = scalar_select %p516, %s28, 1
      %p518 = scmp.lt.s32.totalorder %s29, 1
      %s519 = scalar_select %p518, %s29, 1
      %s520 = smul.addr %s519, 4
      %s521 = smul.addr %s517, 8
      %s522 = sadd.s32 %s520, %s521
      %s523 = smul.addr %s522, 4
      %s524 = scalar_lea.vmem %s2, %s523
      %p525 = pneg %p123
      %p526 = pneg %p120
      %s527 = smul.u32 4, %s30
      %p528 = scmp.lt.s32.totalorder %s28, 1
      %s529 = scalar_select %p528, %s28, 1
      %p530 = scmp.lt.s32.totalorder %s527, 3
      %s531 = scalar_select %p530, %s527, 3
      %s532 = smul.addr %s529, 4
      %s533 = sadd.s32 %s531, %s532
      %s534 = smul.addr %s533, 8
      %s535 = scalar_lea.vmem %s3, %s534
      %p536 = pneg %p151
      %p537 = pneg %p148
      %s538 = smul.u32 4, %s30
      %p539 = scmp.lt.s32.totalorder %s28, 1
      %s540 = scalar_select %p539, %s28, 1
      %p541 = scmp.lt.s32.totalorder %s538, 3
      %s542 = scalar_select %p541, %s538, 3
      %s543 = smul.addr %s540, 4
      %s544 = sadd.s32 %s542, %s543
      %s545 = smul.addr %s544, 8
      %s546 = scalar_lea.vmem %s4, %s545
      %p547 = pneg %p179
      %p548 = pneg %p176
      %p549 = scmp.lt.s32.totalorder %s28, 1
      %s550 = scalar_select %p549, %s28, 1
      %s551 = smul.addr %s550, 4
      %s552 = smul.addr %s551, 8
      %s553 = scalar_lea.vmem %s5, %s552
      %p554 = pneg %p205
      %p555 = pneg %p202
      %p556 = scmp.lt.s32.totalorder %s28, 1
      %s557 = scalar_select %p556, %s28, 1
      %s558 = smul.addr %s557, 4
      %s559 = smul.addr %s558, 8
      %s560 = scalar_lea.vmem %s6, %s559
      %p561 = pneg %p231
      %p562 = pneg %p228
      %p563 = pneg %p252
      %p564 = pneg %p249
      %p565 = pneg %p273
      %p566 = pneg %p270
      %p567 = pneg %p294
      %p568 = pneg %p291
      %p569 = pneg %p315
      %p570 = pneg %p312
      %p571 = pneg %p336
      %p572 = pneg %p333
      %p573 = pneg %p366
      %p574 = pneg %p363
      %s575 = smul.u32 4, %s30
      %p576 = scmp.lt.s32.totalorder %s28, 1
      %s577 = scalar_select %p576, %s28, 1
      %p578 = scmp.lt.s32.totalorder %s29, 1
      %s579 = scalar_select %p578, %s29, 1
      %p580 = scmp.lt.s32.totalorder %s575, 3
      %s581 = scalar_select %p580, %s575, 3
      %s582 = smul.addr %s579, 4
      %s583 = sadd.s32 %s581, %s582
      %s584 = smul.addr %s577, 8
      %s585 = sadd.s32 %s583, %s584
      %s586 = smul.addr %s585, 4
      %s587 = scalar_lea.vmem %s12, %s586
      %s588 = smul.u32 4, %s30
      %p589 = scmp.lt.s32.totalorder %s28, 1
      %s590 = scalar_select %p589, %s28, 1
      %p591 = scmp.lt.s32.totalorder %s29, 1
      %s592 = scalar_select %p591, %s29, 1
      %p593 = scmp.lt.s32.totalorder %s588, 3
      %s594 = scalar_select %p593, %s588, 3
      %s595 = smul.addr %s592, 4
      %s596 = sadd.s32 %s594, %s595
      %s597 = smul.addr %s590, 8
      %s598 = sadd.s32 %s596, %s597
      %s599 = smul.addr %s598, 4
      %s600 = scalar_lea.vmem %s0, %s599
      %s601 = smul.u32 4, %s30
      %p602 = scmp.lt.s32.totalorder %s28, 1
      %s603 = scalar_select %p602, %s28, 1
      %p604 = scmp.lt.s32.totalorder %s29, 1
      %s605 = scalar_select %p604, %s29, 1
      %s606 = smul.addr %s605, 4
      %s607 = smul.addr %s603, 8
      %s608 = sadd.s32 %s606, %s607
      %s609 = smul.addr %s608, 4
      %s610 = scalar_lea.vmem %s1, %s609
      %p611 = scmp.lt.s32.totalorder %s28, 1
      %s612 = scalar_select %p611, %s28, 1
      %p613 = scmp.lt.s32.totalorder %s29, 1
      %s614 = scalar_select %p613, %s29, 1
      %s615 = smul.addr %s614, 4
      %s616 = smul.addr %s612, 8
      %s617 = sadd.s32 %s615, %s616
      %s618 = smul.addr %s617, 4
      %s619 = scalar_lea.vmem %s2, %s618
      %s620 = smul.u32 4, %s30
      %p621 = scmp.lt.s32.totalorder %s28, 1
      %s622 = scalar_select %p621, %s28, 1
      %p623 = scmp.lt.s32.totalorder %s620, 3
      %s624 = scalar_select %p623, %s620, 3
      %s625 = smul.addr %s622, 4
      %s626 = sadd.s32 %s624, %s625
      %s627 = smul.addr %s626, 8
      %s628 = scalar_lea.vmem %s3, %s627
      %s629 = smul.u32 4, %s30
      %s630 = smul.u32 4, %s30
      %p631 = scmp.lt.s32.totalorder %s28, 1
      %s632 = scalar_select %p631, %s28, 1
      %p633 = scmp.lt.s32.totalorder %s630, 3
      %s634 = scalar_select %p633, %s630, 3
      %s635 = smul.addr %s632, 4
      %s636 = sadd.s32 %s634, %s635
      %s637 = smul.addr %s636, 8
      %s638 = scalar_lea.vmem %s4, %s637
      %s639 = smul.u32 4, %s30
      %p640 = scmp.lt.s32.totalorder %s28, 1
      %s641 = scalar_select %p640, %s28, 1
      %s642 = smul.addr %s641, 4
      %s643 = smul.addr %s642, 8
      %s644 = scalar_lea.vmem %s5, %s643
      %p645 = scmp.lt.s32.totalorder %s28, 1
      %s646 = scalar_select %p645, %s28, 1
      %s647 = smul.addr %s646, 4
      %s648 = smul.addr %s647, 8
      %s649 = scalar_lea.vmem %s6, %s648
      %s650 = smul.u32 4, %s30
      %p651 = scmp.lt.s32.totalorder %s28, 1
      %s652 = scalar_select %p651, %s28, 1
      %p653 = scmp.lt.s32.totalorder %s29, 1
      %s654 = scalar_select %p653, %s29, 1
      %p655 = scmp.lt.s32.totalorder %s650, 3
      %s656 = scalar_select %p655, %s650, 3
      %s657 = smul.addr %s654, 4
      %s658 = sadd.s32 %s656, %s657
      %s659 = smul.addr %s652, 8
      %s660 = sadd.s32 %s658, %s659
      %s661 = smul.addr %s660, 4
      %s662 = scalar_lea.vmem %s12, %s661
      %s663 = smul.u32 4, %s30
      %v665 = vld [vmem:[%s11] sm:$0xff]
      %v666 = vld [vmem:[%s11 + $0x8] sm:$0xff]
      %p667 = scmp.eq.s32.totalorder %s30, 0
      // Predicated region
      $region69: #{double_stream_block.11} parent=67 // pred_check
        %p668 = pneg %p667
      $region70: #{double_stream_block.11} parent=67 // pred_check_branch
        %670 = sbr.rel (%p668) target = $region72
      $region71: #{double_stream_block.11} parent=67 // pred_region
        %v671 = vld [vmem:[%s610] sm:$0xf]
        %v672 = vld [vmem:[%s610 + $0x4] sm:$0xf]
        %v673 = vld [vmem:[%s610 + $0x8] sm:$0xf]
        %v674 = vld [vmem:[%s610 + $0xc] sm:$0xf]
        %v675 = vunpack.c.l.bf16 %v671
        %v676 = vunpack.c.l.bf16 %v672
        %v677 = vunpack.c.l.bf16 %v673
        %v678 = vunpack.c.l.bf16 %v674
        %v679 = vlaneseq
        %v680 = vshrl.u32 %v679, 7
        %v681 = vadd.s32 %v680, 8
        %v682 = vadd.s32 %v680, 16
        %v683 = vadd.s32 %v680, 24
        %vm684 = vcmp.lt.s32.totalorder %v680, 8
        %vm685 = vcmp.lt.s32.totalorder %v681, 8
        %vm686 = vcmp.lt.s32.totalorder %v682, 8
        %vm687 = vcmp.lt.s32.totalorder %v683, 8
        %v688 = vld [vmem:[%s9] sm:$0x1]
        %v689 = vld [vmem:[%s10] sm:$0x1]
        %v691 = vlaneseq
        %v692 = vshrl.u32 %v691, 7
        %v693 = vsub.s32 0, %v692
        %v694 = vrot.slane %v688, %v693
        %v697 = vlaneseq
        %v698 = vshrl.u32 %v697, 7
        %v699 = vsub.s32 0, %v698
        %v700 = vrot.slane %v689, %v699
        %v702 = vsel %vm684, %v694, %v700
        %v703 = vsel %vm685, %v694, %v700
        %v704 = vsel %vm686, %v694, %v700
        %v705 = vsel %vm687, %v694, %v700
        %v706 = vld [vmem:[%s644] sm:$0xff]
        %v707 = vld [vmem:[%s644 + $0x8] sm:$0xff]
        %v708 = vld [vmem:[%s644 + $0x10] sm:$0xff]
        %v709 = vld [vmem:[%s644 + $0x18] sm:$0xff]
        %v710 = vld [vmem:[%s649] sm:$0xff]
        %v711 = vld [vmem:[%s649 + $0x8] sm:$0xff]
        %v712 = vld [vmem:[%s649 + $0x10] sm:$0xff]
        %v713 = vld [vmem:[%s649 + $0x18] sm:$0xff]
        %v714 = vmul.f32 %v675, %v675
        %v715 = vmul.f32 %v676, %v676
        %v716 = vmul.f32 %v677, %v677
        %v717 = vmul.f32 %v678, %v678
        %vm718 = vcmask 130048
        %v719 = vsel %vm718, %v714, 0.0
        %720 = vadd.xlane.f32.xlu0 %v719
        %v721 = vpop.xlane.xlu0 %720
        %v722 = vsel %vm718, %v715, 0.0
        %723 = vadd.xlane.f32.xlu0 %v722
        %v724 = vpop.xlane.xlu0 %723
        %v725 = vsel %vm718, %v716, 0.0
        %726 = vadd.xlane.f32.xlu0 %v725
        %v727 = vpop.xlane.xlu0 %726
        %v728 = vsel %vm718, %v717, 0.0
        %729 = vadd.xlane.f32.xlu0 %v728
        %v730 = vpop.xlane.xlu0 %729
        %v731 = vrcp.pop 16.0
        %v732 = vmul.f32 %v721, %v731
        %v733 = vmul.f32 %v724, %v731
        %v734 = vmul.f32 %v727, %v731
        %v735 = vmul.f32 %v730, %v731
        %v736 = vadd.f32 %v732, 1e-06
        %v737 = vadd.f32 %v733, 1e-06
        %v738 = vadd.f32 %v734, 1e-06
        %v739 = vadd.f32 %v735, 1e-06
        %v740 = vrsqrt.pop %v736
        %v741 = vrsqrt.pop %v737
        %v742 = vrsqrt.pop %v738
        %v743 = vrsqrt.pop %v739
        %v744 = vmul.f32 %v675, %v740
        %v745 = vmul.f32 %v676, %v741
        %v746 = vmul.f32 %v677, %v742
        %v747 = vmul.f32 %v678, %v743
        %v748 = vmul.f32 %v744, %v702
        %v749 = vmul.f32 %v745, %v703
        %v750 = vmul.f32 %v746, %v704
        %v751 = vmul.f32 %v747, %v705
        %v753 = vsel %vm718, %v748, 0
        %v756 = vsel %vm718, %v749, 0
        %v759 = vsel %vm718, %v750, 0
        %v762 = vsel %vm718, %v751, 0
        %764 = vmatprep.subr.mxu0 0.0
        %765 = vmatpush1.msra.mxu0 0.0
        %766 = vmatprep.subr.mxu0 0.0
        %767 = vmatpush1.msra.mxu0 0.0
        %768 = vmatprep.subr.mxu0 0.0
        %769 = vmatpush1.msra.mxu0 0.0
        %770 = vmatprep.subr.mxu0 0.0
        %771 = vmatpush1.msra.mxu0 0.0
        %772 = vmatprep.subr.mxu0 0.0
        %773 = vmatpush1.msra.mxu0 0.0
        %774 = vmatprep.subr.mxu0 0.0
        %775 = vmatpush1.msra.mxu0 0.0
        %776 = vmatprep.subr.mxu0 0.0
        %777 = vmatpush1.msra.mxu0 0.0
        %778 = vmatprep.subr.mxu0 0.0
        %779 = vmatpush1.msra.mxu0 0.0
        %780 = vmatprep.subr.mxu0 0.0
        %781 = vmatpush1.msra.mxu0 0.0
        %782 = vmatprep.subr.mxu0 0.0
        %783 = vmatpush1.msra.mxu0 0.0
        %784 = vmatprep.subr.mxu0 0.0
        %785 = vmatpush1.msra.mxu0 0.0
        %786 = vmatprep.subr.mxu0 0.0
        %787 = vmatpush1.msra.mxu0 0.0
        %788 = vmatprep.subr.mxu0 0.0
        %789 = vmatpush1.msra.mxu0 0.0
        %790 = vmatprep.subr.mxu0 0.0
        %791 = vmatpush1.msra.mxu0 0.0
        %792 = vmatprep.subr.mxu0 0.0
        %793 = vmatpush1.msra.mxu0 %v666
        %794 = vmatprep.subr.mxu0 0.0
        %795 = vmatpush1.msra.mxu0 %v665
        %796 = vmatprep.subr.mxu0 0.0
        %797 = vmatpush2.msra.mxu0 0.0
        %798 = vmatprep.subr.mxu0 0.0
        %799 = vmatpush2.msra.mxu0 0.0
        %800 = vmatprep.subr.mxu0 0.0
        %801 = vmatpush2.msra.mxu0 0.0
        %802 = vmatprep.subr.mxu0 0.0
        %803 = vmatpush2.msra.mxu0 0.0
        %804 = vmatprep.subr.mxu0 0.0
        %805 = vmatpush2.msra.mxu0 0.0
        %806 = vmatprep.subr.mxu0 0.0
        %807 = vmatpush2.msra.mxu0 0.0
        %808 = vmatprep.subr.mxu0 0.0
        %809 = vmatpush2.msra.mxu0 0.0
        %810 = vmatprep.subr.mxu0 0.0
        %811 = vmatpush2.msra.mxu0 0.0
        %812 = vmatprep.subr.mxu0 0.0
        %813 = vmatpush2.msra.mxu0 0.0
        %814 = vmatprep.subr.mxu0 0.0
        %815 = vmatpush2.msra.mxu0 0.0
        %816 = vmatprep.subr.mxu0 0.0
        %817 = vmatpush2.msra.mxu0 0.0
        %818 = vmatprep.subr.mxu0 0.0
        %819 = vmatpush2.msra.mxu0 0.0
        %820 = vmatprep.subr.mxu0 0.0
        %821 = vmatpush2.msra.mxu0 0.0
        %822 = vmatprep.subr.mxu0 0.0
        %823 = vmatpush2.msra.mxu0 0.0
        %824 = vmatprep.subr.mxu0 0.0
        %825 = vmatpush2.msra.mxu0 0.0
        %826 = vmatprep.subr.mxu0 0.0
        %827 = vmatpush2.msra.mxu0 0.0
        %828 = vmatprep.mubr.f32.mxu0 0.0
        %829 = vmatmul.mubr.f32.gmra.mxu0 %v753
        %v830 = vpop.f32.mrf.mxu0
        %v831 = vadd.f32 0.0, %v830
        %v832 = vpop.f32.mrf.mxu0
        %833 = vmatprep.mubr.f32.mxu0 0.0
        %834 = vmatmul.mubr.f32.gmra.mxu0 %v756
        %v835 = vpop.f32.mrf.mxu0
        %v836 = vadd.f32 0.0, %v835
        %v837 = vpop.f32.mrf.mxu0
        %838 = vmatprep.mubr.f32.mxu0 0.0
        %839 = vmatmul.mubr.f32.gmra.mxu0 %v759
        %v840 = vpop.f32.mrf.mxu0
        %v841 = vadd.f32 0.0, %v840
        %v842 = vpop.f32.mrf.mxu0
        %843 = vmatprep.mubr.f32.mxu0 0.0
        %844 = vmatmul.mubr.f32.gmra.mxu0 %v762
        %v845 = vpop.f32.mrf.mxu0
        %v846 = vadd.f32 0.0, %v845
        %v847 = vpop.f32.mrf.mxu0
        %848 = vdwg.mxu0
        %v849 = vmul.f32 %v706, %v748
        %v850 = vmul.f32 %v707, %v749
        %v851 = vmul.f32 %v708, %v750
        %v852 = vmul.f32 %v709, %v751
        %v853 = vmul.f32 %v710, %v831
        %v854 = vmul.f32 %v711, %v836
        %v855 = vmul.f32 %v712, %v841
        %v856 = vmul.f32 %v713, %v846
        %v857 = vadd.f32 %v849, %v853
        %v858 = vadd.f32 %v850, %v854
        %v859 = vadd.f32 %v851, %v855
        %v860 = vadd.f32 %v852, %v856
        %v861 = vpack.c.bf16 %v858, %v857
        %v862 = vpack.c.bf16 %v860, %v859
        %v865 = vunpack.c.l.b16 %v861
        %v866 = vunpack.c.h.b16 %v861
        %v867 = vunpack.c.l.b16 %v862
        %v868 = vunpack.c.h.b16 %v862
        %v869 = vpack.c.b16 %v865, %v865
        %v870 = vpack.c.b16 %v866, %v866
        %v871 = vpack.c.b16 %v867, %v867
        %v872 = vpack.c.b16 %v868, %v868
        %vm877 = vcmask 125952
        %878 = vst.msk [vmem:[#allocation2] sm:$0xf] %vm877, %v869
        %879 = vst.msk [vmem:[#allocation2 + $0x4] sm:$0xf] %vm877, %v870
        %880 = vst.msk [vmem:[#allocation2 + $0x8] sm:$0xf] %vm877, %v871
        %881 = vst.msk [vmem:[#allocation2 + $0xc] sm:$0xf] %vm877, %v872
      $region72: #{double_stream_block.11} parent=67 // pred_fallthru
        _
      %v882 = vld [vmem:[%s600] sm:$0xf]
      %v883 = vld [vmem:[%s600 + $0x4] sm:$0xf]
      %v884 = vld [vmem:[%s600 + $0x8] sm:$0xf]
      %v885 = vld [vmem:[%s600 + $0xc] sm:$0xf]
      %v886 = vunpack.c.l.bf16 %v882
      %v887 = vunpack.c.l.bf16 %v883
      %v888 = vunpack.c.l.bf16 %v884
      %v889 = vunpack.c.l.bf16 %v885
      %s890 = smul.u32 %s30, 32
      %v891 = vlaneseq
      %v892 = vshrl.u32 %v891, 7
      %v893 = vadd.s32 %v892, 8
      %v894 = vadd.s32 %v892, 16
      %v895 = vadd.s32 %v892, 24
      %v896 = vstv %s890
      %v897 = vadd.s32 %v896, %v892
      %v898 = vadd.s32 %v896, %v893
      %v899 = vadd.s32 %v896, %v894
      %v900 = vadd.s32 %v896, %v895
      %vm901 = vcmp.lt.s32.totalorder %v897, 8
      %vm902 = vcmp.lt.s32.totalorder %v898, 8
      %vm903 = vcmp.lt.s32.totalorder %v899, 8
      %vm904 = vcmp.lt.s32.totalorder %v900, 8
      %v905 = vld [vmem:[%s7] sm:$0x1]
      %v906 = vld [vmem:[%s8] sm:$0x1]
      %v908 = vlaneseq
      %v909 = vshrl.u32 %v908, 7
      %v910 = vsub.s32 0, %v909
      %v911 = vrot.slane %v905, %v910
      %v914 = vlaneseq
      %v915 = vshrl.u32 %v914, 7
      %v916 = vsub.s32 0, %v915
      %v917 = vrot.slane %v906, %v916
      %v919 = vsel %vm901, %v911, %v917
      %v920 = vsel %vm902, %v911, %v917
      %v921 = vsel %vm903, %v911, %v917
      %v922 = vsel %vm904, %v911, %v917
      %v923 = vld [vmem:[%s628] sm:$0xff]
      %v924 = vld [vmem:[%s628 + $0x8] sm:$0xff]
      %v925 = vld [vmem:[%s628 + $0x10] sm:$0xff]
      %v926 = vld [vmem:[%s628 + $0x18] sm:$0xff]
      %v927 = vld [vmem:[%s638] sm:$0xff]
      %v928 = vld [vmem:[%s638 + $0x8] sm:$0xff]
      %v929 = vld [vmem:[%s638 + $0x10] sm:$0xff]
      %v930 = vld [vmem:[%s638 + $0x18] sm:$0xff]
      %v931 = vmul.f32 %v886, %v886
      %v932 = vmul.f32 %v887, %v887
      %v933 = vmul.f32 %v888, %v888
      %v934 = vmul.f32 %v889, %v889
      %vm935 = vcmask 130048
      %v936 = vsel %vm935, %v931, 0.0
      %937 = vadd.xlane.f32.xlu0 %v936
      %v938 = vpop.xlane.xlu0 %937
      %v939 = vsel %vm935, %v932, 0.0
      %940 = vadd.xlane.f32.xlu0 %v939
      %v941 = vpop.xlane.xlu0 %940
      %v942 = vsel %vm935, %v933, 0.0
      %943 = vadd.xlane.f32.xlu0 %v942
      %v944 = vpop.xlane.xlu0 %943
      %v945 = vsel %vm935, %v934, 0.0
      %946 = vadd.xlane.f32.xlu0 %v945
      %v947 = vpop.xlane.xlu0 %946
      %v948 = vrcp.pop 16.0
      %v949 = vmul.f32 %v938, %v948
      %v950 = vmul.f32 %v941, %v948
      %v951 = vmul.f32 %v944, %v948
      %v952 = vmul.f32 %v947, %v948
      %v953 = vadd.f32 %v949, 1e-06
      %v954 = vadd.f32 %v950, 1e-06
      %v955 = vadd.f32 %v951, 1e-06
      %v956 = vadd.f32 %v952, 1e-06
      %v957 = vrsqrt.pop %v953
      %v958 = vrsqrt.pop %v954
      %v959 = vrsqrt.pop %v955
      %v960 = vrsqrt.pop %v956
      %v961 = vmul.f32 %v886, %v957
      %v962 = vmul.f32 %v887, %v958
      %v963 = vmul.f32 %v888, %v959
      %v964 = vmul.f32 %v889, %v960
      %v965 = vmul.f32 %v961, %v919
      %v966 = vmul.f32 %v962, %v920
      %v967 = vmul.f32 %v963, %v921
      %v968 = vmul.f32 %v964, %v922
      %v970 = vsel %vm935, %v965, 0
      %v973 = vsel %vm935, %v966, 0
      %v976 = vsel %vm935, %v967, 0
      %v979 = vsel %vm935, %v968, 0
      %981 = vmatprep.subr.mxu0 0.0
      %982 = vmatpush1.msra.mxu0 0.0
      %983 = vmatprep.subr.mxu0 0.0
      %984 = vmatpush1.msra.mxu0 0.0
      %985 = vmatprep.subr.mxu0 0.0
      %986 = vmatpush1.msra.mxu0 0.0
      %987 = vmatprep.subr.mxu0 0.0
      %988 = vmatpush1.msra.mxu0 0.0
      %989 = vmatprep.subr.mxu0 0.0
      %990 = vmatpush1.msra.mxu0 0.0
      %991 = vmatprep.subr.mxu0 0.0
      %992 = vmatpush1.msra.mxu0 0.0
      %993 = vmatprep.subr.mxu0 0.0
      %994 = vmatpush1.msra.mxu0 0.0
      %995 = vmatprep.subr.mxu0 0.0
      %996 = vmatpush1.msra.mxu0 0.0
      %997 = vmatprep.subr.mxu0 0.0
      %998 = vmatpush1.msra.mxu0 0.0
      %999 = vmatprep.subr.mxu0 0.0
      %1000 = vmatpush1.msra.mxu0 0.0
      %1001 = vmatprep.subr.mxu0 0.0
      %1002 = vmatpush1.msra.mxu0 0.0
      %1003 = vmatprep.subr.mxu0 0.0
      %1004 = vmatpush1.msra.mxu0 0.0
      %1005 = vmatprep.subr.mxu0 0.0
      %1006 = vmatpush1.msra.mxu0 0.0
      %1007 = vmatprep.subr.mxu0 0.0
      %1008 = vmatpush1.msra.mxu0 0.0
      %1009 = vmatprep.subr.mxu0 0.0
      %1010 = vmatpush1.msra.mxu0 %v666
      %1011 = vmatprep.subr.mxu0 0.0
      %1012 = vmatpush1.msra.mxu0 %v665
      %1013 = vmatprep.subr.mxu0 0.0
      %1014 = vmatpush2.msra.mxu0 0.0
      %1015 = vmatprep.subr.mxu0 0.0
      %1016 = vmatpush2.msra.mxu0 0.0
      %1017 = vmatprep.subr.mxu0 0.0
      %1018 = vmatpush2.msra.mxu0 0.0
      %1019 = vmatprep.subr.mxu0 0.0
      %1020 = vmatpush2.msra.mxu0 0.0
      %1021 = vmatprep.subr.mxu0 0.0
      %1022 = vmatpush2.msra.mxu0 0.0
      %1023 = vmatprep.subr.mxu0 0.0
      %1024 = vmatpush2.msra.mxu0 0.0
      %1025 = vmatprep.subr.mxu0 0.0
      %1026 = vmatpush2.msra.mxu0 0.0
      %1027 = vmatprep.subr.mxu0 0.0
      %1028 = vmatpush2.msra.mxu0 0.0
      %1029 = vmatprep.subr.mxu0 0.0
      %1030 = vmatpush2.msra.mxu0 0.0
      %1031 = vmatprep.subr.mxu0 0.0
      %1032 = vmatpush2.msra.mxu0 0.0
      %1033 = vmatprep.subr.mxu0 0.0
      %1034 = vmatpush2.msra.mxu0 0.0
      %1035 = vmatprep.subr.mxu0 0.0
      %1036 = vmatpush2.msra.mxu0 0.0
      %1037 = vmatprep.subr.mxu0 0.0
      %1038 = vmatpush2.msra.mxu0 0.0
      %1039 = vmatprep.subr.mxu0 0.0
      %1040 = vmatpush2.msra.mxu0 0.0
      %1041 = vmatprep.subr.mxu0 0.0
      %1042 = vmatpush2.msra.mxu0 0.0
      %1043 = vmatprep.subr.mxu0 0.0
      %1044 = vmatpush2.msra.mxu0 0.0
      %1045 = vmatprep.mubr.f32.mxu0 0.0
      %1046 = vmatmul.mubr.f32.gmra.mxu0 %v970
      %v1047 = vpop.f32.mrf.mxu0
      %v1048 = vadd.f32 0.0, %v1047
      %v1049 = vpop.f32.mrf.mxu0
      %1050 = vmatprep.mubr.f32.mxu0 0.0
      %1051 = vmatmul.mubr.f32.gmra.mxu0 %v973
      %v1052 = vpop.f32.mrf.mxu0
      %v1053 = vadd.f32 0.0, %v1052
      %v1054 = vpop.f32.mrf.mxu0
      %1055 = vmatprep.mubr.f32.mxu0 0.0
      %1056 = vmatmul.mubr.f32.gmra.mxu0 %v976
      %v1057 = vpop.f32.mrf.mxu0
      %v1058 = vadd.f32 0.0, %v1057
      %v1059 = vpop.f32.mrf.mxu0
      %1060 = vmatprep.mubr.f32.mxu0 0.0
      %1061 = vmatmul.mubr.f32.gmra.mxu0 %v979
      %v1062 = vpop.f32.mrf.mxu0
      %v1063 = vadd.f32 0.0, %v1062
      %v1064 = vpop.f32.mrf.mxu0
      %1065 = vdwg.mxu0
      %v1066 = vmul.f32 %v923, %v965
      %v1067 = vmul.f32 %v924, %v966
      %v1068 = vmul.f32 %v925, %v967
      %v1069 = vmul.f32 %v926, %v968
      %v1070 = vmul.f32 %v927, %v1048
      %v1071 = vmul.f32 %v928, %v1053
      %v1072 = vmul.f32 %v929, %v1058
      %v1073 = vmul.f32 %v930, %v1063
      %v1074 = vadd.f32 %v1066, %v1070
      %v1075 = vadd.f32 %v1067, %v1071
      %v1076 = vadd.f32 %v1068, %v1072
      %v1077 = vadd.f32 %v1069, %v1073
      %v1078 = vmul.f32 %v1074, 0.25
      %v1079 = vmul.f32 %v1075, 0.25
      %v1080 = vmul.f32 %v1076, 0.25
      %v1081 = vmul.f32 %v1077, 0.25
      %v1082 = vpack.c.bf16 %v1079, %v1078
      %v1083 = vpack.c.bf16 %v1081, %v1080
      %v1084 = vld [vmem:[#allocation2] sm:$0xf]
      %v1085 = vld [vmem:[#allocation2 + $0x4] sm:$0xf]
      %v1086 = vld [vmem:[#allocation2 + $0x8] sm:$0xf]
      %v1087 = vld [vmem:[#allocation2 + $0xc] sm:$0xf]
      %v1088 = vld [vmem:[%s619] sm:$0xf]
      %v1089 = vld [vmem:[%s619 + $0x4] sm:$0xf]
      %v1090 = vld [vmem:[%s619 + $0x8] sm:$0xf]
      %v1091 = vld [vmem:[%s619 + $0xc] sm:$0xf]
      %v1096 = vunpack.c.l.b16 %v1084
      %v1097 = vunpack.c.l.b16 %v1085
      %v1098 = vunpack.c.l.b16 %v1086
      %v1099 = vunpack.c.l.b16 %v1087
      %v1100 = vpack.c.b16 %v1097, %v1096
      %v1101 = vpack.c.b16 %v1099, %v1098
      %v1103 = vsel %vm935, %v1082, 0
      %v1106 = vsel %vm935, %v1083, 0
      %v1109 = vsel %vm935, %v1100, 0
      %v1112 = vsel %vm935, %v1101, 0
      %1114 = vmatprep.subr.bf16.mxu0 0
      %1115 = vmatpush1.bf16.xpose.msra.mxu0 0
      %1116 = vmatprep.subr.bf16.mxu0 0
      %1117 = vmatpush1.bf16.xpose.msra.mxu0 0
      %1118 = vmatprep.subr.bf16.mxu0 0
      %1119 = vmatpush1.bf16.xpose.msra.mxu0 0
      %1120 = vmatprep.subr.bf16.mxu0 0
      %1121 = vmatpush1.bf16.xpose.msra.mxu0 0
      %1122 = vmatprep.subr.bf16.mxu0 0
      %1123 = vmatpush1.bf16.xpose.msra.mxu0 0
      %1124 = vmatprep.subr.bf16.mxu0 0
      %1125 = vmatpush1.bf16.xpose.msra.mxu0 0
      %1126 = vmatprep.subr.bf16.mxu0 0
      %1127 = vmatpush1.bf16.xpose.msra.mxu0 %v1112
      %1128 = vmatprep.subr.bf16.mxu0 0
      %1129 = vmatpush1.bf16.xpose.msra.mxu0 %v1109
      %1130 = vmatprep.subr.bf16.mxu0 0
      %1131 = vmatpush2.bf16.xpose.msra.mxu0 0
      %1132 = vmatprep.subr.bf16.mxu0 0
      %1133 = vmatpush2.bf16.xpose.msra.mxu0 0
      %1134 = vmatprep.subr.bf16.mxu0 0
      %1135 = vmatpush2.bf16.xpose.msra.mxu0 0
      %1136 = vmatprep.subr.bf16.mxu0 0
      %1137 = vmatpush2.bf16.xpose.msra.mxu0 0
      %1138 = vmatprep.subr.bf16.mxu0 0
      %1139 = vmatpush2.bf16.xpose.msra.mxu0 0
      %1140 = vmatprep.subr.bf16.mxu0 0
      %1141 = vmatpush2.bf16.xpose.msra.mxu0 0
      %1142 = vmatprep.subr.bf16.mxu0 0
      %1143 = vmatpush2.bf16.xpose.msra.mxu0 0
      %1144 = vmatprep.subr.bf16.mxu0 0
      %1145 = vmatpush2.bf16.xpose.msra.mxu0 0
      %1146 = vmatprep.mubr.bf16.mxu0 0
      %1147 = vmatmul.mubr.bf16.gmra.mxu0 %v1103
      %v1148 = vpop.f32.mrf.mxu0
      %v1149 = vadd.f32 0.0, %v1148
      %v1150 = vpop.f32.mrf.mxu0
      %v1151 = vpop.f32.mrf.mxu0
      %v1152 = vadd.f32 0.0, %v1151
      %v1153 = vpop.f32.mrf.mxu0
      %1154 = vmatprep.mubr.bf16.mxu0 0
      %1155 = vmatmul.mubr.bf16.gmra.mxu0 %v1106
      %v1156 = vpop.f32.mrf.mxu0
      %v1157 = vadd.f32 0.0, %v1156
      %v1158 = vpop.f32.mrf.mxu0
      %v1159 = vpop.f32.mrf.mxu0
      %v1160 = vadd.f32 0.0, %v1159
      %v1161 = vpop.f32.mrf.mxu0
      %1162 = vdwg.mxu0
      %v1163 = vlaneseq
      %v1164 = vand.u32 %v1163, 127
      %v1165 = vstv 0
      %v1166 = vadd.s32 %v1165, %v1164
      %vm1167 = vcmp.lt.s32.totalorder %v1166, 24
      %v1168 = vsel %vm1167, %v1149, -1e+30
      %v1169 = vsel %vm1167, %v1152, -1e+30
      %v1170 = vsel %vm1167, %v1157, -1e+30
      %v1171 = vsel %vm1167, %v1160, -1e+30
      %vm1172 = vcmask 261120
      %v1173 = vsel %vm1172, %v1168, -inf
      %1174 = vmax.xlane.f32.xlu0 %v1173
      %v1175 = vpop.xlane.xlu0 %1174
      %v1176 = vsel %vm1172, %v1169, -inf
      %1177 = vmax.xlane.f32.xlu0 %v1176
      %v1178 = vpop.xlane.xlu0 %1177
      %v1179 = vsel %vm1172, %v1170, -inf
      %1180 = vmax.xlane.f32.xlu0 %v1179
      %v1181 = vpop.xlane.xlu0 %1180
      %v1182 = vsel %vm1172, %v1171, -inf
      %1183 = vmax.xlane.f32.xlu0 %v1182
      %v1184 = vpop.xlane.xlu0 %1183
      %v1185 = vmax.f32 %v1175, -1e+30
      %v1186 = vmax.f32 %v1178, -1e+30
      %v1187 = vmax.f32 %v1181, -1e+30
      %v1188 = vmax.f32 %v1184, -1e+30
      %v1189 = vsub.f32 -1e+30, %v1185
      %v1190 = vsub.f32 -1e+30, %v1186
      %v1191 = vsub.f32 -1e+30, %v1187
      %v1192 = vsub.f32 -1e+30, %v1188
      %v1193 = vmul.f32 %v1189, 1.442695
      %v1194 = vpow.pop %v1193
      %v1195 = vmul.f32 %v1190, 1.442695
      %v1196 = vpow.pop %v1195
      %v1197 = vmul.f32 %v1191, 1.442695
      %v1198 = vpow.pop %v1197
      %v1199 = vmul.f32 %v1192, 1.442695
      %v1200 = vpow.pop %v1199
      %v1201 = vsub.f32 %v1168, %v1185
      %v1202 = vsub.f32 %v1169, %v1186
      %v1203 = vsub.f32 %v1170, %v1187
      %v1204 = vsub.f32 %v1171, %v1188
      %v1205 = vmul.f32 %v1201, 1.442695
      %v1206 = vpow.pop %v1205
      %v1207 = vmul.f32 %v1202, 1.442695
      %v1208 = vpow.pop %v1207
      %v1209 = vmul.f32 %v1203, 1.442695
      %v1210 = vpow.pop %v1209
      %v1211 = vmul.f32 %v1204, 1.442695
      %v1212 = vpow.pop %v1211
      %v1213 = vmul.f32 %v1194, 0.0
      %v1214 = vmul.f32 %v1196, 0.0
      %v1215 = vmul.f32 %v1198, 0.0
      %v1216 = vmul.f32 %v1200, 0.0
      %v1217 = vsel %vm1172, %v1206, 0.0
      %1218 = vadd.xlane.f32.xlu0 %v1217
      %v1219 = vpop.xlane.xlu0 %1218
      %v1220 = vsel %vm1172, %v1208, 0.0
      %1221 = vadd.xlane.f32.xlu0 %v1220
      %v1222 = vpop.xlane.xlu0 %1221
      %v1223 = vsel %vm1172, %v1210, 0.0
      %1224 = vadd.xlane.f32.xlu0 %v1223
      %v1225 = vpop.xlane.xlu0 %1224
      %v1226 = vsel %vm1172, %v1212, 0.0
      %1227 = vadd.xlane.f32.xlu0 %v1226
      %v1228 = vpop.xlane.xlu0 %1227
      %v1229 = vadd.f32 %v1213, %v1219
      %v1230 = vadd.f32 %v1214, %v1222
      %v1231 = vadd.f32 %v1215, %v1225
      %v1232 = vadd.f32 %v1216, %v1228
      %v1233 = vpack.c.bf16 %v1208, %v1206
      %v1234 = vpack.c.bf16 %v1212, %v1210
      %v1239 = vunpack.c.l.b16 %v1088
      %v1240 = vunpack.c.l.b16 %v1089
      %v1241 = vunpack.c.l.b16 %v1090
      %v1242 = vunpack.c.l.b16 %v1091
      %v1243 = vpack.c.b16 %v1240, %v1239
      %v1244 = vpack.c.b16 %v1242, %v1241
      %v1248 = vsel %vm1172, %v1233, 0
      %v1251 = vsel %vm1172, %v1234, 0
      %1253 = vmatprep.subr.bf16.mxu0 0
      %1254 = vmatpush1.bf16.msra.mxu0 0
      %1255 = vmatprep.subr.bf16.mxu0 0
      %1256 = vmatpush1.bf16.msra.mxu0 0
      %1257 = vmatprep.subr.bf16.mxu0 0
      %1258 = vmatpush1.bf16.msra.mxu0 0
      %1259 = vmatprep.subr.bf16.mxu0 0
      %1260 = vmatpush1.bf16.msra.mxu0 0
      %1261 = vmatprep.subr.bf16.mxu0 0
      %1262 = vmatpush1.bf16.msra.mxu0 0
      %1263 = vmatprep.subr.bf16.mxu0 0
      %1264 = vmatpush1.bf16.msra.mxu0 0
      %1265 = vmatprep.subr.bf16.mxu0 0
      %1266 = vmatpush1.bf16.msra.mxu0 %v1244
      %1267 = vmatprep.subr.bf16.mxu0 0
      %1268 = vmatpush1.bf16.msra.mxu0 %v1243
      %1269 = vmatprep.subr.bf16.mxu0 0
      %1270 = vmatpush2.bf16.msra.mxu0 0
      %1271 = vmatprep.subr.bf16.mxu0 0
      %1272 = vmatpush2.bf16.msra.mxu0 0
      %1273 = vmatprep.subr.bf16.mxu0 0
      %1274 = vmatpush2.bf16.msra.mxu0 0
      %1275 = vmatprep.subr.bf16.mxu0 0
      %1276 = vmatpush2.bf16.msra.mxu0 0
      %1277 = vmatprep.subr.bf16.mxu0 0
      %1278 = vmatpush2.bf16.msra.mxu0 0
      %1279 = vmatprep.subr.bf16.mxu0 0
      %1280 = vmatpush2.bf16.msra.mxu0 0
      %1281 = vmatprep.subr.bf16.mxu0 0
      %1282 = vmatpush2.bf16.msra.mxu0 0
      %1283 = vmatprep.subr.bf16.mxu0 0
      %1284 = vmatpush2.bf16.msra.mxu0 0
      %1285 = vmatprep.mubr.bf16.mxu0 0
      %1286 = vmatmul.mubr.bf16.gmra.mxu0 %v1248
      %v1287 = vpop.f32.mrf.mxu0
      %v1288 = vadd.f32 0.0, %v1287
      %v1289 = vpop.f32.mrf.mxu0
      %v1290 = vpop.f32.mrf.mxu0
      %v1291 = vadd.f32 0.0, %v1290
      %v1292 = vpop.f32.mrf.mxu0
      %1293 = vmatprep.mubr.bf16.mxu0 0
      %1294 = vmatmul.mubr.bf16.gmra.mxu0 %v1251
      %v1295 = vpop.f32.mrf.mxu0
      %v1296 = vadd.f32 0.0, %v1295
      %v1297 = vpop.f32.mrf.mxu0
      %v1298 = vpop.f32.mrf.mxu0
      %v1299 = vadd.f32 0.0, %v1298
      %v1300 = vpop.f32.mrf.mxu0
      %1301 = vdwg.mxu0
      %v1302 = vadd.f32 %v1213, %v1288
      %v1303 = vadd.f32 %v1214, %v1291
      %v1304 = vadd.f32 %v1215, %v1296
      %v1305 = vadd.f32 %v1216, %v1299
      %v1306 = vrcp.pop %v1229
      %v1307 = vrcp.pop %v1230
      %v1308 = vrcp.pop %v1231
      %v1309 = vrcp.pop %v1232
      %v1310 = vmul.f32 %v1302, %v1306
      %v1311 = vmul.f32 %v1303, %v1307
      %v1312 = vmul.f32 %v1304, %v1308
      %v1313 = vmul.f32 %v1305, %v1309
      %v1314 = vpack.c.bf16 %v1311, %v1310
      %v1315 = vpack.c.bf16 %v1313, %v1312
      %v1318 = vunpack.c.l.b16 %v1314
      %v1319 = vunpack.c.h.b16 %v1314
      %v1320 = vunpack.c.l.b16 %v1315
      %v1321 = vunpack.c.h.b16 %v1315
      %v1322 = vpack.c.b16 %v1318, %v1318
      %v1323 = vpack.c.b16 %v1319, %v1319
      %v1324 = vpack.c.b16 %v1320, %v1320
      %v1325 = vpack.c.b16 %v1321, %v1321
      %vm1330 = vcmask 125952
      %1331 = vst.msk [vmem:[%s662] sm:$0xf] %vm1330, %v1322
      %1332 = vst.msk [vmem:[%s662 + $0x4] sm:$0xf] %vm1330, %v1323
      %1333 = vst.msk [vmem:[%s662 + $0x8] sm:$0xf] %vm1330, %v1324
      %1334 = vst.msk [vmem:[%s662 + $0xc] sm:$0xf] %vm1330, %v1325
      %s1335 = smul.u32 4, %s30
      %p1336 = scmp.lt.s32.totalorder %s28, 1
      %s1337 = scalar_select %p1336, %s28, 1
      %p1338 = scmp.lt.s32.totalorder %s29, 1
      %s1339 = scalar_select %p1338, %s29, 1
      %p1340 = scmp.lt.s32.totalorder %s1335, 3
      %s1341 = scalar_select %p1340, %s1335, 3
      %s1342 = smul.addr %s1339, 4
      %s1343 = sadd.s32 %s1341, %s1342
      %s1344 = smul.addr %s1337, 8
      %s1345 = sadd.s32 %s1343, %s1344
      %s1346 = smul.addr %s1345, 4
      %s1347 = scalar_lea.vmem %s12, %s1346
      // Predicated region
      $region73: #{double_stream_block.11} parent=67 // pred_check
        %p1348 = pneg %p363
      $region74: #{double_stream_block.11} parent=67 // pred_check_branch
        %1350 = sbr.rel (%p1348) target = $region76
      $region75: #{double_stream_block.11} parent=67 // pred_region
        %s1351 = smul.u32 4, %s30
      $region76: #{double_stream_block.11} parent=67 // pred_fallthru
        _
    $region68: #{double_stream_block.11} parent=5 // pred_fallthru
      _
    %p1352 = scmp.le.s32.totalorder 2, %s18
    // Predicated region
    $region77: #{double_stream_block.11} parent=5 // pred_check
      %p1353 = pneg %p1352
    $region78: #{double_stream_block.11} parent=5 // pred_check_branch
      %1355 = sbr.rel (%p1353) target = $region80
    $region79: #{double_stream_block.11} parent=5 // pred_region
      %s1356 = ssub.s32 %s18, 2
      // Predicated region
      $region81: #{double_stream_block.11} parent=79 // pred_check
        %p1357 = pneg %p369
      $region82: #{double_stream_block.11} parent=79 // pred_check_branch
        %1359 = sbr.rel (%p1357) target = $region84
      $region83: #{double_stream_block.11} parent=79 // pred_region
        %s1360 = smul.u32 4, %s33
        %p1361 = scmp.lt.s32.totalorder %s31, 1
        %s1362 = scalar_select %p1361, %s31, 1
        %p1363 = scmp.lt.s32.totalorder %s32, 1
        %s1364 = scalar_select %p1363, %s32, 1
        %p1365 = scmp.lt.s32.totalorder %s1360, 3
        %s1366 = scalar_select %p1365, %s1360, 3
        %s1367 = smul.addr %s1364, 4
        %s1368 = sadd.s32 %s1366, %s1367
        %s1369 = smul.addr %s1362, 8
        %s1370 = sadd.s32 %s1368, %s1369
        %s1371 = smul.addr %s1370, 4
        %s1372 = scalar_lea.vmem %s12, %s1371
      $region84: #{double_stream_block.11} parent=79 // pred_fallthru
        _
    $region80: #{double_stream_block.11} parent=5 // pred_fallthru
      _
  $region6: #{double_stream_block.11} parent=0 // loop_footer
    %s22 = sadd.s32 1, %s18
  $region7: #{double_stream_block.11} parent=0 // loop_footer_branch
    %17 = sbr.rel target = $region3
  $region8: #{double_stream_block.11} parent=0 // loop_exit
    _

</llo_original>
